<compile_context>
chip_gen: v5e
topology: v5e:2x2
jax: 0.10.0
libtpu: 0.0.40
codegen_flags: <defaults>
</compile_context>

<pallas_src>
import math

import jax
import jax.numpy as jnp
from jax.experimental import pallas as pl
from jax.experimental.pallas import tpu as pltpu

# ----------------------------- configuration --------------------------------
BATCH = 2
SEQ = 8
INPUT_DIM = 4
D_MODEL = 32
NHEAD = 4
NUM_LAYERS = 2
DIM_FF = 64
NUM_CLASSES = 3
HEAD_DIM = D_MODEL // NHEAD
SCALE = 1.0 / math.sqrt(HEAD_DIM)
LN_EPS = 1e-5          # PyTorch LayerNorm / TransformerEncoderLayer default
LANE_PAD = 128         # lane-dense padded classifier output width


# --------------------------- in-kernel helpers --------------------------------
def _gelu_erf(x):
    """Exact-erf GELU; erf via Abramowitz–Stegun 7.1.26 (|err| < 1.5e-7)."""
    z = x * (1.0 / math.sqrt(2.0))
    a = jnp.abs(z)
    t = 1.0 / (1.0 + 0.3275911 * a)
    poly = t * (0.254829592 + t * (-0.284496736 + t * (1.421413741
                + t * (-1.453152027 + t * 1.061405429))))
    erf_a = 1.0 - poly * jnp.exp(-a * a)
    erf_z = jnp.where(z < 0.0, -erf_a, erf_a)
    return 0.5 * x * (1.0 + erf_z)


def _layernorm(x, g, b):
    mu = jnp.mean(x, axis=-1, keepdims=True)
    var = jnp.mean(jnp.square(x - mu), axis=-1, keepdims=True)
    return (x - mu) * jax.lax.rsqrt(var + LN_EPS) * g + b


# ------------------------------ fused kernel ----------------------------------
def _fused_forward_kernel(*refs):
    out_ref = refs[-1]
    it = iter(refs[:-1])
    nxt = lambda: next(it)[...]
    f32 = jnp.float32

    x = nxt()                                              # (B*S, INPUT_DIM)
    in_w, in_b = nxt(), nxt()
    pe = nxt()                                             # (S, D)
    pos_w, pos_b, pos_g, pos_bb = nxt(), nxt(), nxt(), nxt()
    layers = [tuple(nxt() for _ in range(12)) for _ in range(NUM_LAYERS)]
    cls_w1, cls_b1, cls_w2, cls_b2 = nxt(), nxt(), nxt(), nxt()

    # ---- input projection + positional encoding -------------------------------
    h = jnp.dot(x, in_w, preferred_element_type=f32) + in_b          # (B*S, D)
    h = h + jnp.concatenate([pe] * BATCH, axis=0)                    # x + pe
    # time_aware_proj: Linear -> LayerNorm -> GELU (dropout = identity)
    h = jnp.dot(h, pos_w, preferred_element_type=f32) + pos_b
    h = _gelu_erf(_layernorm(h, pos_g, pos_bb))

    # ---- encoder layers (post-norm, ReLU FFN) ----------------------------------
    for (qkv_w, qkv_b, out_w, out_b, ln1_g, ln1_b,
         ff_w1, ff_b1, ff_w2, ff_b2, ln2_g, ln2_b) in layers:
        qkv = jnp.dot(h, qkv_w, preferred_element_type=f32) + qkv_b  # (B*S, 3D)
        ctx_rows = []
        for b in range(BATCH):                 # static unroll (B*H = 8 tiny heads)
            r0 = b * SEQ
            head_outs = []
            for hd in range(NHEAD):
                c0 = hd * HEAD_DIM
                q = qkv[r0:r0 + SEQ, c0:c0 + HEAD_DIM]
                k = qkv[r0:r0 + SEQ, D_MODEL + c0:D_MODEL + c0 + HEAD_DIM]
                v = qkv[r0:r0 + SEQ, 2 * D_MODEL + c0:2 * D_MODEL + c0 + HEAD_DIM]
                s = jax.lax.dot_general(q, k, (((1,), (1,)), ((), ())),
                                        preferred_element_type=f32) * SCALE
                s = s - jnp.max(s, axis=-1, keepdims=True)
                p = jnp.exp(s)
                p = p * pl.reciprocal(jnp.sum(p, axis=-1, keepdims=True),
                                      approx=False)
                head_outs.append(jnp.dot(p, v, preferred_element_type=f32))
            ctx_rows.append(jnp.concatenate(head_outs, axis=-1))     # (S, D)
        ctx = jnp.concatenate(ctx_rows, axis=0)                      # (B*S, D)
        attn_out = jnp.dot(ctx, out_w, preferred_element_type=f32) + out_b
        h = _layernorm(h + attn_out, ln1_g, ln1_b)
        ff = jnp.maximum(jnp.dot(h, ff_w1, preferred_element_type=f32) + ff_b1, 0.0)
        ff = jnp.dot(ff, ff_w2, preferred_element_type=f32) + ff_b2
        h = _layernorm(h + ff, ln2_g, ln2_b)

    # ---- mean pool over sequence + classifier head ------------------------------
    pooled = jnp.concatenate(
        [jnp.mean(h[b * SEQ:(b + 1) * SEQ, :], axis=0, keepdims=True)
         for b in range(BATCH)], axis=0)                             # (B, D)
    c = _gelu_erf(jnp.dot(pooled, cls_w1, preferred_element_type=f32) + cls_b1)
    out_ref[...] = jnp.dot(c, cls_w2, preferred_element_type=f32) + cls_b2


# ------------------------------ model forward ---------------------------------
def transformer_forward(params, x):
    B, S, _ = x.shape
    x2d = x.reshape(B * S, INPUT_DIM)

    args = [
        x2d,
        params["in_proj_w"], params["in_proj_b"].reshape(1, -1),
        params["pe"].reshape(-1, D_MODEL)[:S],
        params["pos_w"], params["pos_b"].reshape(1, -1),
        params["pos_ln_g"].reshape(1, -1), params["pos_ln_b"].reshape(1, -1),
    ]
    for lp in params["layers"]:
        args += [
            lp["qkv_w"], lp["qkv_b"].reshape(1, -1),
            lp["out_w"], lp["out_b"].reshape(1, -1),
            lp["ln1_g"].reshape(1, -1), lp["ln1_b"].reshape(1, -1),
            lp["ff_w1"], lp["ff_b1"].reshape(1, -1),
            lp["ff_w2"], lp["ff_b2"].reshape(1, -1),
            lp["ln2_g"].reshape(1, -1), lp["ln2_b"].reshape(1, -1),
        ]
    args += [
        params["cls_w1"], params["cls_b1"].reshape(1, -1),
        params["cls_w2_pad"], params["cls_b2_pad"].reshape(1, -1),
    ]

    vmem = pl.BlockSpec(memory_space=pltpu.MemorySpace.VMEM)
    logits_pad = pl.pallas_call(
        _fused_forward_kernel,
        out_shape=jax.ShapeDtypeStruct((B, LANE_PAD), jnp.float32),
        in_specs=[vmem] * len(args),
        out_specs=vmem,
    )(*args)
    return logits_pad[:, :NUM_CLASSES]


# ---------------------------- parameter set-up --------------------------------
def xavier_uniform(key, fan_in, fan_out):
    limit = math.sqrt(6.0 / (fan_in + fan_out))
    return jax.random.uniform(key, (fan_in, fan_out), jnp.float32, -limit, limit)


def sinusoidal_pe(seq_len, d_model):
    pos = jnp.arange(seq_len, dtype=jnp.float32)[:, None]
    div = jnp.exp(jnp.arange(0, d_model, 2, dtype=jnp.float32)
                  * (-math.log(10000.0) / d_model))
    pe = jnp.zeros((seq_len, d_model), jnp.float32)
    pe = pe.at[:, 0::2].set(jnp.sin(pos * div))
    pe = pe.at[:, 1::2].set(jnp.cos(pos * div))
    return pe[None]                                     # (1, S, d_model)


def init_params(key):
    keys = iter(jax.random.split(key, 32))
    cls_w2 = xavier_uniform(jax.random.fold_in(key, 99), DIM_FF, NUM_CLASSES)
    cls_b2 = jnp.zeros((NUM_CLASSES,), jnp.float32)
    p = {
        "in_proj_w": xavier_uniform(next(keys), INPUT_DIM, D_MODEL),
        "in_proj_b": jnp.zeros((D_MODEL,), jnp.float32),
        "pe": sinusoidal_pe(SEQ, D_MODEL),
        "pos_w": xavier_uniform(next(keys), D_MODEL, D_MODEL),
        "pos_b": jnp.zeros((D_MODEL,), jnp.float32),
        "pos_ln_g": jnp.ones((D_MODEL,), jnp.float32),
        "pos_ln_b": jnp.zeros((D_MODEL,), jnp.float32),
        "cls_w1": xavier_uniform(next(keys), D_MODEL, DIM_FF),
        "cls_b1": jnp.zeros((DIM_FF,), jnp.float32),
        "cls_w2": cls_w2,
        "cls_b2": cls_b2,
        # lane-dense padded classifier head for the fused kernel output
        "cls_w2_pad": jnp.zeros((DIM_FF, LANE_PAD), jnp.float32).at[:, :NUM_CLASSES].set(cls_w2),
        "cls_b2_pad": jnp.zeros((LANE_PAD,), jnp.float32).at[:NUM_CLASSES].set(cls_b2),
        "layers": [],
    }
    for _ in range(NUM_LAYERS):
        p["layers"].append({
            "qkv_w": xavier_uniform(next(keys), D_MODEL, 3 * D_MODEL),
            "qkv_b": jnp.zeros((3 * D_MODEL,), jnp.float32),
            "out_w": xavier_uniform(next(keys), D_MODEL, D_MODEL),
            "out_b": jnp.zeros((D_MODEL,), jnp.float32),
            "ln1_g": jnp.ones((D_MODEL,), jnp.float32),
            "ln1_b": jnp.zeros((D_MODEL,), jnp.float32),
            "ff_w1": xavier_uniform(next(keys), D_MODEL, DIM_FF),
            "ff_b1": jnp.zeros((DIM_FF,), jnp.float32),
            "ff_w2": xavier_uniform(next(keys), DIM_FF, D_MODEL),
            "ff_b2": jnp.zeros((D_MODEL,), jnp.float32),
            "ln2_g": jnp.ones((D_MODEL,), jnp.float32),
            "ln2_b": jnp.zeros((D_MODEL,), jnp.float32),
        })
    return p


# ------------------------- pure-JAX reference (check) --------------------------
def reference_forward(params, x):
    def lin(t, w, b):
        return t @ w + b

    def ln(t, g, bb):
        mu = t.mean(-1, keepdims=True)
        var = ((t - mu) ** 2).mean(-1, keepdims=True)
        return (t - mu) / jnp.sqrt(var + LN_EPS) * g + bb

    B, S, _ = x.shape
    h = lin(x, params["in_proj_w"], params["in_proj_b"]) + params["pe"][:, :S, :]
    h = jax.nn.gelu(ln(lin(h, params["pos_w"], params["pos_b"]),
                       params["pos_ln_g"], params["pos_ln_b"]), approximate=False)
    for p in params["layers"]:
        qkv = lin(h, p["qkv_w"], p["qkv_b"])
        q, k, v = jnp.split(qkv, 3, axis=-1)

        def heads(t):
            return t.reshape(B, S, NHEAD, HEAD_DIM).transpose(0, 2, 1, 3)

        q, k, v = heads(q), heads(k), heads(v)
        s = jnp.einsum("bhqd,bhkd->bhqk", q, k) / math.sqrt(HEAD_DIM)
        a = jax.nn.softmax(s, axis=-1)
        ctx = jnp.einsum("bhqk,bhkd->bhqd", a, v).transpose(0, 2, 1, 3).reshape(B, S, D_MODEL)
        h = ln(h + lin(ctx, p["out_w"], p["out_b"]), p["ln1_g"], p["ln1_b"])
        ff = lin(jnp.maximum(lin(h, p["ff_w1"], p["ff_b1"]), 0.0), p["ff_w2"], p["ff_b2"])
        h = ln(h + ff, p["ln2_g"], p["ln2_b"])
    pooled = h.mean(axis=1)
    c = jax.nn.gelu(lin(pooled, params["cls_w1"], params["cls_b1"]), approximate=False)
    return lin(c, params["cls_w2"], params["cls_b2"])


# ----------------------------------- main --------------------------------------
if __name__ == "__main__":
    key = jax.random.PRNGKey(0)
    pkey, xkey = jax.random.split(key)
    params = init_params(pkey)
    x = jax.random.normal(xkey, (BATCH, SEQ, INPUT_DIM), jnp.float32)

    fwd = jax.jit(transformer_forward)
    out = jax.block_until_ready(fwd(params, x))
    ref = jax.block_until_ready(reference_forward(params, x))

    assert out.shape == (BATCH, NUM_CLASSES)
    assert bool(jnp.all(jnp.isfinite(out)))
    assert bool(jnp.allclose(out, ref, atol=1e-4, rtol=1e-4)), (out, ref)
    print("KERNEL_OK")
</pallas_src>

<mosaic_0001>
module attributes {stable_mosaic.version = 11 : i64} {
  func.func @_fused_forward_kernel(%arg0: memref<16x4xf32, #tpu.memory_space<vmem>>, %arg1: memref<4x32xf32, #tpu.memory_space<vmem>>, %arg2: memref<1x32xf32, #tpu.memory_space<vmem>>, %arg3: memref<8x32xf32, #tpu.memory_space<vmem>>, %arg4: memref<32x32xf32, #tpu.memory_space<vmem>>, %arg5: memref<1x32xf32, #tpu.memory_space<vmem>>, %arg6: memref<1x32xf32, #tpu.memory_space<vmem>>, %arg7: memref<1x32xf32, #tpu.memory_space<vmem>>, %arg8: memref<32x96xf32, #tpu.memory_space<vmem>>, %arg9: memref<1x96xf32, #tpu.memory_space<vmem>>, %arg10: memref<32x32xf32, #tpu.memory_space<vmem>>, %arg11: memref<1x32xf32, #tpu.memory_space<vmem>>, %arg12: memref<1x32xf32, #tpu.memory_space<vmem>>, %arg13: memref<1x32xf32, #tpu.memory_space<vmem>>, %arg14: memref<32x64xf32, #tpu.memory_space<vmem>>, %arg15: memref<1x64xf32, #tpu.memory_space<vmem>>, %arg16: memref<64x32xf32, #tpu.memory_space<vmem>>, %arg17: memref<1x32xf32, #tpu.memory_space<vmem>>, %arg18: memref<1x32xf32, #tpu.memory_space<vmem>>, %arg19: memref<1x32xf32, #tpu.memory_space<vmem>>, %arg20: memref<32x96xf32, #tpu.memory_space<vmem>>, %arg21: memref<1x96xf32, #tpu.memory_space<vmem>>, %arg22: memref<32x32xf32, #tpu.memory_space<vmem>>, %arg23: memref<1x32xf32, #tpu.memory_space<vmem>>, %arg24: memref<1x32xf32, #tpu.memory_space<vmem>>, %arg25: memref<1x32xf32, #tpu.memory_space<vmem>>, %arg26: memref<32x64xf32, #tpu.memory_space<vmem>>, %arg27: memref<1x64xf32, #tpu.memory_space<vmem>>, %arg28: memref<64x32xf32, #tpu.memory_space<vmem>>, %arg29: memref<1x32xf32, #tpu.memory_space<vmem>>, %arg30: memref<1x32xf32, #tpu.memory_space<vmem>>, %arg31: memref<1x32xf32, #tpu.memory_space<vmem>>, %arg32: memref<32x64xf32, #tpu.memory_space<vmem>>, %arg33: memref<1x64xf32, #tpu.memory_space<vmem>>, %arg34: memref<64x128xf32, #tpu.memory_space<vmem>>, %arg35: memref<1x128xf32, #tpu.memory_space<vmem>>, %arg36: memref<2x128xf32, #tpu.memory_space<vmem>>) attributes {dimension_semantics = [], scalar_prefetch = 0 : i64, scratch_operands = 0 : i64, tpu.core_type = #tpu.core_type<tc>} {
    %c0 = arith.constant 0 : index
    %c0_0 = arith.constant 0 : index
    %0 = vector.load %arg0[%c0, %c0_0] : memref<16x4xf32, #tpu.memory_space<vmem>>, vector<16x4xf32>
    %c0_1 = arith.constant 0 : index
    %c0_2 = arith.constant 0 : index
    %1 = vector.load %arg1[%c0_1, %c0_2] : memref<4x32xf32, #tpu.memory_space<vmem>>, vector<4x32xf32>
    %c0_3 = arith.constant 0 : index
    %c0_4 = arith.constant 0 : index
    %2 = vector.load %arg2[%c0_3, %c0_4] : memref<1x32xf32, #tpu.memory_space<vmem>>, vector<1x32xf32>
    %c0_5 = arith.constant 0 : index
    %c0_6 = arith.constant 0 : index
    %3 = vector.load %arg3[%c0_5, %c0_6] : memref<8x32xf32, #tpu.memory_space<vmem>>, vector<8x32xf32>
    %c0_7 = arith.constant 0 : index
    %c0_8 = arith.constant 0 : index
    %4 = vector.load %arg4[%c0_7, %c0_8] : memref<32x32xf32, #tpu.memory_space<vmem>>, vector<32x32xf32>
    %c0_9 = arith.constant 0 : index
    %c0_10 = arith.constant 0 : index
    %5 = vector.load %arg5[%c0_9, %c0_10] : memref<1x32xf32, #tpu.memory_space<vmem>>, vector<1x32xf32>
    %c0_11 = arith.constant 0 : index
    %c0_12 = arith.constant 0 : index
    %6 = vector.load %arg6[%c0_11, %c0_12] : memref<1x32xf32, #tpu.memory_space<vmem>>, vector<1x32xf32>
    %c0_13 = arith.constant 0 : index
    %c0_14 = arith.constant 0 : index
    %7 = vector.load %arg7[%c0_13, %c0_14] : memref<1x32xf32, #tpu.memory_space<vmem>>, vector<1x32xf32>
    %c0_15 = arith.constant 0 : index
    %c0_16 = arith.constant 0 : index
    %8 = vector.load %arg8[%c0_15, %c0_16] : memref<32x96xf32, #tpu.memory_space<vmem>>, vector<32x96xf32>
    %c0_17 = arith.constant 0 : index
    %c0_18 = arith.constant 0 : index
    %9 = vector.load %arg9[%c0_17, %c0_18] : memref<1x96xf32, #tpu.memory_space<vmem>>, vector<1x96xf32>
    %c0_19 = arith.constant 0 : index
    %c0_20 = arith.constant 0 : index
    %10 = vector.load %arg10[%c0_19, %c0_20] : memref<32x32xf32, #tpu.memory_space<vmem>>, vector<32x32xf32>
    %c0_21 = arith.constant 0 : index
    %c0_22 = arith.constant 0 : index
    %11 = vector.load %arg11[%c0_21, %c0_22] : memref<1x32xf32, #tpu.memory_space<vmem>>, vector<1x32xf32>
    %c0_23 = arith.constant 0 : index
    %c0_24 = arith.constant 0 : index
    %12 = vector.load %arg12[%c0_23, %c0_24] : memref<1x32xf32, #tpu.memory_space<vmem>>, vector<1x32xf32>
    %c0_25 = arith.constant 0 : index
    %c0_26 = arith.constant 0 : index
    %13 = vector.load %arg13[%c0_25, %c0_26] : memref<1x32xf32, #tpu.memory_space<vmem>>, vector<1x32xf32>
    %c0_27 = arith.constant 0 : index
    %c0_28 = arith.constant 0 : index
    %14 = vector.load %arg14[%c0_27, %c0_28] : memref<32x64xf32, #tpu.memory_space<vmem>>, vector<32x64xf32>
    %c0_29 = arith.constant 0 : index
    %c0_30 = arith.constant 0 : index
    %15 = vector.load %arg15[%c0_29, %c0_30] : memref<1x64xf32, #tpu.memory_space<vmem>>, vector<1x64xf32>
    %c0_31 = arith.constant 0 : index
    %c0_32 = arith.constant 0 : index
    %16 = vector.load %arg16[%c0_31, %c0_32] : memref<64x32xf32, #tpu.memory_space<vmem>>, vector<64x32xf32>
    %c0_33 = arith.constant 0 : index
    %c0_34 = arith.constant 0 : index
    %17 = vector.load %arg17[%c0_33, %c0_34] : memref<1x32xf32, #tpu.memory_space<vmem>>, vector<1x32xf32>
    %c0_35 = arith.constant 0 : index
    %c0_36 = arith.constant 0 : index
    %18 = vector.load %arg18[%c0_35, %c0_36] : memref<1x32xf32, #tpu.memory_space<vmem>>, vector<1x32xf32>
    %c0_37 = arith.constant 0 : index
    %c0_38 = arith.constant 0 : index
    %19 = vector.load %arg19[%c0_37, %c0_38] : memref<1x32xf32, #tpu.memory_space<vmem>>, vector<1x32xf32>
    %c0_39 = arith.constant 0 : index
    %c0_40 = arith.constant 0 : index
    %20 = vector.load %arg20[%c0_39, %c0_40] : memref<32x96xf32, #tpu.memory_space<vmem>>, vector<32x96xf32>
    %c0_41 = arith.constant 0 : index
    %c0_42 = arith.constant 0 : index
    %21 = vector.load %arg21[%c0_41, %c0_42] : memref<1x96xf32, #tpu.memory_space<vmem>>, vector<1x96xf32>
    %c0_43 = arith.constant 0 : index
    %c0_44 = arith.constant 0 : index
    %22 = vector.load %arg22[%c0_43, %c0_44] : memref<32x32xf32, #tpu.memory_space<vmem>>, vector<32x32xf32>
    %c0_45 = arith.constant 0 : index
    %c0_46 = arith.constant 0 : index
    %23 = vector.load %arg23[%c0_45, %c0_46] : memref<1x32xf32, #tpu.memory_space<vmem>>, vector<1x32xf32>
    %c0_47 = arith.constant 0 : index
    %c0_48 = arith.constant 0 : index
    %24 = vector.load %arg24[%c0_47, %c0_48] : memref<1x32xf32, #tpu.memory_space<vmem>>, vector<1x32xf32>
    %c0_49 = arith.constant 0 : index
    %c0_50 = arith.constant 0 : index
    %25 = vector.load %arg25[%c0_49, %c0_50] : memref<1x32xf32, #tpu.memory_space<vmem>>, vector<1x32xf32>
    %c0_51 = arith.constant 0 : index
    %c0_52 = arith.constant 0 : index
    %26 = vector.load %arg26[%c0_51, %c0_52] : memref<32x64xf32, #tpu.memory_space<vmem>>, vector<32x64xf32>
    %c0_53 = arith.constant 0 : index
    %c0_54 = arith.constant 0 : index
    %27 = vector.load %arg27[%c0_53, %c0_54] : memref<1x64xf32, #tpu.memory_space<vmem>>, vector<1x64xf32>
    %c0_55 = arith.constant 0 : index
    %c0_56 = arith.constant 0 : index
    %28 = vector.load %arg28[%c0_55, %c0_56] : memref<64x32xf32, #tpu.memory_space<vmem>>, vector<64x32xf32>
    %c0_57 = arith.constant 0 : index
    %c0_58 = arith.constant 0 : index
    %29 = vector.load %arg29[%c0_57, %c0_58] : memref<1x32xf32, #tpu.memory_space<vmem>>, vector<1x32xf32>
    %c0_59 = arith.constant 0 : index
    %c0_60 = arith.constant 0 : index
    %30 = vector.load %arg30[%c0_59, %c0_60] : memref<1x32xf32, #tpu.memory_space<vmem>>, vector<1x32xf32>
    %c0_61 = arith.constant 0 : index
    %c0_62 = arith.constant 0 : index
    %31 = vector.load %arg31[%c0_61, %c0_62] : memref<1x32xf32, #tpu.memory_space<vmem>>, vector<1x32xf32>
    %c0_63 = arith.constant 0 : index
    %c0_64 = arith.constant 0 : index
    %32 = vector.load %arg32[%c0_63, %c0_64] : memref<32x64xf32, #tpu.memory_space<vmem>>, vector<32x64xf32>
    %c0_65 = arith.constant 0 : index
    %c0_66 = arith.constant 0 : index
    %33 = vector.load %arg33[%c0_65, %c0_66] : memref<1x64xf32, #tpu.memory_space<vmem>>, vector<1x64xf32>
    %c0_67 = arith.constant 0 : index
    %c0_68 = arith.constant 0 : index
    %34 = vector.load %arg34[%c0_67, %c0_68] : memref<64x128xf32, #tpu.memory_space<vmem>>, vector<64x128xf32>
    %c0_69 = arith.constant 0 : index
    %c0_70 = arith.constant 0 : index
    %35 = vector.load %arg35[%c0_69, %c0_70] : memref<1x128xf32, #tpu.memory_space<vmem>>, vector<1x128xf32>
    %cst = arith.constant dense<0.000000e+00> : vector<16x32xf32>
    %36 = tpu.matmul %0, %1, %cst {dimension_numbers = #tpu.dot_dimension_numbers<[1], [0], [0], [1], [0, 0, 1, 1], [], []>} : vector<16x4xf32>, vector<4x32xf32>, vector<16x32xf32> -> vector<16x32xf32>
    %37 = vector.broadcast %2 : vector<1x32xf32> to vector<16x32xf32>
    %38 = arith.addf %36, %37 : vector<16x32xf32>
    %39 = tpu.concatenate %3, %3 in 0 : vector<8x32xf32>, vector<8x32xf32> -> vector<16x32xf32>
    %40 = arith.addf %38, %39 : vector<16x32xf32>
    %cst_71 = arith.constant dense<0.000000e+00> : vector<16x32xf32>
    %41 = tpu.matmul %40, %4, %cst_71 {dimension_numbers = #tpu.dot_dimension_numbers<[1], [0], [0], [1], [0, 0, 1, 1], [], []>} : vector<16x32xf32>, vector<32x32xf32>, vector<16x32xf32> -> vector<16x32xf32>
    %42 = vector.broadcast %5 : vector<1x32xf32> to vector<16x32xf32>
    %43 = arith.addf %41, %42 : vector<16x32xf32>
    %cst_72 = arith.constant dense<0.000000e+00> : vector<16xf32>
    %44 = vector.multi_reduction <add>, %43, %cst_72 [1] : vector<16x32xf32> to vector<16xf32>
    %45 = vector.shape_cast %44 : vector<16xf32> to vector<16x1xf32>
    %cst_73 = arith.constant 3.200000e+01 : f32
    %46 = vector.broadcast %cst_73 : f32 to vector<16x1xf32>
    %47 = arith.divf %45, %46 : vector<16x1xf32>
    %48 = vector.broadcast %47 : vector<16x1xf32> to vector<16x32xf32>
    %49 = arith.subf %43, %48 : vector<16x32xf32>
    %50 = arith.mulf %49, %49 : vector<16x32xf32>
    %cst_74 = arith.constant dense<0.000000e+00> : vector<16xf32>
    %51 = vector.multi_reduction <add>, %50, %cst_74 [1] : vector<16x32xf32> to vector<16xf32>
    %52 = vector.shape_cast %51 : vector<16xf32> to vector<16x1xf32>
    %cst_75 = arith.constant 3.200000e+01 : f32
    %53 = vector.broadcast %cst_75 : f32 to vector<16x1xf32>
    %54 = arith.divf %52, %53 : vector<16x1xf32>
    %55 = vector.broadcast %47 : vector<16x1xf32> to vector<16x32xf32>
    %56 = arith.subf %43, %55 : vector<16x32xf32>
    %cst_76 = arith.constant 9.99999974E-6 : f32
    %57 = vector.broadcast %cst_76 : f32 to vector<16x1xf32>
    %58 = arith.addf %54, %57 : vector<16x1xf32>
    %59 = math.rsqrt %58 : vector<16x1xf32>
    %60 = vector.broadcast %59 : vector<16x1xf32> to vector<16x32xf32>
    %61 = arith.mulf %56, %60 : vector<16x32xf32>
    %62 = vector.broadcast %6 : vector<1x32xf32> to vector<16x32xf32>
    %63 = arith.mulf %61, %62 : vector<16x32xf32>
    %64 = vector.broadcast %7 : vector<1x32xf32> to vector<16x32xf32>
    %65 = arith.addf %63, %64 : vector<16x32xf32>
    %cst_77 = arith.constant 0.707106769 : f32
    %66 = vector.broadcast %cst_77 : f32 to vector<16x32xf32>
    %67 = arith.mulf %65, %66 : vector<16x32xf32>
    %68 = math.absf %67 : vector<16x32xf32>
    %cst_78 = arith.constant 0.327591091 : f32
    %69 = vector.broadcast %cst_78 : f32 to vector<16x32xf32>
    %70 = arith.mulf %69, %68 : vector<16x32xf32>
    %cst_79 = arith.constant 1.000000e+00 : f32
    %71 = vector.broadcast %cst_79 : f32 to vector<16x32xf32>
    %72 = arith.addf %71, %70 : vector<16x32xf32>
    %cst_80 = arith.constant 1.000000e+00 : f32
    %73 = vector.broadcast %cst_80 : f32 to vector<16x32xf32>
    %74 = arith.divf %73, %72 : vector<16x32xf32>
    %cst_81 = arith.constant 1.06140542 : f32
    %75 = vector.broadcast %cst_81 : f32 to vector<16x32xf32>
    %76 = arith.mulf %74, %75 : vector<16x32xf32>
    %cst_82 = arith.constant -1.45315206 : f32
    %77 = vector.broadcast %cst_82 : f32 to vector<16x32xf32>
    %78 = arith.addf %77, %76 : vector<16x32xf32>
    %79 = arith.mulf %74, %78 : vector<16x32xf32>
    %cst_83 = arith.constant 1.42141378 : f32
    %80 = vector.broadcast %cst_83 : f32 to vector<16x32xf32>
    %81 = arith.addf %80, %79 : vector<16x32xf32>
    %82 = arith.mulf %74, %81 : vector<16x32xf32>
    %cst_84 = arith.constant -0.284496725 : f32
    %83 = vector.broadcast %cst_84 : f32 to vector<16x32xf32>
    %84 = arith.addf %83, %82 : vector<16x32xf32>
    %85 = arith.mulf %74, %84 : vector<16x32xf32>
    %cst_85 = arith.constant 0.254829586 : f32
    %86 = vector.broadcast %cst_85 : f32 to vector<16x32xf32>
    %87 = arith.addf %86, %85 : vector<16x32xf32>
    %88 = arith.mulf %74, %87 : vector<16x32xf32>
    %cst_86 = arith.constant 0.000000e+00 : f32
    %89 = vector.broadcast %cst_86 : f32 to vector<16x32xf32>
    %90 = arith.subf %89, %68 : vector<16x32xf32>
    %91 = arith.mulf %90, %68 : vector<16x32xf32>
    %92 = math.exp %91 : vector<16x32xf32>
    %93 = arith.mulf %88, %92 : vector<16x32xf32>
    %cst_87 = arith.constant 1.000000e+00 : f32
    %94 = vector.broadcast %cst_87 : f32 to vector<16x32xf32>
    %95 = arith.subf %94, %93 : vector<16x32xf32>
    %cst_88 = arith.constant 0.000000e+00 : f32
    %96 = vector.broadcast %cst_88 : f32 to vector<16x32xf32>
    %97 = arith.cmpf olt, %67, %96 : vector<16x32xf32>
    %cst_89 = arith.constant 0.000000e+00 : f32
    %98 = vector.broadcast %cst_89 : f32 to vector<16x32xf32>
    %99 = arith.subf %98, %95 : vector<16x32xf32>
    %100 = arith.select %97, %99, %95 : vector<16x32xi1>, vector<16x32xf32>
    %cst_90 = arith.constant 5.000000e-01 : f32
    %101 = vector.broadcast %cst_90 : f32 to vector<16x32xf32>
    %102 = arith.mulf %101, %65 : vector<16x32xf32>
    %cst_91 = arith.constant 1.000000e+00 : f32
    %103 = vector.broadcast %cst_91 : f32 to vector<16x32xf32>
    %104 = arith.addf %103, %100 : vector<16x32xf32>
    %105 = arith.mulf %102, %104 : vector<16x32xf32>
    %cst_92 = arith.constant dense<0.000000e+00> : vector<16x96xf32>
    %106 = tpu.matmul %105, %8, %cst_92 {dimension_numbers = #tpu.dot_dimension_numbers<[1], [0], [0], [1], [0, 0, 1, 1], [], []>} : vector<16x32xf32>, vector<32x96xf32>, vector<16x96xf32> -> vector<16x96xf32>
    %107 = vector.broadcast %9 : vector<1x96xf32> to vector<16x96xf32>
    %108 = arith.addf %106, %107 : vector<16x96xf32>
    %109 = vector.extract_strided_slice %108 {offsets = [0, 0], sizes = [8, 8], strides = [1, 1]} : vector<16x96xf32> to vector<8x8xf32>
    %110 = vector.extract_strided_slice %108 {offsets = [0, 32], sizes = [8, 8], strides = [1, 1]} : vector<16x96xf32> to vector<8x8xf32>
    %111 = vector.extract_strided_slice %108 {offsets = [0, 64], sizes = [8, 8], strides = [1, 1]} : vector<16x96xf32> to vector<8x8xf32>
    %cst_93 = arith.constant dense<0.000000e+00> : vector<8x8xf32>
    %112 = tpu.matmul %109, %110, %cst_93 {dimension_numbers = #tpu.dot_dimension_numbers<[1], [1], [0], [0], [0, 0, 1, 0], [], []>} : vector<8x8xf32>, vector<8x8xf32>, vector<8x8xf32> -> vector<8x8xf32>
    %cst_94 = arith.constant 0.353553385 : f32
    %113 = vector.broadcast %cst_94 : f32 to vector<8x8xf32>
    %114 = arith.mulf %112, %113 : vector<8x8xf32>
    %cst_95 = arith.constant dense<0xFF800000> : vector<8xf32>
    %115 = vector.multi_reduction <maximumf>, %114, %cst_95 [1] : vector<8x8xf32> to vector<8xf32>
    %116 = vector.shape_cast %115 : vector<8xf32> to vector<8x1xf32>
    %117 = vector.broadcast %116 : vector<8x1xf32> to vector<8x8xf32>
    %118 = arith.subf %114, %117 : vector<8x8xf32>
    %119 = math.exp %118 : vector<8x8xf32>
    %cst_96 = arith.constant dense<0.000000e+00> : vector<8xf32>
    %120 = vector.multi_reduction <add>, %119, %cst_96 [1] : vector<8x8xf32> to vector<8xf32>
    %121 = vector.shape_cast %120 : vector<8xf32> to vector<8x1xf32>
    %122 = tpu.reciprocal %121 : vector<8x1xf32> -> vector<8x1xf32>
    %123 = vector.broadcast %122 : vector<8x1xf32> to vector<8x8xf32>
    %124 = arith.mulf %119, %123 : vector<8x8xf32>
    %cst_97 = arith.constant dense<0.000000e+00> : vector<8x8xf32>
    %125 = tpu.matmul %124, %111, %cst_97 {dimension_numbers = #tpu.dot_dimension_numbers<[1], [0], [0], [1], [0, 0, 1, 1], [], []>} : vector<8x8xf32>, vector<8x8xf32>, vector<8x8xf32> -> vector<8x8xf32>
    %126 = vector.extract_strided_slice %108 {offsets = [0, 8], sizes = [8, 8], strides = [1, 1]} : vector<16x96xf32> to vector<8x8xf32>
    %127 = vector.extract_strided_slice %108 {offsets = [0, 40], sizes = [8, 8], strides = [1, 1]} : vector<16x96xf32> to vector<8x8xf32>
    %128 = vector.extract_strided_slice %108 {offsets = [0, 72], sizes = [8, 8], strides = [1, 1]} : vector<16x96xf32> to vector<8x8xf32>
    %cst_98 = arith.constant dense<0.000000e+00> : vector<8x8xf32>
    %129 = tpu.matmul %126, %127, %cst_98 {dimension_numbers = #tpu.dot_dimension_numbers<[1], [1], [0], [0], [0, 0, 1, 0], [], []>} : vector<8x8xf32>, vector<8x8xf32>, vector<8x8xf32> -> vector<8x8xf32>
    %cst_99 = arith.constant 0.353553385 : f32
    %130 = vector.broadcast %cst_99 : f32 to vector<8x8xf32>
    %131 = arith.mulf %129, %130 : vector<8x8xf32>
    %cst_100 = arith.constant dense<0xFF800000> : vector<8xf32>
    %132 = vector.multi_reduction <maximumf>, %131, %cst_100 [1] : vector<8x8xf32> to vector<8xf32>
    %133 = vector.shape_cast %132 : vector<8xf32> to vector<8x1xf32>
    %134 = vector.broadcast %133 : vector<8x1xf32> to vector<8x8xf32>
    %135 = arith.subf %131, %134 : vector<8x8xf32>
    %136 = math.exp %135 : vector<8x8xf32>
    %cst_101 = arith.constant dense<0.000000e+00> : vector<8xf32>
    %137 = vector.multi_reduction <add>, %136, %cst_101 [1] : vector<8x8xf32> to vector<8xf32>
    %138 = vector.shape_cast %137 : vector<8xf32> to vector<8x1xf32>
    %139 = tpu.reciprocal %138 : vector<8x1xf32> -> vector<8x1xf32>
    %140 = vector.broadcast %139 : vector<8x1xf32> to vector<8x8xf32>
    %141 = arith.mulf %136, %140 : vector<8x8xf32>
    %cst_102 = arith.constant dense<0.000000e+00> : vector<8x8xf32>
    %142 = tpu.matmul %141, %128, %cst_102 {dimension_numbers = #tpu.dot_dimension_numbers<[1], [0], [0], [1], [0, 0, 1, 1], [], []>} : vector<8x8xf32>, vector<8x8xf32>, vector<8x8xf32> -> vector<8x8xf32>
    %143 = vector.extract_strided_slice %108 {offsets = [0, 16], sizes = [8, 8], strides = [1, 1]} : vector<16x96xf32> to vector<8x8xf32>
    %144 = vector.extract_strided_slice %108 {offsets = [0, 48], sizes = [8, 8], strides = [1, 1]} : vector<16x96xf32> to vector<8x8xf32>
    %145 = vector.extract_strided_slice %108 {offsets = [0, 80], sizes = [8, 8], strides = [1, 1]} : vector<16x96xf32> to vector<8x8xf32>
    %cst_103 = arith.constant dense<0.000000e+00> : vector<8x8xf32>
    %146 = tpu.matmul %143, %144, %cst_103 {dimension_numbers = #tpu.dot_dimension_numbers<[1], [1], [0], [0], [0, 0, 1, 0], [], []>} : vector<8x8xf32>, vector<8x8xf32>, vector<8x8xf32> -> vector<8x8xf32>
    %cst_104 = arith.constant 0.353553385 : f32
    %147 = vector.broadcast %cst_104 : f32 to vector<8x8xf32>
    %148 = arith.mulf %146, %147 : vector<8x8xf32>
    %cst_105 = arith.constant dense<0xFF800000> : vector<8xf32>
    %149 = vector.multi_reduction <maximumf>, %148, %cst_105 [1] : vector<8x8xf32> to vector<8xf32>
    %150 = vector.shape_cast %149 : vector<8xf32> to vector<8x1xf32>
    %151 = vector.broadcast %150 : vector<8x1xf32> to vector<8x8xf32>
    %152 = arith.subf %148, %151 : vector<8x8xf32>
    %153 = math.exp %152 : vector<8x8xf32>
    %cst_106 = arith.constant dense<0.000000e+00> : vector<8xf32>
    %154 = vector.multi_reduction <add>, %153, %cst_106 [1] : vector<8x8xf32> to vector<8xf32>
    %155 = vector.shape_cast %154 : vector<8xf32> to vector<8x1xf32>
    %156 = tpu.reciprocal %155 : vector<8x1xf32> -> vector<8x1xf32>
    %157 = vector.broadcast %156 : vector<8x1xf32> to vector<8x8xf32>
    %158 = arith.mulf %153, %157 : vector<8x8xf32>
    %cst_107 = arith.constant dense<0.000000e+00> : vector<8x8xf32>
    %159 = tpu.matmul %158, %145, %cst_107 {dimension_numbers = #tpu.dot_dimension_numbers<[1], [0], [0], [1], [0, 0, 1, 1], [], []>} : vector<8x8xf32>, vector<8x8xf32>, vector<8x8xf32> -> vector<8x8xf32>
    %160 = vector.extract_strided_slice %108 {offsets = [0, 24], sizes = [8, 8], strides = [1, 1]} : vector<16x96xf32> to vector<8x8xf32>
    %161 = vector.extract_strided_slice %108 {offsets = [0, 56], sizes = [8, 8], strides = [1, 1]} : vector<16x96xf32> to vector<8x8xf32>
    %162 = vector.extract_strided_slice %108 {offsets = [0, 88], sizes = [8, 8], strides = [1, 1]} : vector<16x96xf32> to vector<8x8xf32>
    %cst_108 = arith.constant dense<0.000000e+00> : vector<8x8xf32>
    %163 = tpu.matmul %160, %161, %cst_108 {dimension_numbers = #tpu.dot_dimension_numbers<[1], [1], [0], [0], [0, 0, 1, 0], [], []>} : vector<8x8xf32>, vector<8x8xf32>, vector<8x8xf32> -> vector<8x8xf32>
    %cst_109 = arith.constant 0.353553385 : f32
    %164 = vector.broadcast %cst_109 : f32 to vector<8x8xf32>
    %165 = arith.mulf %163, %164 : vector<8x8xf32>
    %cst_110 = arith.constant dense<0xFF800000> : vector<8xf32>
    %166 = vector.multi_reduction <maximumf>, %165, %cst_110 [1] : vector<8x8xf32> to vector<8xf32>
    %167 = vector.shape_cast %166 : vector<8xf32> to vector<8x1xf32>
    %168 = vector.broadcast %167 : vector<8x1xf32> to vector<8x8xf32>
    %169 = arith.subf %165, %168 : vector<8x8xf32>
    %170 = math.exp %169 : vector<8x8xf32>
    %cst_111 = arith.constant dense<0.000000e+00> : vector<8xf32>
    %171 = vector.multi_reduction <add>, %170, %cst_111 [1] : vector<8x8xf32> to vector<8xf32>
    %172 = vector.shape_cast %171 : vector<8xf32> to vector<8x1xf32>
    %173 = tpu.reciprocal %172 : vector<8x1xf32> -> vector<8x1xf32>
    %174 = vector.broadcast %173 : vector<8x1xf32> to vector<8x8xf32>
    %175 = arith.mulf %170, %174 : vector<8x8xf32>
    %cst_112 = arith.constant dense<0.000000e+00> : vector<8x8xf32>
    %176 = tpu.matmul %175, %162, %cst_112 {dimension_numbers = #tpu.dot_dimension_numbers<[1], [0], [0], [1], [0, 0, 1, 1], [], []>} : vector<8x8xf32>, vector<8x8xf32>, vector<8x8xf32> -> vector<8x8xf32>
    %177 = tpu.concatenate %125, %142, %159, %176 in 1 : vector<8x8xf32>, vector<8x8xf32>, vector<8x8xf32>, vector<8x8xf32> -> vector<8x32xf32>
    %178 = vector.extract_strided_slice %108 {offsets = [8, 0], sizes = [8, 8], strides = [1, 1]} : vector<16x96xf32> to vector<8x8xf32>
    %179 = vector.extract_strided_slice %108 {offsets = [8, 32], sizes = [8, 8], strides = [1, 1]} : vector<16x96xf32> to vector<8x8xf32>
    %180 = vector.extract_strided_slice %108 {offsets = [8, 64], sizes = [8, 8], strides = [1, 1]} : vector<16x96xf32> to vector<8x8xf32>
    %cst_113 = arith.constant dense<0.000000e+00> : vector<8x8xf32>
    %181 = tpu.matmul %178, %179, %cst_113 {dimension_numbers = #tpu.dot_dimension_numbers<[1], [1], [0], [0], [0, 0, 1, 0], [], []>} : vector<8x8xf32>, vector<8x8xf32>, vector<8x8xf32> -> vector<8x8xf32>
    %cst_114 = arith.constant 0.353553385 : f32
    %182 = vector.broadcast %cst_114 : f32 to vector<8x8xf32>
    %183 = arith.mulf %181, %182 : vector<8x8xf32>
    %cst_115 = arith.constant dense<0xFF800000> : vector<8xf32>
    %184 = vector.multi_reduction <maximumf>, %183, %cst_115 [1] : vector<8x8xf32> to vector<8xf32>
    %185 = vector.shape_cast %184 : vector<8xf32> to vector<8x1xf32>
    %186 = vector.broadcast %185 : vector<8x1xf32> to vector<8x8xf32>
    %187 = arith.subf %183, %186 : vector<8x8xf32>
    %188 = math.exp %187 : vector<8x8xf32>
    %cst_116 = arith.constant dense<0.000000e+00> : vector<8xf32>
    %189 = vector.multi_reduction <add>, %188, %cst_116 [1] : vector<8x8xf32> to vector<8xf32>
    %190 = vector.shape_cast %189 : vector<8xf32> to vector<8x1xf32>
    %191 = tpu.reciprocal %190 : vector<8x1xf32> -> vector<8x1xf32>
    %192 = vector.broadcast %191 : vector<8x1xf32> to vector<8x8xf32>
    %193 = arith.mulf %188, %192 : vector<8x8xf32>
    %cst_117 = arith.constant dense<0.000000e+00> : vector<8x8xf32>
    %194 = tpu.matmul %193, %180, %cst_117 {dimension_numbers = #tpu.dot_dimension_numbers<[1], [0], [0], [1], [0, 0, 1, 1], [], []>} : vector<8x8xf32>, vector<8x8xf32>, vector<8x8xf32> -> vector<8x8xf32>
    %195 = vector.extract_strided_slice %108 {offsets = [8, 8], sizes = [8, 8], strides = [1, 1]} : vector<16x96xf32> to vector<8x8xf32>
    %196 = vector.extract_strided_slice %108 {offsets = [8, 40], sizes = [8, 8], strides = [1, 1]} : vector<16x96xf32> to vector<8x8xf32>
    %197 = vector.extract_strided_slice %108 {offsets = [8, 72], sizes = [8, 8], strides = [1, 1]} : vector<16x96xf32> to vector<8x8xf32>
    %cst_118 = arith.constant dense<0.000000e+00> : vector<8x8xf32>
    %198 = tpu.matmul %195, %196, %cst_118 {dimension_numbers = #tpu.dot_dimension_numbers<[1], [1], [0], [0], [0, 0, 1, 0], [], []>} : vector<8x8xf32>, vector<8x8xf32>, vector<8x8xf32> -> vector<8x8xf32>
    %cst_119 = arith.constant 0.353553385 : f32
    %199 = vector.broadcast %cst_119 : f32 to vector<8x8xf32>
    %200 = arith.mulf %198, %199 : vector<8x8xf32>
    %cst_120 = arith.constant dense<0xFF800000> : vector<8xf32>
    %201 = vector.multi_reduction <maximumf>, %200, %cst_120 [1] : vector<8x8xf32> to vector<8xf32>
    %202 = vector.shape_cast %201 : vector<8xf32> to vector<8x1xf32>
    %203 = vector.broadcast %202 : vector<8x1xf32> to vector<8x8xf32>
    %204 = arith.subf %200, %203 : vector<8x8xf32>
    %205 = math.exp %204 : vector<8x8xf32>
    %cst_121 = arith.constant dense<0.000000e+00> : vector<8xf32>
    %206 = vector.multi_reduction <add>, %205, %cst_121 [1] : vector<8x8xf32> to vector<8xf32>
    %207 = vector.shape_cast %206 : vector<8xf32> to vector<8x1xf32>
    %208 = tpu.reciprocal %207 : vector<8x1xf32> -> vector<8x1xf32>
    %209 = vector.broadcast %208 : vector<8x1xf32> to vector<8x8xf32>
    %210 = arith.mulf %205, %209 : vector<8x8xf32>
    %cst_122 = arith.constant dense<0.000000e+00> : vector<8x8xf32>
    %211 = tpu.matmul %210, %197, %cst_122 {dimension_numbers = #tpu.dot_dimension_numbers<[1], [0], [0], [1], [0, 0, 1, 1], [], []>} : vector<8x8xf32>, vector<8x8xf32>, vector<8x8xf32> -> vector<8x8xf32>
    %212 = vector.extract_strided_slice %108 {offsets = [8, 16], sizes = [8, 8], strides = [1, 1]} : vector<16x96xf32> to vector<8x8xf32>
    %213 = vector.extract_strided_slice %108 {offsets = [8, 48], sizes = [8, 8], strides = [1, 1]} : vector<16x96xf32> to vector<8x8xf32>
    %214 = vector.extract_strided_slice %108 {offsets = [8, 80], sizes = [8, 8], strides = [1, 1]} : vector<16x96xf32> to vector<8x8xf32>
    %cst_123 = arith.constant dense<0.000000e+00> : vector<8x8xf32>
    %215 = tpu.matmul %212, %213, %cst_123 {dimension_numbers = #tpu.dot_dimension_numbers<[1], [1], [0], [0], [0, 0, 1, 0], [], []>} : vector<8x8xf32>, vector<8x8xf32>, vector<8x8xf32> -> vector<8x8xf32>
    %cst_124 = arith.constant 0.353553385 : f32
    %216 = vector.broadcast %cst_124 : f32 to vector<8x8xf32>
    %217 = arith.mulf %215, %216 : vector<8x8xf32>
    %cst_125 = arith.constant dense<0xFF800000> : vector<8xf32>
    %218 = vector.multi_reduction <maximumf>, %217, %cst_125 [1] : vector<8x8xf32> to vector<8xf32>
    %219 = vector.shape_cast %218 : vector<8xf32> to vector<8x1xf32>
    %220 = vector.broadcast %219 : vector<8x1xf32> to vector<8x8xf32>
    %221 = arith.subf %217, %220 : vector<8x8xf32>
    %222 = math.exp %221 : vector<8x8xf32>
    %cst_126 = arith.constant dense<0.000000e+00> : vector<8xf32>
    %223 = vector.multi_reduction <add>, %222, %cst_126 [1] : vector<8x8xf32> to vector<8xf32>
    %224 = vector.shape_cast %223 : vector<8xf32> to vector<8x1xf32>
    %225 = tpu.reciprocal %224 : vector<8x1xf32> -> vector<8x1xf32>
    %226 = vector.broadcast %225 : vector<8x1xf32> to vector<8x8xf32>
    %227 = arith.mulf %222, %226 : vector<8x8xf32>
    %cst_127 = arith.constant dense<0.000000e+00> : vector<8x8xf32>
    %228 = tpu.matmul %227, %214, %cst_127 {dimension_numbers = #tpu.dot_dimension_numbers<[1], [0], [0], [1], [0, 0, 1, 1], [], []>} : vector<8x8xf32>, vector<8x8xf32>, vector<8x8xf32> -> vector<8x8xf32>
    %229 = vector.extract_strided_slice %108 {offsets = [8, 24], sizes = [8, 8], strides = [1, 1]} : vector<16x96xf32> to vector<8x8xf32>
    %230 = vector.extract_strided_slice %108 {offsets = [8, 56], sizes = [8, 8], strides = [1, 1]} : vector<16x96xf32> to vector<8x8xf32>
    %231 = vector.extract_strided_slice %108 {offsets = [8, 88], sizes = [8, 8], strides = [1, 1]} : vector<16x96xf32> to vector<8x8xf32>
    %cst_128 = arith.constant dense<0.000000e+00> : vector<8x8xf32>
    %232 = tpu.matmul %229, %230, %cst_128 {dimension_numbers = #tpu.dot_dimension_numbers<[1], [1], [0], [0], [0, 0, 1, 0], [], []>} : vector<8x8xf32>, vector<8x8xf32>, vector<8x8xf32> -> vector<8x8xf32>
    %cst_129 = arith.constant 0.353553385 : f32
    %233 = vector.broadcast %cst_129 : f32 to vector<8x8xf32>
    %234 = arith.mulf %232, %233 : vector<8x8xf32>
    %cst_130 = arith.constant dense<0xFF800000> : vector<8xf32>
    %235 = vector.multi_reduction <maximumf>, %234, %cst_130 [1] : vector<8x8xf32> to vector<8xf32>
    %236 = vector.shape_cast %235 : vector<8xf32> to vector<8x1xf32>
    %237 = vector.broadcast %236 : vector<8x1xf32> to vector<8x8xf32>
    %238 = arith.subf %234, %237 : vector<8x8xf32>
    %239 = math.exp %238 : vector<8x8xf32>
    %cst_131 = arith.constant dense<0.000000e+00> : vector<8xf32>
    %240 = vector.multi_reduction <add>, %239, %cst_131 [1] : vector<8x8xf32> to vector<8xf32>
    %241 = vector.shape_cast %240 : vector<8xf32> to vector<8x1xf32>
    %242 = tpu.reciprocal %241 : vector<8x1xf32> -> vector<8x1xf32>
    %243 = vector.broadcast %242 : vector<8x1xf32> to vector<8x8xf32>
    %244 = arith.mulf %239, %243 : vector<8x8xf32>
    %cst_132 = arith.constant dense<0.000000e+00> : vector<8x8xf32>
    %245 = tpu.matmul %244, %231, %cst_132 {dimension_numbers = #tpu.dot_dimension_numbers<[1], [0], [0], [1], [0, 0, 1, 1], [], []>} : vector<8x8xf32>, vector<8x8xf32>, vector<8x8xf32> -> vector<8x8xf32>
    %246 = tpu.concatenate %194, %211, %228, %245 in 1 : vector<8x8xf32>, vector<8x8xf32>, vector<8x8xf32>, vector<8x8xf32> -> vector<8x32xf32>
    %247 = tpu.concatenate %177, %246 in 0 : vector<8x32xf32>, vector<8x32xf32> -> vector<16x32xf32>
    %cst_133 = arith.constant dense<0.000000e+00> : vector<16x32xf32>
    %248 = tpu.matmul %247, %10, %cst_133 {dimension_numbers = #tpu.dot_dimension_numbers<[1], [0], [0], [1], [0, 0, 1, 1], [], []>} : vector<16x32xf32>, vector<32x32xf32>, vector<16x32xf32> -> vector<16x32xf32>
    %249 = vector.broadcast %11 : vector<1x32xf32> to vector<16x32xf32>
    %250 = arith.addf %248, %249 : vector<16x32xf32>
    %251 = arith.addf %105, %250 : vector<16x32xf32>
    %cst_134 = arith.constant dense<0.000000e+00> : vector<16xf32>
    %252 = vector.multi_reduction <add>, %251, %cst_134 [1] : vector<16x32xf32> to vector<16xf32>
    %253 = vector.shape_cast %252 : vector<16xf32> to vector<16x1xf32>
    %cst_135 = arith.constant 3.200000e+01 : f32
    %254 = vector.broadcast %cst_135 : f32 to vector<16x1xf32>
    %255 = arith.divf %253, %254 : vector<16x1xf32>
    %256 = vector.broadcast %255 : vector<16x1xf32> to vector<16x32xf32>
    %257 = arith.subf %251, %256 : vector<16x32xf32>
    %258 = arith.mulf %257, %257 : vector<16x32xf32>
    %cst_136 = arith.constant dense<0.000000e+00> : vector<16xf32>
    %259 = vector.multi_reduction <add>, %258, %cst_136 [1] : vector<16x32xf32> to vector<16xf32>
    %260 = vector.shape_cast %259 : vector<16xf32> to vector<16x1xf32>
    %cst_137 = arith.constant 3.200000e+01 : f32
    %261 = vector.broadcast %cst_137 : f32 to vector<16x1xf32>
    %262 = arith.divf %260, %261 : vector<16x1xf32>
    %263 = vector.broadcast %255 : vector<16x1xf32> to vector<16x32xf32>
    %264 = arith.subf %251, %263 : vector<16x32xf32>
    %cst_138 = arith.constant 9.99999974E-6 : f32
    %265 = vector.broadcast %cst_138 : f32 to vector<16x1xf32>
    %266 = arith.addf %262, %265 : vector<16x1xf32>
    %267 = math.rsqrt %266 : vector<16x1xf32>
    %268 = vector.broadcast %267 : vector<16x1xf32> to vector<16x32xf32>
    %269 = arith.mulf %264, %268 : vector<16x32xf32>
    %270 = vector.broadcast %12 : vector<1x32xf32> to vector<16x32xf32>
    %271 = arith.mulf %269, %270 : vector<16x32xf32>
    %272 = vector.broadcast %13 : vector<1x32xf32> to vector<16x32xf32>
    %273 = arith.addf %271, %272 : vector<16x32xf32>
    %cst_139 = arith.constant dense<0.000000e+00> : vector<16x64xf32>
    %274 = tpu.matmul %273, %14, %cst_139 {dimension_numbers = #tpu.dot_dimension_numbers<[1], [0], [0], [1], [0, 0, 1, 1], [], []>} : vector<16x32xf32>, vector<32x64xf32>, vector<16x64xf32> -> vector<16x64xf32>
    %275 = vector.broadcast %15 : vector<1x64xf32> to vector<16x64xf32>
    %276 = arith.addf %274, %275 : vector<16x64xf32>
    %cst_140 = arith.constant 0.000000e+00 : f32
    %277 = vector.broadcast %cst_140 : f32 to vector<16x64xf32>
    %278 = arith.maximumf %276, %277 : vector<16x64xf32>
    %cst_141 = arith.constant dense<0.000000e+00> : vector<16x32xf32>
    %279 = tpu.matmul %278, %16, %cst_141 {dimension_numbers = #tpu.dot_dimension_numbers<[1], [0], [0], [1], [0, 0, 1, 1], [], []>} : vector<16x64xf32>, vector<64x32xf32>, vector<16x32xf32> -> vector<16x32xf32>
    %280 = vector.broadcast %17 : vector<1x32xf32> to vector<16x32xf32>
    %281 = arith.addf %279, %280 : vector<16x32xf32>
    %282 = arith.addf %273, %281 : vector<16x32xf32>
    %cst_142 = arith.constant dense<0.000000e+00> : vector<16xf32>
    %283 = vector.multi_reduction <add>, %282, %cst_142 [1] : vector<16x32xf32> to vector<16xf32>
    %284 = vector.shape_cast %283 : vector<16xf32> to vector<16x1xf32>
    %cst_143 = arith.constant 3.200000e+01 : f32
    %285 = vector.broadcast %cst_143 : f32 to vector<16x1xf32>
    %286 = arith.divf %284, %285 : vector<16x1xf32>
    %287 = vector.broadcast %286 : vector<16x1xf32> to vector<16x32xf32>
    %288 = arith.subf %282, %287 : vector<16x32xf32>
    %289 = arith.mulf %288, %288 : vector<16x32xf32>
    %cst_144 = arith.constant dense<0.000000e+00> : vector<16xf32>
    %290 = vector.multi_reduction <add>, %289, %cst_144 [1] : vector<16x32xf32> to vector<16xf32>
    %291 = vector.shape_cast %290 : vector<16xf32> to vector<16x1xf32>
    %cst_145 = arith.constant 3.200000e+01 : f32
    %292 = vector.broadcast %cst_145 : f32 to vector<16x1xf32>
    %293 = arith.divf %291, %292 : vector<16x1xf32>
    %294 = vector.broadcast %286 : vector<16x1xf32> to vector<16x32xf32>
    %295 = arith.subf %282, %294 : vector<16x32xf32>
    %cst_146 = arith.constant 9.99999974E-6 : f32
    %296 = vector.broadcast %cst_146 : f32 to vector<16x1xf32>
    %297 = arith.addf %293, %296 : vector<16x1xf32>
    %298 = math.rsqrt %297 : vector<16x1xf32>
    %299 = vector.broadcast %298 : vector<16x1xf32> to vector<16x32xf32>
    %300 = arith.mulf %295, %299 : vector<16x32xf32>
    %301 = vector.broadcast %18 : vector<1x32xf32> to vector<16x32xf32>
    %302 = arith.mulf %300, %301 : vector<16x32xf32>
    %303 = vector.broadcast %19 : vector<1x32xf32> to vector<16x32xf32>
    %304 = arith.addf %302, %303 : vector<16x32xf32>
    %cst_147 = arith.constant dense<0.000000e+00> : vector<16x96xf32>
    %305 = tpu.matmul %304, %20, %cst_147 {dimension_numbers = #tpu.dot_dimension_numbers<[1], [0], [0], [1], [0, 0, 1, 1], [], []>} : vector<16x32xf32>, vector<32x96xf32>, vector<16x96xf32> -> vector<16x96xf32>
    %306 = vector.broadcast %21 : vector<1x96xf32> to vector<16x96xf32>
    %307 = arith.addf %305, %306 : vector<16x96xf32>
    %308 = vector.extract_strided_slice %307 {offsets = [0, 0], sizes = [8, 8], strides = [1, 1]} : vector<16x96xf32> to vector<8x8xf32>
    %309 = vector.extract_strided_slice %307 {offsets = [0, 32], sizes = [8, 8], strides = [1, 1]} : vector<16x96xf32> to vector<8x8xf32>
    %310 = vector.extract_strided_slice %307 {offsets = [0, 64], sizes = [8, 8], strides = [1, 1]} : vector<16x96xf32> to vector<8x8xf32>
    %cst_148 = arith.constant dense<0.000000e+00> : vector<8x8xf32>
    %311 = tpu.matmul %308, %309, %cst_148 {dimension_numbers = #tpu.dot_dimension_numbers<[1], [1], [0], [0], [0, 0, 1, 0], [], []>} : vector<8x8xf32>, vector<8x8xf32>, vector<8x8xf32> -> vector<8x8xf32>
    %cst_149 = arith.constant 0.353553385 : f32
    %312 = vector.broadcast %cst_149 : f32 to vector<8x8xf32>
    %313 = arith.mulf %311, %312 : vector<8x8xf32>
    %cst_150 = arith.constant dense<0xFF800000> : vector<8xf32>
    %314 = vector.multi_reduction <maximumf>, %313, %cst_150 [1] : vector<8x8xf32> to vector<8xf32>
    %315 = vector.shape_cast %314 : vector<8xf32> to vector<8x1xf32>
    %316 = vector.broadcast %315 : vector<8x1xf32> to vector<8x8xf32>
    %317 = arith.subf %313, %316 : vector<8x8xf32>
    %318 = math.exp %317 : vector<8x8xf32>
    %cst_151 = arith.constant dense<0.000000e+00> : vector<8xf32>
    %319 = vector.multi_reduction <add>, %318, %cst_151 [1] : vector<8x8xf32> to vector<8xf32>
    %320 = vector.shape_cast %319 : vector<8xf32> to vector<8x1xf32>
    %321 = tpu.reciprocal %320 : vector<8x1xf32> -> vector<8x1xf32>
    %322 = vector.broadcast %321 : vector<8x1xf32> to vector<8x8xf32>
    %323 = arith.mulf %318, %322 : vector<8x8xf32>
    %cst_152 = arith.constant dense<0.000000e+00> : vector<8x8xf32>
    %324 = tpu.matmul %323, %310, %cst_152 {dimension_numbers = #tpu.dot_dimension_numbers<[1], [0], [0], [1], [0, 0, 1, 1], [], []>} : vector<8x8xf32>, vector<8x8xf32>, vector<8x8xf32> -> vector<8x8xf32>
    %325 = vector.extract_strided_slice %307 {offsets = [0, 8], sizes = [8, 8], strides = [1, 1]} : vector<16x96xf32> to vector<8x8xf32>
    %326 = vector.extract_strided_slice %307 {offsets = [0, 40], sizes = [8, 8], strides = [1, 1]} : vector<16x96xf32> to vector<8x8xf32>
    %327 = vector.extract_strided_slice %307 {offsets = [0, 72], sizes = [8, 8], strides = [1, 1]} : vector<16x96xf32> to vector<8x8xf32>
    %cst_153 = arith.constant dense<0.000000e+00> : vector<8x8xf32>
    %328 = tpu.matmul %325, %326, %cst_153 {dimension_numbers = #tpu.dot_dimension_numbers<[1], [1], [0], [0], [0, 0, 1, 0], [], []>} : vector<8x8xf32>, vector<8x8xf32>, vector<8x8xf32> -> vector<8x8xf32>
    %cst_154 = arith.constant 0.353553385 : f32
    %329 = vector.broadcast %cst_154 : f32 to vector<8x8xf32>
    %330 = arith.mulf %328, %329 : vector<8x8xf32>
    %cst_155 = arith.constant dense<0xFF800000> : vector<8xf32>
    %331 = vector.multi_reduction <maximumf>, %330, %cst_155 [1] : vector<8x8xf32> to vector<8xf32>
    %332 = vector.shape_cast %331 : vector<8xf32> to vector<8x1xf32>
    %333 = vector.broadcast %332 : vector<8x1xf32> to vector<8x8xf32>
    %334 = arith.subf %330, %333 : vector<8x8xf32>
    %335 = math.exp %334 : vector<8x8xf32>
    %cst_156 = arith.constant dense<0.000000e+00> : vector<8xf32>
    %336 = vector.multi_reduction <add>, %335, %cst_156 [1] : vector<8x8xf32> to vector<8xf32>
    %337 = vector.shape_cast %336 : vector<8xf32> to vector<8x1xf32>
    %338 = tpu.reciprocal %337 : vector<8x1xf32> -> vector<8x1xf32>
    %339 = vector.broadcast %338 : vector<8x1xf32> to vector<8x8xf32>
    %340 = arith.mulf %335, %339 : vector<8x8xf32>
    %cst_157 = arith.constant dense<0.000000e+00> : vector<8x8xf32>
    %341 = tpu.matmul %340, %327, %cst_157 {dimension_numbers = #tpu.dot_dimension_numbers<[1], [0], [0], [1], [0, 0, 1, 1], [], []>} : vector<8x8xf32>, vector<8x8xf32>, vector<8x8xf32> -> vector<8x8xf32>
    %342 = vector.extract_strided_slice %307 {offsets = [0, 16], sizes = [8, 8], strides = [1, 1]} : vector<16x96xf32> to vector<8x8xf32>
    %343 = vector.extract_strided_slice %307 {offsets = [0, 48], sizes = [8, 8], strides = [1, 1]} : vector<16x96xf32> to vector<8x8xf32>
    %344 = vector.extract_strided_slice %307 {offsets = [0, 80], sizes = [8, 8], strides = [1, 1]} : vector<16x96xf32> to vector<8x8xf32>
    %cst_158 = arith.constant dense<0.000000e+00> : vector<8x8xf32>
    %345 = tpu.matmul %342, %343, %cst_158 {dimension_numbers = #tpu.dot_dimension_numbers<[1], [1], [0], [0], [0, 0, 1, 0], [], []>} : vector<8x8xf32>, vector<8x8xf32>, vector<8x8xf32> -> vector<8x8xf32>
    %cst_159 = arith.constant 0.353553385 : f32
    %346 = vector.broadcast %cst_159 : f32 to vector<8x8xf32>
    %347 = arith.mulf %345, %346 : vector<8x8xf32>
    %cst_160 = arith.constant dense<0xFF800000> : vector<8xf32>
    %348 = vector.multi_reduction <maximumf>, %347, %cst_160 [1] : vector<8x8xf32> to vector<8xf32>
    %349 = vector.shape_cast %348 : vector<8xf32> to vector<8x1xf32>
    %350 = vector.broadcast %349 : vector<8x1xf32> to vector<8x8xf32>
    %351 = arith.subf %347, %350 : vector<8x8xf32>
    %352 = math.exp %351 : vector<8x8xf32>
    %cst_161 = arith.constant dense<0.000000e+00> : vector<8xf32>
    %353 = vector.multi_reduction <add>, %352, %cst_161 [1] : vector<8x8xf32> to vector<8xf32>
    %354 = vector.shape_cast %353 : vector<8xf32> to vector<8x1xf32>
    %355 = tpu.reciprocal %354 : vector<8x1xf32> -> vector<8x1xf32>
    %356 = vector.broadcast %355 : vector<8x1xf32> to vector<8x8xf32>
    %357 = arith.mulf %352, %356 : vector<8x8xf32>
    %cst_162 = arith.constant dense<0.000000e+00> : vector<8x8xf32>
    %358 = tpu.matmul %357, %344, %cst_162 {dimension_numbers = #tpu.dot_dimension_numbers<[1], [0], [0], [1], [0, 0, 1, 1], [], []>} : vector<8x8xf32>, vector<8x8xf32>, vector<8x8xf32> -> vector<8x8xf32>
    %359 = vector.extract_strided_slice %307 {offsets = [0, 24], sizes = [8, 8], strides = [1, 1]} : vector<16x96xf32> to vector<8x8xf32>
    %360 = vector.extract_strided_slice %307 {offsets = [0, 56], sizes = [8, 8], strides = [1, 1]} : vector<16x96xf32> to vector<8x8xf32>
    %361 = vector.extract_strided_slice %307 {offsets = [0, 88], sizes = [8, 8], strides = [1, 1]} : vector<16x96xf32> to vector<8x8xf32>
    %cst_163 = arith.constant dense<0.000000e+00> : vector<8x8xf32>
    %362 = tpu.matmul %359, %360, %cst_163 {dimension_numbers = #tpu.dot_dimension_numbers<[1], [1], [0], [0], [0, 0, 1, 0], [], []>} : vector<8x8xf32>, vector<8x8xf32>, vector<8x8xf32> -> vector<8x8xf32>
    %cst_164 = arith.constant 0.353553385 : f32
    %363 = vector.broadcast %cst_164 : f32 to vector<8x8xf32>
    %364 = arith.mulf %362, %363 : vector<8x8xf32>
    %cst_165 = arith.constant dense<0xFF800000> : vector<8xf32>
    %365 = vector.multi_reduction <maximumf>, %364, %cst_165 [1] : vector<8x8xf32> to vector<8xf32>
    %366 = vector.shape_cast %365 : vector<8xf32> to vector<8x1xf32>
    %367 = vector.broadcast %366 : vector<8x1xf32> to vector<8x8xf32>
    %368 = arith.subf %364, %367 : vector<8x8xf32>
    %369 = math.exp %368 : vector<8x8xf32>
    %cst_166 = arith.constant dense<0.000000e+00> : vector<8xf32>
    %370 = vector.multi_reduction <add>, %369, %cst_166 [1] : vector<8x8xf32> to vector<8xf32>
    %371 = vector.shape_cast %370 : vector<8xf32> to vector<8x1xf32>
    %372 = tpu.reciprocal %371 : vector<8x1xf32> -> vector<8x1xf32>
    %373 = vector.broadcast %372 : vector<8x1xf32> to vector<8x8xf32>
    %374 = arith.mulf %369, %373 : vector<8x8xf32>
    %cst_167 = arith.constant dense<0.000000e+00> : vector<8x8xf32>
    %375 = tpu.matmul %374, %361, %cst_167 {dimension_numbers = #tpu.dot_dimension_numbers<[1], [0], [0], [1], [0, 0, 1, 1], [], []>} : vector<8x8xf32>, vector<8x8xf32>, vector<8x8xf32> -> vector<8x8xf32>
    %376 = tpu.concatenate %324, %341, %358, %375 in 1 : vector<8x8xf32>, vector<8x8xf32>, vector<8x8xf32>, vector<8x8xf32> -> vector<8x32xf32>
    %377 = vector.extract_strided_slice %307 {offsets = [8, 0], sizes = [8, 8], strides = [1, 1]} : vector<16x96xf32> to vector<8x8xf32>
    %378 = vector.extract_strided_slice %307 {offsets = [8, 32], sizes = [8, 8], strides = [1, 1]} : vector<16x96xf32> to vector<8x8xf32>
    %379 = vector.extract_strided_slice %307 {offsets = [8, 64], sizes = [8, 8], strides = [1, 1]} : vector<16x96xf32> to vector<8x8xf32>
    %cst_168 = arith.constant dense<0.000000e+00> : vector<8x8xf32>
    %380 = tpu.matmul %377, %378, %cst_168 {dimension_numbers = #tpu.dot_dimension_numbers<[1], [1], [0], [0], [0, 0, 1, 0], [], []>} : vector<8x8xf32>, vector<8x8xf32>, vector<8x8xf32> -> vector<8x8xf32>
    %cst_169 = arith.constant 0.353553385 : f32
    %381 = vector.broadcast %cst_169 : f32 to vector<8x8xf32>
    %382 = arith.mulf %380, %381 : vector<8x8xf32>
    %cst_170 = arith.constant dense<0xFF800000> : vector<8xf32>
    %383 = vector.multi_reduction <maximumf>, %382, %cst_170 [1] : vector<8x8xf32> to vector<8xf32>
    %384 = vector.shape_cast %383 : vector<8xf32> to vector<8x1xf32>
    %385 = vector.broadcast %384 : vector<8x1xf32> to vector<8x8xf32>
    %386 = arith.subf %382, %385 : vector<8x8xf32>
    %387 = math.exp %386 : vector<8x8xf32>
    %cst_171 = arith.constant dense<0.000000e+00> : vector<8xf32>
    %388 = vector.multi_reduction <add>, %387, %cst_171 [1] : vector<8x8xf32> to vector<8xf32>
    %389 = vector.shape_cast %388 : vector<8xf32> to vector<8x1xf32>
    %390 = tpu.reciprocal %389 : vector<8x1xf32> -> vector<8x1xf32>
    %391 = vector.broadcast %390 : vector<8x1xf32> to vector<8x8xf32>
    %392 = arith.mulf %387, %391 : vector<8x8xf32>
    %cst_172 = arith.constant dense<0.000000e+00> : vector<8x8xf32>
    %393 = tpu.matmul %392, %379, %cst_172 {dimension_numbers = #tpu.dot_dimension_numbers<[1], [0], [0], [1], [0, 0, 1, 1], [], []>} : vector<8x8xf32>, vector<8x8xf32>, vector<8x8xf32> -> vector<8x8xf32>
    %394 = vector.extract_strided_slice %307 {offsets = [8, 8], sizes = [8, 8], strides = [1, 1]} : vector<16x96xf32> to vector<8x8xf32>
    %395 = vector.extract_strided_slice %307 {offsets = [8, 40], sizes = [8, 8], strides = [1, 1]} : vector<16x96xf32> to vector<8x8xf32>
    %396 = vector.extract_strided_slice %307 {offsets = [8, 72], sizes = [8, 8], strides = [1, 1]} : vector<16x96xf32> to vector<8x8xf32>
    %cst_173 = arith.constant dense<0.000000e+00> : vector<8x8xf32>
    %397 = tpu.matmul %394, %395, %cst_173 {dimension_numbers = #tpu.dot_dimension_numbers<[1], [1], [0], [0], [0, 0, 1, 0], [], []>} : vector<8x8xf32>, vector<8x8xf32>, vector<8x8xf32> -> vector<8x8xf32>
    %cst_174 = arith.constant 0.353553385 : f32
    %398 = vector.broadcast %cst_174 : f32 to vector<8x8xf32>
    %399 = arith.mulf %397, %398 : vector<8x8xf32>
    %cst_175 = arith.constant dense<0xFF800000> : vector<8xf32>
    %400 = vector.multi_reduction <maximumf>, %399, %cst_175 [1] : vector<8x8xf32> to vector<8xf32>
    %401 = vector.shape_cast %400 : vector<8xf32> to vector<8x1xf32>
    %402 = vector.broadcast %401 : vector<8x1xf32> to vector<8x8xf32>
    %403 = arith.subf %399, %402 : vector<8x8xf32>
    %404 = math.exp %403 : vector<8x8xf32>
    %cst_176 = arith.constant dense<0.000000e+00> : vector<8xf32>
    %405 = vector.multi_reduction <add>, %404, %cst_176 [1] : vector<8x8xf32> to vector<8xf32>
    %406 = vector.shape_cast %405 : vector<8xf32> to vector<8x1xf32>
    %407 = tpu.reciprocal %406 : vector<8x1xf32> -> vector<8x1xf32>
    %408 = vector.broadcast %407 : vector<8x1xf32> to vector<8x8xf32>
    %409 = arith.mulf %404, %408 : vector<8x8xf32>
    %cst_177 = arith.constant dense<0.000000e+00> : vector<8x8xf32>
    %410 = tpu.matmul %409, %396, %cst_177 {dimension_numbers = #tpu.dot_dimension_numbers<[1], [0], [0], [1], [0, 0, 1, 1], [], []>} : vector<8x8xf32>, vector<8x8xf32>, vector<8x8xf32> -> vector<8x8xf32>
    %411 = vector.extract_strided_slice %307 {offsets = [8, 16], sizes = [8, 8], strides = [1, 1]} : vector<16x96xf32> to vector<8x8xf32>
    %412 = vector.extract_strided_slice %307 {offsets = [8, 48], sizes = [8, 8], strides = [1, 1]} : vector<16x96xf32> to vector<8x8xf32>
    %413 = vector.extract_strided_slice %307 {offsets = [8, 80], sizes = [8, 8], strides = [1, 1]} : vector<16x96xf32> to vector<8x8xf32>
    %cst_178 = arith.constant dense<0.000000e+00> : vector<8x8xf32>
    %414 = tpu.matmul %411, %412, %cst_178 {dimension_numbers = #tpu.dot_dimension_numbers<[1], [1], [0], [0], [0, 0, 1, 0], [], []>} : vector<8x8xf32>, vector<8x8xf32>, vector<8x8xf32> -> vector<8x8xf32>
    %cst_179 = arith.constant 0.353553385 : f32
    %415 = vector.broadcast %cst_179 : f32 to vector<8x8xf32>
    %416 = arith.mulf %414, %415 : vector<8x8xf32>
    %cst_180 = arith.constant dense<0xFF800000> : vector<8xf32>
    %417 = vector.multi_reduction <maximumf>, %416, %cst_180 [1] : vector<8x8xf32> to vector<8xf32>
    %418 = vector.shape_cast %417 : vector<8xf32> to vector<8x1xf32>
    %419 = vector.broadcast %418 : vector<8x1xf32> to vector<8x8xf32>
    %420 = arith.subf %416, %419 : vector<8x8xf32>
    %421 = math.exp %420 : vector<8x8xf32>
    %cst_181 = arith.constant dense<0.000000e+00> : vector<8xf32>
    %422 = vector.multi_reduction <add>, %421, %cst_181 [1] : vector<8x8xf32> to vector<8xf32>
    %423 = vector.shape_cast %422 : vector<8xf32> to vector<8x1xf32>
    %424 = tpu.reciprocal %423 : vector<8x1xf32> -> vector<8x1xf32>
    %425 = vector.broadcast %424 : vector<8x1xf32> to vector<8x8xf32>
    %426 = arith.mulf %421, %425 : vector<8x8xf32>
    %cst_182 = arith.constant dense<0.000000e+00> : vector<8x8xf32>
    %427 = tpu.matmul %426, %413, %cst_182 {dimension_numbers = #tpu.dot_dimension_numbers<[1], [0], [0], [1], [0, 0, 1, 1], [], []>} : vector<8x8xf32>, vector<8x8xf32>, vector<8x8xf32> -> vector<8x8xf32>
    %428 = vector.extract_strided_slice %307 {offsets = [8, 24], sizes = [8, 8], strides = [1, 1]} : vector<16x96xf32> to vector<8x8xf32>
    %429 = vector.extract_strided_slice %307 {offsets = [8, 56], sizes = [8, 8], strides = [1, 1]} : vector<16x96xf32> to vector<8x8xf32>
    %430 = vector.extract_strided_slice %307 {offsets = [8, 88], sizes = [8, 8], strides = [1, 1]} : vector<16x96xf32> to vector<8x8xf32>
    %cst_183 = arith.constant dense<0.000000e+00> : vector<8x8xf32>
    %431 = tpu.matmul %428, %429, %cst_183 {dimension_numbers = #tpu.dot_dimension_numbers<[1], [1], [0], [0], [0, 0, 1, 0], [], []>} : vector<8x8xf32>, vector<8x8xf32>, vector<8x8xf32> -> vector<8x8xf32>
    %cst_184 = arith.constant 0.353553385 : f32
    %432 = vector.broadcast %cst_184 : f32 to vector<8x8xf32>
    %433 = arith.mulf %431, %432 : vector<8x8xf32>
    %cst_185 = arith.constant dense<0xFF800000> : vector<8xf32>
    %434 = vector.multi_reduction <maximumf>, %433, %cst_185 [1] : vector<8x8xf32> to vector<8xf32>
    %435 = vector.shape_cast %434 : vector<8xf32> to vector<8x1xf32>
    %436 = vector.broadcast %435 : vector<8x1xf32> to vector<8x8xf32>
    %437 = arith.subf %433, %436 : vector<8x8xf32>
    %438 = math.exp %437 : vector<8x8xf32>
    %cst_186 = arith.constant dense<0.000000e+00> : vector<8xf32>
    %439 = vector.multi_reduction <add>, %438, %cst_186 [1] : vector<8x8xf32> to vector<8xf32>
    %440 = vector.shape_cast %439 : vector<8xf32> to vector<8x1xf32>
    %441 = tpu.reciprocal %440 : vector<8x1xf32> -> vector<8x1xf32>
    %442 = vector.broadcast %441 : vector<8x1xf32> to vector<8x8xf32>
    %443 = arith.mulf %438, %442 : vector<8x8xf32>
    %cst_187 = arith.constant dense<0.000000e+00> : vector<8x8xf32>
    %444 = tpu.matmul %443, %430, %cst_187 {dimension_numbers = #tpu.dot_dimension_numbers<[1], [0], [0], [1], [0, 0, 1, 1], [], []>} : vector<8x8xf32>, vector<8x8xf32>, vector<8x8xf32> -> vector<8x8xf32>
    %445 = tpu.concatenate %393, %410, %427, %444 in 1 : vector<8x8xf32>, vector<8x8xf32>, vector<8x8xf32>, vector<8x8xf32> -> vector<8x32xf32>
    %446 = tpu.concatenate %376, %445 in 0 : vector<8x32xf32>, vector<8x32xf32> -> vector<16x32xf32>
    %cst_188 = arith.constant dense<0.000000e+00> : vector<16x32xf32>
    %447 = tpu.matmul %446, %22, %cst_188 {dimension_numbers = #tpu.dot_dimension_numbers<[1], [0], [0], [1], [0, 0, 1, 1], [], []>} : vector<16x32xf32>, vector<32x32xf32>, vector<16x32xf32> -> vector<16x32xf32>
    %448 = vector.broadcast %23 : vector<1x32xf32> to vector<16x32xf32>
    %449 = arith.addf %447, %448 : vector<16x32xf32>
    %450 = arith.addf %304, %449 : vector<16x32xf32>
    %cst_189 = arith.constant dense<0.000000e+00> : vector<16xf32>
    %451 = vector.multi_reduction <add>, %450, %cst_189 [1] : vector<16x32xf32> to vector<16xf32>
    %452 = vector.shape_cast %451 : vector<16xf32> to vector<16x1xf32>
    %cst_190 = arith.constant 3.200000e+01 : f32
    %453 = vector.broadcast %cst_190 : f32 to vector<16x1xf32>
    %454 = arith.divf %452, %453 : vector<16x1xf32>
    %455 = vector.broadcast %454 : vector<16x1xf32> to vector<16x32xf32>
    %456 = arith.subf %450, %455 : vector<16x32xf32>
    %457 = arith.mulf %456, %456 : vector<16x32xf32>
    %cst_191 = arith.constant dense<0.000000e+00> : vector<16xf32>
    %458 = vector.multi_reduction <add>, %457, %cst_191 [1] : vector<16x32xf32> to vector<16xf32>
    %459 = vector.shape_cast %458 : vector<16xf32> to vector<16x1xf32>
    %cst_192 = arith.constant 3.200000e+01 : f32
    %460 = vector.broadcast %cst_192 : f32 to vector<16x1xf32>
    %461 = arith.divf %459, %460 : vector<16x1xf32>
    %462 = vector.broadcast %454 : vector<16x1xf32> to vector<16x32xf32>
    %463 = arith.subf %450, %462 : vector<16x32xf32>
    %cst_193 = arith.constant 9.99999974E-6 : f32
    %464 = vector.broadcast %cst_193 : f32 to vector<16x1xf32>
    %465 = arith.addf %461, %464 : vector<16x1xf32>
    %466 = math.rsqrt %465 : vector<16x1xf32>
    %467 = vector.broadcast %466 : vector<16x1xf32> to vector<16x32xf32>
    %468 = arith.mulf %463, %467 : vector<16x32xf32>
    %469 = vector.broadcast %24 : vector<1x32xf32> to vector<16x32xf32>
    %470 = arith.mulf %468, %469 : vector<16x32xf32>
    %471 = vector.broadcast %25 : vector<1x32xf32> to vector<16x32xf32>
    %472 = arith.addf %470, %471 : vector<16x32xf32>
    %cst_194 = arith.constant dense<0.000000e+00> : vector<16x64xf32>
    %473 = tpu.matmul %472, %26, %cst_194 {dimension_numbers = #tpu.dot_dimension_numbers<[1], [0], [0], [1], [0, 0, 1, 1], [], []>} : vector<16x32xf32>, vector<32x64xf32>, vector<16x64xf32> -> vector<16x64xf32>
    %474 = vector.broadcast %27 : vector<1x64xf32> to vector<16x64xf32>
    %475 = arith.addf %473, %474 : vector<16x64xf32>
    %cst_195 = arith.constant 0.000000e+00 : f32
    %476 = vector.broadcast %cst_195 : f32 to vector<16x64xf32>
    %477 = arith.maximumf %475, %476 : vector<16x64xf32>
    %cst_196 = arith.constant dense<0.000000e+00> : vector<16x32xf32>
    %478 = tpu.matmul %477, %28, %cst_196 {dimension_numbers = #tpu.dot_dimension_numbers<[1], [0], [0], [1], [0, 0, 1, 1], [], []>} : vector<16x64xf32>, vector<64x32xf32>, vector<16x32xf32> -> vector<16x32xf32>
    %479 = vector.broadcast %29 : vector<1x32xf32> to vector<16x32xf32>
    %480 = arith.addf %478, %479 : vector<16x32xf32>
    %481 = arith.addf %472, %480 : vector<16x32xf32>
    %cst_197 = arith.constant dense<0.000000e+00> : vector<16xf32>
    %482 = vector.multi_reduction <add>, %481, %cst_197 [1] : vector<16x32xf32> to vector<16xf32>
    %483 = vector.shape_cast %482 : vector<16xf32> to vector<16x1xf32>
    %cst_198 = arith.constant 3.200000e+01 : f32
    %484 = vector.broadcast %cst_198 : f32 to vector<16x1xf32>
    %485 = arith.divf %483, %484 : vector<16x1xf32>
    %486 = vector.broadcast %485 : vector<16x1xf32> to vector<16x32xf32>
    %487 = arith.subf %481, %486 : vector<16x32xf32>
    %488 = arith.mulf %487, %487 : vector<16x32xf32>
    %cst_199 = arith.constant dense<0.000000e+00> : vector<16xf32>
    %489 = vector.multi_reduction <add>, %488, %cst_199 [1] : vector<16x32xf32> to vector<16xf32>
    %490 = vector.shape_cast %489 : vector<16xf32> to vector<16x1xf32>
    %cst_200 = arith.constant 3.200000e+01 : f32
    %491 = vector.broadcast %cst_200 : f32 to vector<16x1xf32>
    %492 = arith.divf %490, %491 : vector<16x1xf32>
    %493 = vector.broadcast %485 : vector<16x1xf32> to vector<16x32xf32>
    %494 = arith.subf %481, %493 : vector<16x32xf32>
    %cst_201 = arith.constant 9.99999974E-6 : f32
    %495 = vector.broadcast %cst_201 : f32 to vector<16x1xf32>
    %496 = arith.addf %492, %495 : vector<16x1xf32>
    %497 = math.rsqrt %496 : vector<16x1xf32>
    %498 = vector.broadcast %497 : vector<16x1xf32> to vector<16x32xf32>
    %499 = arith.mulf %494, %498 : vector<16x32xf32>
    %500 = vector.broadcast %30 : vector<1x32xf32> to vector<16x32xf32>
    %501 = arith.mulf %499, %500 : vector<16x32xf32>
    %502 = vector.broadcast %31 : vector<1x32xf32> to vector<16x32xf32>
    %503 = arith.addf %501, %502 : vector<16x32xf32>
    %504 = vector.extract_strided_slice %503 {offsets = [0, 0], sizes = [8, 32], strides = [1, 1]} : vector<16x32xf32> to vector<8x32xf32>
    %cst_202 = arith.constant dense<0.000000e+00> : vector<32xf32>
    %505 = vector.multi_reduction <add>, %504, %cst_202 [0] : vector<8x32xf32> to vector<32xf32>
    %506 = vector.shape_cast %505 : vector<32xf32> to vector<1x32xf32>
    %cst_203 = arith.constant 8.000000e+00 : f32
    %507 = vector.broadcast %cst_203 : f32 to vector<1x32xf32>
    %508 = arith.divf %506, %507 : vector<1x32xf32>
    %509 = vector.extract_strided_slice %503 {offsets = [8, 0], sizes = [8, 32], strides = [1, 1]} : vector<16x32xf32> to vector<8x32xf32>
    %cst_204 = arith.constant dense<0.000000e+00> : vector<32xf32>
    %510 = vector.multi_reduction <add>, %509, %cst_204 [0] : vector<8x32xf32> to vector<32xf32>
    %511 = vector.shape_cast %510 : vector<32xf32> to vector<1x32xf32>
    %cst_205 = arith.constant 8.000000e+00 : f32
    %512 = vector.broadcast %cst_205 : f32 to vector<1x32xf32>
    %513 = arith.divf %511, %512 : vector<1x32xf32>
    %514 = tpu.concatenate %508, %513 in 0 : vector<1x32xf32>, vector<1x32xf32> -> vector<2x32xf32>
    %cst_206 = arith.constant dense<0.000000e+00> : vector<2x64xf32>
    %515 = tpu.matmul %514, %32, %cst_206 {dimension_numbers = #tpu.dot_dimension_numbers<[1], [0], [0], [1], [0, 0, 1, 1], [], []>} : vector<2x32xf32>, vector<32x64xf32>, vector<2x64xf32> -> vector<2x64xf32>
    %516 = vector.broadcast %33 : vector<1x64xf32> to vector<2x64xf32>
    %517 = arith.addf %515, %516 : vector<2x64xf32>
    %cst_207 = arith.constant 0.707106769 : f32
    %518 = vector.broadcast %cst_207 : f32 to vector<2x64xf32>
    %519 = arith.mulf %517, %518 : vector<2x64xf32>
    %520 = math.absf %519 : vector<2x64xf32>
    %cst_208 = arith.constant 0.327591091 : f32
    %521 = vector.broadcast %cst_208 : f32 to vector<2x64xf32>
    %522 = arith.mulf %521, %520 : vector<2x64xf32>
    %cst_209 = arith.constant 1.000000e+00 : f32
    %523 = vector.broadcast %cst_209 : f32 to vector<2x64xf32>
    %524 = arith.addf %523, %522 : vector<2x64xf32>
    %cst_210 = arith.constant 1.000000e+00 : f32
    %525 = vector.broadcast %cst_210 : f32 to vector<2x64xf32>
    %526 = arith.divf %525, %524 : vector<2x64xf32>
    %cst_211 = arith.constant 1.06140542 : f32
    %527 = vector.broadcast %cst_211 : f32 to vector<2x64xf32>
    %528 = arith.mulf %526, %527 : vector<2x64xf32>
    %cst_212 = arith.constant -1.45315206 : f32
    %529 = vector.broadcast %cst_212 : f32 to vector<2x64xf32>
    %530 = arith.addf %529, %528 : vector<2x64xf32>
    %531 = arith.mulf %526, %530 : vector<2x64xf32>
    %cst_213 = arith.constant 1.42141378 : f32
    %532 = vector.broadcast %cst_213 : f32 to vector<2x64xf32>
    %533 = arith.addf %532, %531 : vector<2x64xf32>
    %534 = arith.mulf %526, %533 : vector<2x64xf32>
    %cst_214 = arith.constant -0.284496725 : f32
    %535 = vector.broadcast %cst_214 : f32 to vector<2x64xf32>
    %536 = arith.addf %535, %534 : vector<2x64xf32>
    %537 = arith.mulf %526, %536 : vector<2x64xf32>
    %cst_215 = arith.constant 0.254829586 : f32
    %538 = vector.broadcast %cst_215 : f32 to vector<2x64xf32>
    %539 = arith.addf %538, %537 : vector<2x64xf32>
    %540 = arith.mulf %526, %539 : vector<2x64xf32>
    %cst_216 = arith.constant 0.000000e+00 : f32
    %541 = vector.broadcast %cst_216 : f32 to vector<2x64xf32>
    %542 = arith.subf %541, %520 : vector<2x64xf32>
    %543 = arith.mulf %542, %520 : vector<2x64xf32>
    %544 = math.exp %543 : vector<2x64xf32>
    %545 = arith.mulf %540, %544 : vector<2x64xf32>
    %cst_217 = arith.constant 1.000000e+00 : f32
    %546 = vector.broadcast %cst_217 : f32 to vector<2x64xf32>
    %547 = arith.subf %546, %545 : vector<2x64xf32>
    %cst_218 = arith.constant 0.000000e+00 : f32
    %548 = vector.broadcast %cst_218 : f32 to vector<2x64xf32>
    %549 = arith.cmpf olt, %519, %548 : vector<2x64xf32>
    %cst_219 = arith.constant 0.000000e+00 : f32
    %550 = vector.broadcast %cst_219 : f32 to vector<2x64xf32>
    %551 = arith.subf %550, %547 : vector<2x64xf32>
    %552 = arith.select %549, %551, %547 : vector<2x64xi1>, vector<2x64xf32>
    %cst_220 = arith.constant 5.000000e-01 : f32
    %553 = vector.broadcast %cst_220 : f32 to vector<2x64xf32>
    %554 = arith.mulf %553, %517 : vector<2x64xf32>
    %cst_221 = arith.constant 1.000000e+00 : f32
    %555 = vector.broadcast %cst_221 : f32 to vector<2x64xf32>
    %556 = arith.addf %555, %552 : vector<2x64xf32>
    %557 = arith.mulf %554, %556 : vector<2x64xf32>
    %cst_222 = arith.constant dense<0.000000e+00> : vector<2x128xf32>
    %558 = tpu.matmul %557, %34, %cst_222 {dimension_numbers = #tpu.dot_dimension_numbers<[1], [0], [0], [1], [0, 0, 1, 1], [], []>} : vector<2x64xf32>, vector<64x128xf32>, vector<2x128xf32> -> vector<2x128xf32>
    %559 = vector.broadcast %35 : vector<1x128xf32> to vector<2x128xf32>
    %560 = arith.addf %558, %559 : vector<2x128xf32>
    %c0_223 = arith.constant 0 : index
    %c0_224 = arith.constant 0 : index
    %561 = vector.load %arg36[%c0_223, %c0_224] : memref<2x128xf32, #tpu.memory_space<vmem>>, vector<2x128xf32>
    tpu.vector_store %arg36[%c0_223, %c0_224], %560 {strides = array<i32>} : memref<2x128xf32, #tpu.memory_space<vmem>>, vector<2x128xf32>,
    return
  }
}

</mosaic_0001>

<llo_original>
// kernel: transformer_forward.1
$region0: #{transformer_forward.1}
  #allocation0 [shape = 'u32[]', space=smem, size = 0x4, offset = 0x4, fixed_abs, tag = 'smem constant byte address 0x4 - core index']
  #allocation1 [shape = 'u32[72,128]{1,0:T(1,128)}', space=vmem, size = 0x9000, scoped, tag = 'internal scratch']
  %s0 = inlined_call_operand.smem [shape: u32[37], index: -1, kind: input, shape index: {}]
  %s1 = sld [smem:[%s0]]
  %s2 = scalar_lea.smem %s0, 1
  %s3 = sld [smem:[%s2]]
  %s4 = scalar_lea.smem %s0, 2
  %s5 = sld [smem:[%s4]]
  %s6 = scalar_lea.smem %s0, 3
  %s7 = sld [smem:[%s6]]
  %s8 = scalar_lea.smem %s0, 4
  %s9 = sld [smem:[%s8]]
  %s10 = scalar_lea.smem %s0, 5
  %s11 = sld [smem:[%s10]]
  %s12 = scalar_lea.smem %s0, 6
  %s13 = sld [smem:[%s12]]
  %s14 = scalar_lea.smem %s0, 7
  %s15 = sld [smem:[%s14]]
  %s16 = scalar_lea.smem %s0, 8
  %s17 = sld [smem:[%s16]]
  %s18 = scalar_lea.smem %s0, 9
  %s19 = sld [smem:[%s18]]
  %s20 = scalar_lea.smem %s0, 10
  %s21 = sld [smem:[%s20]]
  %s22 = scalar_lea.smem %s0, 11
  %s23 = sld [smem:[%s22]]
  %s24 = scalar_lea.smem %s0, 12
  %s25 = sld [smem:[%s24]]
  %s26 = scalar_lea.smem %s0, 13
  %s27 = sld [smem:[%s26]]
  %s28 = scalar_lea.smem %s0, 14
  %s29 = sld [smem:[%s28]]
  %s30 = scalar_lea.smem %s0, 15
  %s31 = sld [smem:[%s30]]
  %s32 = scalar_lea.smem %s0, 16
  %s33 = sld [smem:[%s32]]
  %s34 = scalar_lea.smem %s0, 17
  %s35 = sld [smem:[%s34]]
  %s36 = scalar_lea.smem %s0, 18
  %s37 = sld [smem:[%s36]]
  %s38 = scalar_lea.smem %s0, 19
  %s39 = sld [smem:[%s38]]
  %s40 = scalar_lea.smem %s0, 20
  %s41 = sld [smem:[%s40]]
  %s42 = scalar_lea.smem %s0, 21
  %s43 = sld [smem:[%s42]]
  %s44 = scalar_lea.smem %s0, 22
  %s45 = sld [smem:[%s44]]
  %s46 = scalar_lea.smem %s0, 23
  %s47 = sld [smem:[%s46]]
  %s48 = scalar_lea.smem %s0, 24
  %s49 = sld [smem:[%s48]]
  %s50 = scalar_lea.smem %s0, 25
  %s51 = sld [smem:[%s50]]
  %s52 = scalar_lea.smem %s0, 26
  %s53 = sld [smem:[%s52]]
  %s54 = scalar_lea.smem %s0, 27
  %s55 = sld [smem:[%s54]]
  %s56 = scalar_lea.smem %s0, 28
  %s57 = sld [smem:[%s56]]
  %s58 = scalar_lea.smem %s0, 29
  %s59 = sld [smem:[%s58]]
  %s60 = scalar_lea.smem %s0, 30
  %s61 = sld [smem:[%s60]]
  %s62 = scalar_lea.smem %s0, 31
  %s63 = sld [smem:[%s62]]
  %s64 = scalar_lea.smem %s0, 32
  %s65 = sld [smem:[%s64]]
  %s66 = scalar_lea.smem %s0, 33
  %s67 = sld [smem:[%s66]]
  %s68 = scalar_lea.smem %s0, 34
  %s69 = sld [smem:[%s68]]
  %s70 = scalar_lea.smem %s0, 35
  %s71 = sld [smem:[%s70]]
  %s72 = scalar_lea.smem %s0, 36
  %s73 = sld [smem:[%s72]]
  %s74 = sld [smem:[#allocation0]]
  $region250: #{transformer_forward.1} parent=0
    _
  %s76 = ssub.s32 1, %s74
  %s77 = scalar_select 0, %s76, %s74
  $region1: #{transformer_forward.1} parent=0
    #allocation2 [shape = 'u8[2048]{0}', space=vmem, size = 0x800, scoped, tag = 'input window, operand 1, single buffered']
    #allocation3 [shape = 's32[1]{0}', space=sflag, size = 0x4, scoped, tag = 'scoped memory for transformer_forward.1']
    #allocation4 [shape = 's32[1]{0}', space=sflag, size = 0x4, scoped, tag = 'scoped memory for transformer_forward.1']
    #allocation5 [shape = 'u8[4096]{0}', space=vmem, size = 0x1000, scoped, tag = 'input window, operand 3, single buffered']
    #allocation6 [shape = 's32[1]{0}', space=sflag, size = 0x4, scoped, tag = 'scoped memory for transformer_forward.1']
    #allocation7 [shape = 'u8[512]{0}', space=vmem, size = 0x400, scoped, tag = 'input window, operand 9, single buffered']
    #allocation8 [shape = 'u8[512]{0}', space=vmem, size = 0x400, scoped, tag = 'input window, operand 11, single buffered']
    #allocation9 [shape = 's32[1]{0}', space=sflag, size = 0x4, scoped, tag = 'scoped memory for transformer_forward.1']
    #allocation10 [shape = 'u8[512]{0}', space=vmem, size = 0x400, scoped, tag = 'input window, operand 12, single buffered']
    #allocation11 [shape = 'u8[512]{0}', space=vmem, size = 0x400, scoped, tag = 'input window, operand 13, single buffered']
    #allocation12 [shape = 's32[1]{0}', space=sflag, size = 0x4, scoped, tag = 'scoped memory for transformer_forward.1']
    #allocation13 [shape = 'u8[16384]{0}', space=vmem, size = 0x4000, scoped, tag = 'input window, operand 14, single buffered']
    #allocation14 [shape = 'u8[512]{0}', space=vmem, size = 0x400, scoped, tag = 'input window, operand 15, single buffered']
    #allocation15 [shape = 's32[1]{0}', space=sflag, size = 0x4, scoped, tag = 'scoped memory for transformer_forward.1']
    #allocation16 [shape = 'u8[512]{0}', space=vmem, size = 0x400, scoped, tag = 'input window, operand 17, single buffered']
    #allocation17 [shape = 'u8[512]{0}', space=vmem, size = 0x400, scoped, tag = 'input window, operand 18, single buffered']
    #allocation18 [shape = 's32[1]{0}', space=sflag, size = 0x4, scoped, tag = 'scoped memory for transformer_forward.1']
    #allocation19 [shape = 'u8[512]{0}', space=vmem, size = 0x400, scoped, tag = 'input window, operand 19, single buffered']
    #allocation20 [shape = 'u8[512]{0}', space=vmem, size = 0x400, scoped, tag = 'input window, operand 21, single buffered']
    #allocation21 [shape = 's32[1]{0}', space=sflag, size = 0x4, scoped, tag = 'scoped memory for transformer_forward.1']
    #allocation22 [shape = 'u8[16384]{0}', space=vmem, size = 0x4000, scoped, tag = 'input window, operand 22, single buffered']
    #allocation23 [shape = 'u8[512]{0}', space=vmem, size = 0x400, scoped, tag = 'input window, operand 23, single buffered']
    #allocation24 [shape = 's32[1]{0}', space=sflag, size = 0x4, scoped, tag = 'scoped memory for transformer_forward.1']
    #allocation25 [shape = 'u8[512]{0}', space=vmem, size = 0x400, scoped, tag = 'input window, operand 24, single buffered']
    #allocation26 [shape = 'u8[512]{0}', space=vmem, size = 0x400, scoped, tag = 'input window, operand 25, single buffered']
    #allocation27 [shape = 's32[1]{0}', space=sflag, size = 0x4, scoped, tag = 'scoped memory for transformer_forward.1']
    #allocation28 [shape = 'u8[16384]{0}', space=vmem, size = 0x4000, scoped, tag = 'input window, operand 26, single buffered']
    #allocation29 [shape = 'u8[512]{0}', space=vmem, size = 0x400, scoped, tag = 'input window, operand 27, single buffered']
    #allocation30 [shape = 's32[1]{0}', space=sflag, size = 0x4, scoped, tag = 'scoped memory for transformer_forward.1']
    #allocation31 [shape = 'u8[512]{0}', space=vmem, size = 0x400, scoped, tag = 'input window, operand 29, single buffered']
    #allocation32 [shape = 'u8[512]{0}', space=vmem, size = 0x400, scoped, tag = 'input window, operand 30, single buffered']
    #allocation33 [shape = 's32[1]{0}', space=sflag, size = 0x4, scoped, tag = 'scoped memory for transformer_forward.1']
    #allocation34 [shape = 'u8[512]{0}', space=vmem, size = 0x400, scoped, tag = 'input window, operand 31, single buffered']
    #allocation35 [shape = 'u8[16384]{0}', space=vmem, size = 0x4000, scoped, tag = 'input window, operand 32, single buffered']
    #allocation36 [shape = 's32[1]{0}', space=sflag, size = 0x4, scoped, tag = 'scoped memory for transformer_forward.1']
    #allocation37 [shape = 'u8[512]{0}', space=vmem, size = 0x400, scoped, tag = 'input window, operand 33, single buffered']
    #allocation38 [shape = 'u8[512]{0}', space=vmem, size = 0x400, scoped, tag = 'input window, operand 35, single buffered']
    #allocation39 [shape = 's32[1]{0}', space=sflag, size = 0x4, scoped, tag = 'scoped memory for transformer_forward.1']
    #allocation40 [shape = 'u8[1024]{0}', space=vmem, size = 0x400, scoped, tag = 'output window, operand 0, single buffered']
    %78 = vsyncpa [#allocation3], 0
    %79 = vsyncpa [#allocation6], 0
    %80 = vsyncpa [#allocation9], 0
    %81 = vsyncpa [#allocation12], 0
    %82 = vsyncpa [#allocation15], 0
    %83 = vsyncpa [#allocation18], 0
    %84 = vsyncpa [#allocation21], 0
    %85 = vsyncpa [#allocation24], 0
    %86 = vsyncpa [#allocation27], 0
    %87 = vsyncpa [#allocation30], 0
    %88 = vsyncpa [#allocation33], 0
    %89 = vsyncpa [#allocation36], 0
    %90 = vsyncpa [#allocation39], 0
    %91 = vsyncpa [#allocation4], 0
    // Predicated region
    $region2: #{transformer_forward.1} parent=1 // pred_check
      _
    $region3: #{transformer_forward.1} parent=1 // pred_check_branch
      %93 = sbr.rel (0) target = $region5
    $region4: #{transformer_forward.1} parent=1 // pred_region
      _
    $region5: #{transformer_forward.1} parent=1 // pred_fallthru
      _
    // Predicated region
    $region6: #{transformer_forward.1} parent=1 // pred_check
      _
    $region7: #{transformer_forward.1} parent=1 // pred_check_branch
      %95 = sbr.rel (0) target = $region9
    $region8: #{transformer_forward.1} parent=1 // pred_region
      %97 = vsyncadd [#allocation3], 0
      %s99 = sshll.u32 %s3, 4
      %s100 = int_to_ptr.hbm [resolvable:$true] %s99
      %s101 = sshll.u32 [#allocation2], 4
      %s102 = int_to_ptr.vmem [resolvable:$true] %s101
      %104 = dma.hbm_to_vmem [thread:$0]  %s100, 64, %s102, [#allocation3]
    $region9: #{transformer_forward.1} parent=1 // pred_fallthru
      _
    // Predicated region
    $region10: #{transformer_forward.1} parent=1 // pred_check
      _
    $region11: #{transformer_forward.1} parent=1 // pred_check_branch
      %106 = sbr.rel (0) target = $region13
    $region12: #{transformer_forward.1} parent=1 // pred_region
      _
    $region13: #{transformer_forward.1} parent=1 // pred_fallthru
      _
    // Predicated region
    $region14: #{transformer_forward.1} parent=1 // pred_check
      _
    $region15: #{transformer_forward.1} parent=1 // pred_check_branch
      %108 = sbr.rel (0) target = $region17
    $region16: #{transformer_forward.1} parent=1 // pred_region
      %110 = vsyncadd [#allocation6], 0
      %s112 = sshll.u32 %s7, 4
      %s113 = int_to_ptr.hbm [resolvable:$true] %s112
      %s114 = sshll.u32 [#allocation5], 4
      %s115 = int_to_ptr.vmem [resolvable:$true] %s114
      %117 = dma.hbm_to_vmem [thread:$0]  %s113, 128, %s115, [#allocation6]
    $region17: #{transformer_forward.1} parent=1 // pred_fallthru
      _
    // Predicated region
    $region18: #{transformer_forward.1} parent=1 // pred_check
      _
    $region19: #{transformer_forward.1} parent=1 // pred_check_branch
      %119 = sbr.rel (0) target = $region21
    $region20: #{transformer_forward.1} parent=1 // pred_region
      _
    $region21: #{transformer_forward.1} parent=1 // pred_fallthru
      _
    // Predicated region
    $region22: #{transformer_forward.1} parent=1 // pred_check
      _
    $region23: #{transformer_forward.1} parent=1 // pred_check_branch
      %121 = sbr.rel (0) target = $region25
    $region24: #{transformer_forward.1} parent=1 // pred_region
      _
    $region25: #{transformer_forward.1} parent=1 // pred_fallthru
      _
    // Predicated region
    $region26: #{transformer_forward.1} parent=1 // pred_check
      _
    $region27: #{transformer_forward.1} parent=1 // pred_check_branch
      %123 = sbr.rel (0) target = $region29
    $region28: #{transformer_forward.1} parent=1 // pred_region
      _
    $region29: #{transformer_forward.1} parent=1 // pred_fallthru
      _
    // Predicated region
    $region30: #{transformer_forward.1} parent=1 // pred_check
      _
    $region31: #{transformer_forward.1} parent=1 // pred_check_branch
      %125 = sbr.rel (0) target = $region33
    $region32: #{transformer_forward.1} parent=1 // pred_region
      _
    $region33: #{transformer_forward.1} parent=1 // pred_fallthru
      _
    // Predicated region
    $region34: #{transformer_forward.1} parent=1 // pred_check
      _
    $region35: #{transformer_forward.1} parent=1 // pred_check_branch
      %127 = sbr.rel (0) target = $region37
    $region36: #{transformer_forward.1} parent=1 // pred_region
      _
    $region37: #{transformer_forward.1} parent=1 // pred_fallthru
      _
    // Predicated region
    $region38: #{transformer_forward.1} parent=1 // pred_check
      _
    $region39: #{transformer_forward.1} parent=1 // pred_check_branch
      %129 = sbr.rel (0) target = $region41
    $region40: #{transformer_forward.1} parent=1 // pred_region
      %131 = vsyncadd [#allocation6], 0
      %s133 = sshll.u32 %s19, 4
      %s134 = int_to_ptr.hbm [resolvable:$true] %s133
      %s135 = sshll.u32 [#allocation7], 4
      %s136 = int_to_ptr.vmem [resolvable:$true] %s135
      %138 = dma.hbm_to_vmem [thread:$0]  %s134, 16, %s136, [#allocation6]
    $region41: #{transformer_forward.1} parent=1 // pred_fallthru
      _
    // Predicated region
    $region42: #{transformer_forward.1} parent=1 // pred_check
      _
    $region43: #{transformer_forward.1} parent=1 // pred_check_branch
      %140 = sbr.rel (0) target = $region45
    $region44: #{transformer_forward.1} parent=1 // pred_region
      _
    $region45: #{transformer_forward.1} parent=1 // pred_fallthru
      _
    // Predicated region
    $region46: #{transformer_forward.1} parent=1 // pred_check
      _
    $region47: #{transformer_forward.1} parent=1 // pred_check_branch
      %142 = sbr.rel (0) target = $region49
    $region48: #{transformer_forward.1} parent=1 // pred_region
      %144 = vsyncadd [#allocation9], 0
      %s146 = sshll.u32 %s23, 4
      %s147 = int_to_ptr.hbm [resolvable:$true] %s146
      %s148 = sshll.u32 [#allocation8], 4
      %s149 = int_to_ptr.vmem [resolvable:$true] %s148
      %151 = dma.hbm_to_vmem [thread:$0]  %s147, 16, %s149, [#allocation9]
    $region49: #{transformer_forward.1} parent=1 // pred_fallthru
      _
    // Predicated region
    $region50: #{transformer_forward.1} parent=1 // pred_check
      _
    $region51: #{transformer_forward.1} parent=1 // pred_check_branch
      %153 = sbr.rel (0) target = $region53
    $region52: #{transformer_forward.1} parent=1 // pred_region
      %155 = vsyncadd [#allocation9], 0
      %s157 = sshll.u32 %s25, 4
      %s158 = int_to_ptr.hbm [resolvable:$true] %s157
      %s159 = sshll.u32 [#allocation10], 4
      %s160 = int_to_ptr.vmem [resolvable:$true] %s159
      %162 = dma.hbm_to_vmem [thread:$0]  %s158, 16, %s160, [#allocation9]
    $region53: #{transformer_forward.1} parent=1 // pred_fallthru
      _
    // Predicated region
    $region54: #{transformer_forward.1} parent=1 // pred_check
      _
    $region55: #{transformer_forward.1} parent=1 // pred_check_branch
      %164 = sbr.rel (0) target = $region57
    $region56: #{transformer_forward.1} parent=1 // pred_region
      %166 = vsyncadd [#allocation12], 0
      %s168 = sshll.u32 %s27, 4
      %s169 = int_to_ptr.hbm [resolvable:$true] %s168
      %s170 = sshll.u32 [#allocation11], 4
      %s171 = int_to_ptr.vmem [resolvable:$true] %s170
      %173 = dma.hbm_to_vmem [thread:$0]  %s169, 16, %s171, [#allocation12]
    $region57: #{transformer_forward.1} parent=1 // pred_fallthru
      _
    // Predicated region
    $region58: #{transformer_forward.1} parent=1 // pred_check
      _
    $region59: #{transformer_forward.1} parent=1 // pred_check_branch
      %175 = sbr.rel (0) target = $region61
    $region60: #{transformer_forward.1} parent=1 // pred_region
      %177 = vsyncadd [#allocation12], 0
      %s178 = sshll.u32 %s29, 4
      %s179 = int_to_ptr.hbm [resolvable:$true] %s178
      %s180 = sshll.u32 [#allocation13], 4
      %s181 = int_to_ptr.vmem [resolvable:$true] %s180
      %186 = dma.hbm_to_vmem [thread:$0]  %s179, 512, %s181, [#allocation12], 128, 128, 8
    $region61: #{transformer_forward.1} parent=1 // pred_fallthru
      _
    // Predicated region
    $region62: #{transformer_forward.1} parent=1 // pred_check
      _
    $region63: #{transformer_forward.1} parent=1 // pred_check_branch
      %188 = sbr.rel (0) target = $region65
    $region64: #{transformer_forward.1} parent=1 // pred_region
      %190 = vsyncadd [#allocation15], 0
      %s192 = sshll.u32 %s31, 4
      %s193 = int_to_ptr.hbm [resolvable:$true] %s192
      %s194 = sshll.u32 [#allocation14], 4
      %s195 = int_to_ptr.vmem [resolvable:$true] %s194
      %197 = dma.hbm_to_vmem [thread:$0]  %s193, 16, %s195, [#allocation15]
    $region65: #{transformer_forward.1} parent=1 // pred_fallthru
      _
    // Predicated region
    $region66: #{transformer_forward.1} parent=1 // pred_check
      _
    $region67: #{transformer_forward.1} parent=1 // pred_check_branch
      %199 = sbr.rel (0) target = $region69
    $region68: #{transformer_forward.1} parent=1 // pred_region
      _
    $region69: #{transformer_forward.1} parent=1 // pred_fallthru
      _
    // Predicated region
    $region70: #{transformer_forward.1} parent=1 // pred_check
      _
    $region71: #{transformer_forward.1} parent=1 // pred_check_branch
      %201 = sbr.rel (0) target = $region73
    $region72: #{transformer_forward.1} parent=1 // pred_region
      %203 = vsyncadd [#allocation15], 0
      %s205 = sshll.u32 %s35, 4
      %s206 = int_to_ptr.hbm [resolvable:$true] %s205
      %s207 = sshll.u32 [#allocation16], 4
      %s208 = int_to_ptr.vmem [resolvable:$true] %s207
      %210 = dma.hbm_to_vmem [thread:$0]  %s206, 16, %s208, [#allocation15]
    $region73: #{transformer_forward.1} parent=1 // pred_fallthru
      _
    // Predicated region
    $region74: #{transformer_forward.1} parent=1 // pred_check
      _
    $region75: #{transformer_forward.1} parent=1 // pred_check_branch
      %212 = sbr.rel (0) target = $region77
    $region76: #{transformer_forward.1} parent=1 // pred_region
      %214 = vsyncadd [#allocation18], 0
      %s216 = sshll.u32 %s37, 4
      %s217 = int_to_ptr.hbm [resolvable:$true] %s216
      %s218 = sshll.u32 [#allocation17], 4
      %s219 = int_to_ptr.vmem [resolvable:$true] %s218
      %221 = dma.hbm_to_vmem [thread:$0]  %s217, 16, %s219, [#allocation18]
    $region77: #{transformer_forward.1} parent=1 // pred_fallthru
      _
    // Predicated region
    $region78: #{transformer_forward.1} parent=1 // pred_check
      _
    $region79: #{transformer_forward.1} parent=1 // pred_check_branch
      %223 = sbr.rel (0) target = $region81
    $region80: #{transformer_forward.1} parent=1 // pred_region
      %225 = vsyncadd [#allocation18], 0
      %s227 = sshll.u32 %s39, 4
      %s228 = int_to_ptr.hbm [resolvable:$true] %s227
      %s229 = sshll.u32 [#allocation19], 4
      %s230 = int_to_ptr.vmem [resolvable:$true] %s229
      %232 = dma.hbm_to_vmem [thread:$0]  %s228, 16, %s230, [#allocation18]
    $region81: #{transformer_forward.1} parent=1 // pred_fallthru
      _
    // Predicated region
    $region82: #{transformer_forward.1} parent=1 // pred_check
      _
    $region83: #{transformer_forward.1} parent=1 // pred_check_branch
      %234 = sbr.rel (0) target = $region85
    $region84: #{transformer_forward.1} parent=1 // pred_region
      _
    $region85: #{transformer_forward.1} parent=1 // pred_fallthru
      _
    // Predicated region
    $region86: #{transformer_forward.1} parent=1 // pred_check
      _
    $region87: #{transformer_forward.1} parent=1 // pred_check_branch
      %236 = sbr.rel (0) target = $region89
    $region88: #{transformer_forward.1} parent=1 // pred_region
      %238 = vsyncadd [#allocation21], 0
      %s240 = sshll.u32 %s43, 4
      %s241 = int_to_ptr.hbm [resolvable:$true] %s240
      %s242 = sshll.u32 [#allocation20], 4
      %s243 = int_to_ptr.vmem [resolvable:$true] %s242
      %245 = dma.hbm_to_vmem [thread:$0]  %s241, 16, %s243, [#allocation21]
    $region89: #{transformer_forward.1} parent=1 // pred_fallthru
      _
    // Predicated region
    $region90: #{transformer_forward.1} parent=1 // pred_check
      _
    $region91: #{transformer_forward.1} parent=1 // pred_check_branch
      %247 = sbr.rel (0) target = $region93
    $region92: #{transformer_forward.1} parent=1 // pred_region
      %249 = vsyncadd [#allocation21], 0
      %s250 = sshll.u32 %s45, 4
      %s251 = int_to_ptr.hbm [resolvable:$true] %s250
      %s252 = sshll.u32 [#allocation22], 4
      %s253 = int_to_ptr.vmem [resolvable:$true] %s252
      %258 = dma.hbm_to_vmem [thread:$0]  %s251, 512, %s253, [#allocation21], 128, 128, 8
    $region93: #{transformer_forward.1} parent=1 // pred_fallthru
      _
    // Predicated region
    $region94: #{transformer_forward.1} parent=1 // pred_check
      _
    $region95: #{transformer_forward.1} parent=1 // pred_check_branch
      %260 = sbr.rel (0) target = $region97
    $region96: #{transformer_forward.1} parent=1 // pred_region
      %262 = vsyncadd [#allocation24], 0
      %s264 = sshll.u32 %s47, 4
      %s265 = int_to_ptr.hbm [resolvable:$true] %s264
      %s266 = sshll.u32 [#allocation23], 4
      %s267 = int_to_ptr.vmem [resolvable:$true] %s266
      %269 = dma.hbm_to_vmem [thread:$0]  %s265, 16, %s267, [#allocation24]
    $region97: #{transformer_forward.1} parent=1 // pred_fallthru
      _
    // Predicated region
    $region98: #{transformer_forward.1} parent=1 // pred_check
      _
    $region99: #{transformer_forward.1} parent=1 // pred_check_branch
      %271 = sbr.rel (0) target = $region101
    $region100: #{transformer_forward.1} parent=1 // pred_region
      %273 = vsyncadd [#allocation24], 0
      %s275 = sshll.u32 %s49, 4
      %s276 = int_to_ptr.hbm [resolvable:$true] %s275
      %s277 = sshll.u32 [#allocation25], 4
      %s278 = int_to_ptr.vmem [resolvable:$true] %s277
      %280 = dma.hbm_to_vmem [thread:$0]  %s276, 16, %s278, [#allocation24]
    $region101: #{transformer_forward.1} parent=1 // pred_fallthru
      _
    // Predicated region
    $region102: #{transformer_forward.1} parent=1 // pred_check
      _
    $region103: #{transformer_forward.1} parent=1 // pred_check_branch
      %282 = sbr.rel (0) target = $region105
    $region104: #{transformer_forward.1} parent=1 // pred_region
      %284 = vsyncadd [#allocation27], 0
      %s286 = sshll.u32 %s51, 4
      %s287 = int_to_ptr.hbm [resolvable:$true] %s286
      %s288 = sshll.u32 [#allocation26], 4
      %s289 = int_to_ptr.vmem [resolvable:$true] %s288
      %291 = dma.hbm_to_vmem [thread:$0]  %s287, 16, %s289, [#allocation27]
    $region105: #{transformer_forward.1} parent=1 // pred_fallthru
      _
    // Predicated region
    $region106: #{transformer_forward.1} parent=1 // pred_check
      _
    $region107: #{transformer_forward.1} parent=1 // pred_check_branch
      %293 = sbr.rel (0) target = $region109
    $region108: #{transformer_forward.1} parent=1 // pred_region
      %295 = vsyncadd [#allocation27], 0
      %s296 = sshll.u32 %s53, 4
      %s297 = int_to_ptr.hbm [resolvable:$true] %s296
      %s298 = sshll.u32 [#allocation28], 4
      %s299 = int_to_ptr.vmem [resolvable:$true] %s298
      %304 = dma.hbm_to_vmem [thread:$0]  %s297, 512, %s299, [#allocation27], 128, 128, 8
    $region109: #{transformer_forward.1} parent=1 // pred_fallthru
      _
    // Predicated region
    $region110: #{transformer_forward.1} parent=1 // pred_check
      _
    $region111: #{transformer_forward.1} parent=1 // pred_check_branch
      %306 = sbr.rel (0) target = $region113
    $region112: #{transformer_forward.1} parent=1 // pred_region
      %308 = vsyncadd [#allocation30], 0
      %s310 = sshll.u32 %s55, 4
      %s311 = int_to_ptr.hbm [resolvable:$true] %s310
      %s312 = sshll.u32 [#allocation29], 4
      %s313 = int_to_ptr.vmem [resolvable:$true] %s312
      %315 = dma.hbm_to_vmem [thread:$0]  %s311, 16, %s313, [#allocation30]
    $region113: #{transformer_forward.1} parent=1 // pred_fallthru
      _
    // Predicated region
    $region114: #{transformer_forward.1} parent=1 // pred_check
      _
    $region115: #{transformer_forward.1} parent=1 // pred_check_branch
      %317 = sbr.rel (0) target = $region117
    $region116: #{transformer_forward.1} parent=1 // pred_region
      _
    $region117: #{transformer_forward.1} parent=1 // pred_fallthru
      _
    // Predicated region
    $region118: #{transformer_forward.1} parent=1 // pred_check
      _
    $region119: #{transformer_forward.1} parent=1 // pred_check_branch
      %319 = sbr.rel (0) target = $region121
    $region120: #{transformer_forward.1} parent=1 // pred_region
      %321 = vsyncadd [#allocation30], 0
      %s323 = sshll.u32 %s59, 4
      %s324 = int_to_ptr.hbm [resolvable:$true] %s323
      %s325 = sshll.u32 [#allocation31], 4
      %s326 = int_to_ptr.vmem [resolvable:$true] %s325
      %328 = dma.hbm_to_vmem [thread:$0]  %s324, 16, %s326, [#allocation30]
    $region121: #{transformer_forward.1} parent=1 // pred_fallthru
      _
    // Predicated region
    $region122: #{transformer_forward.1} parent=1 // pred_check
      _
    $region123: #{transformer_forward.1} parent=1 // pred_check_branch
      %330 = sbr.rel (0) target = $region125
    $region124: #{transformer_forward.1} parent=1 // pred_region
      %332 = vsyncadd [#allocation33], 0
      %s334 = sshll.u32 %s61, 4
      %s335 = int_to_ptr.hbm [resolvable:$true] %s334
      %s336 = sshll.u32 [#allocation32], 4
      %s337 = int_to_ptr.vmem [resolvable:$true] %s336
      %339 = dma.hbm_to_vmem [thread:$0]  %s335, 16, %s337, [#allocation33]
    $region125: #{transformer_forward.1} parent=1 // pred_fallthru
      _
    // Predicated region
    $region126: #{transformer_forward.1} parent=1 // pred_check
      _
    $region127: #{transformer_forward.1} parent=1 // pred_check_branch
      %341 = sbr.rel (0) target = $region129
    $region128: #{transformer_forward.1} parent=1 // pred_region
      %343 = vsyncadd [#allocation33], 0
      %s345 = sshll.u32 %s63, 4
      %s346 = int_to_ptr.hbm [resolvable:$true] %s345
      %s347 = sshll.u32 [#allocation34], 4
      %s348 = int_to_ptr.vmem [resolvable:$true] %s347
      %350 = dma.hbm_to_vmem [thread:$0]  %s346, 16, %s348, [#allocation33]
    $region129: #{transformer_forward.1} parent=1 // pred_fallthru
      _
    // Predicated region
    $region130: #{transformer_forward.1} parent=1 // pred_check
      _
    $region131: #{transformer_forward.1} parent=1 // pred_check_branch
      %352 = sbr.rel (0) target = $region133
    $region132: #{transformer_forward.1} parent=1 // pred_region
      %354 = vsyncadd [#allocation36], 0
      %s355 = sshll.u32 %s65, 4
      %s356 = int_to_ptr.hbm [resolvable:$true] %s355
      %s357 = sshll.u32 [#allocation35], 4
      %s358 = int_to_ptr.vmem [resolvable:$true] %s357
      %363 = dma.hbm_to_vmem [thread:$0]  %s356, 512, %s358, [#allocation36], 128, 128, 8
    $region133: #{transformer_forward.1} parent=1 // pred_fallthru
      _
    // Predicated region
    $region134: #{transformer_forward.1} parent=1 // pred_check
      _
    $region135: #{transformer_forward.1} parent=1 // pred_check_branch
      %365 = sbr.rel (0) target = $region137
    $region136: #{transformer_forward.1} parent=1 // pred_region
      %367 = vsyncadd [#allocation36], 0
      %s369 = sshll.u32 %s67, 4
      %s370 = int_to_ptr.hbm [resolvable:$true] %s369
      %s371 = sshll.u32 [#allocation37], 4
      %s372 = int_to_ptr.vmem [resolvable:$true] %s371
      %374 = dma.hbm_to_vmem [thread:$0]  %s370, 16, %s372, [#allocation36]
    $region137: #{transformer_forward.1} parent=1 // pred_fallthru
      _
    // Predicated region
    $region138: #{transformer_forward.1} parent=1 // pred_check
      _
    $region139: #{transformer_forward.1} parent=1 // pred_check_branch
      %376 = sbr.rel (0) target = $region141
    $region140: #{transformer_forward.1} parent=1 // pred_region
      _
    $region141: #{transformer_forward.1} parent=1 // pred_fallthru
      _
    // Predicated region
    $region142: #{transformer_forward.1} parent=1 // pred_check
      _
    $region143: #{transformer_forward.1} parent=1 // pred_check_branch
      %378 = sbr.rel (0) target = $region145
    $region144: #{transformer_forward.1} parent=1 // pred_region
      %380 = vsyncadd [#allocation39], 0
      %s382 = sshll.u32 %s71, 4
      %s383 = int_to_ptr.hbm [resolvable:$true] %s382
      %s384 = sshll.u32 [#allocation38], 4
      %s385 = int_to_ptr.vmem [resolvable:$true] %s384
      %387 = dma.hbm_to_vmem [thread:$0]  %s383, 16, %s385, [#allocation39]
    $region145: #{transformer_forward.1} parent=1 // pred_fallthru
      _
    // Predicated region
    $region146: #{transformer_forward.1} parent=1 // pred_check
      _
    $region147: #{transformer_forward.1} parent=1 // pred_check_branch
      %389 = sbr.rel (0) target = $region149
    $region148: #{transformer_forward.1} parent=1 // pred_region
      %391 = dma.done [#allocation3], 64
    $region149: #{transformer_forward.1} parent=1 // pred_fallthru
      _
    // Predicated region
    $region150: #{transformer_forward.1} parent=1 // pred_check
      _
    $region151: #{transformer_forward.1} parent=1 // pred_check_branch
      %393 = sbr.rel (0) target = $region153
    $region152: #{transformer_forward.1} parent=1 // pred_region
      %395 = dma.done [#allocation6], 128
    $region153: #{transformer_forward.1} parent=1 // pred_fallthru
      _
    // Predicated region
    $region154: #{transformer_forward.1} parent=1 // pred_check
      _
    $region155: #{transformer_forward.1} parent=1 // pred_check_branch
      %397 = sbr.rel (0) target = $region157
    $region156: #{transformer_forward.1} parent=1 // pred_region
      %399 = dma.done [#allocation6], 16
    $region157: #{transformer_forward.1} parent=1 // pred_fallthru
      _
    // Predicated region
    $region158: #{transformer_forward.1} parent=1 // pred_check
      _
    $region159: #{transformer_forward.1} parent=1 // pred_check_branch
      %401 = sbr.rel (0) target = $region161
    $region160: #{transformer_forward.1} parent=1 // pred_region
      %403 = dma.done [#allocation9], 16
    $region161: #{transformer_forward.1} parent=1 // pred_fallthru
      _
    // Predicated region
    $region162: #{transformer_forward.1} parent=1 // pred_check
      _
    $region163: #{transformer_forward.1} parent=1 // pred_check_branch
      %405 = sbr.rel (0) target = $region165
    $region164: #{transformer_forward.1} parent=1 // pred_region
      %407 = dma.done [#allocation9], 16
    $region165: #{transformer_forward.1} parent=1 // pred_fallthru
      _
    // Predicated region
    $region166: #{transformer_forward.1} parent=1 // pred_check
      _
    $region167: #{transformer_forward.1} parent=1 // pred_check_branch
      %409 = sbr.rel (0) target = $region169
    $region168: #{transformer_forward.1} parent=1 // pred_region
      %411 = dma.done [#allocation12], 16
    $region169: #{transformer_forward.1} parent=1 // pred_fallthru
      _
    // Predicated region
    $region170: #{transformer_forward.1} parent=1 // pred_check
      _
    $region171: #{transformer_forward.1} parent=1 // pred_check_branch
      %413 = sbr.rel (0) target = $region173
    $region172: #{transformer_forward.1} parent=1 // pred_region
      %415 = dma.done [#allocation12], 512
    $region173: #{transformer_forward.1} parent=1 // pred_fallthru
      _
    // Predicated region
    $region174: #{transformer_forward.1} parent=1 // pred_check
      _
    $region175: #{transformer_forward.1} parent=1 // pred_check_branch
      %417 = sbr.rel (0) target = $region177
    $region176: #{transformer_forward.1} parent=1 // pred_region
      %419 = dma.done [#allocation15], 16
    $region177: #{transformer_forward.1} parent=1 // pred_fallthru
      _
    // Predicated region
    $region178: #{transformer_forward.1} parent=1 // pred_check
      _
    $region179: #{transformer_forward.1} parent=1 // pred_check_branch
      %421 = sbr.rel (0) target = $region181
    $region180: #{transformer_forward.1} parent=1 // pred_region
      %423 = dma.done [#allocation15], 16
    $region181: #{transformer_forward.1} parent=1 // pred_fallthru
      _
    // Predicated region
    $region182: #{transformer_forward.1} parent=1 // pred_check
      _
    $region183: #{transformer_forward.1} parent=1 // pred_check_branch
      %425 = sbr.rel (0) target = $region185
    $region184: #{transformer_forward.1} parent=1 // pred_region
      %427 = dma.done [#allocation18], 16
    $region185: #{transformer_forward.1} parent=1 // pred_fallthru
      _
    // Predicated region
    $region186: #{transformer_forward.1} parent=1 // pred_check
      _
    $region187: #{transformer_forward.1} parent=1 // pred_check_branch
      %429 = sbr.rel (0) target = $region189
    $region188: #{transformer_forward.1} parent=1 // pred_region
      %431 = dma.done [#allocation18], 16
    $region189: #{transformer_forward.1} parent=1 // pred_fallthru
      _
    // Predicated region
    $region190: #{transformer_forward.1} parent=1 // pred_check
      _
    $region191: #{transformer_forward.1} parent=1 // pred_check_branch
      %433 = sbr.rel (0) target = $region193
    $region192: #{transformer_forward.1} parent=1 // pred_region
      %435 = dma.done [#allocation21], 16
    $region193: #{transformer_forward.1} parent=1 // pred_fallthru
      _
    // Predicated region
    $region194: #{transformer_forward.1} parent=1 // pred_check
      _
    $region195: #{transformer_forward.1} parent=1 // pred_check_branch
      %437 = sbr.rel (0) target = $region197
    $region196: #{transformer_forward.1} parent=1 // pred_region
      %439 = dma.done [#allocation21], 512
    $region197: #{transformer_forward.1} parent=1 // pred_fallthru
      _
    // Predicated region
    $region198: #{transformer_forward.1} parent=1 // pred_check
      _
    $region199: #{transformer_forward.1} parent=1 // pred_check_branch
      %441 = sbr.rel (0) target = $region201
    $region200: #{transformer_forward.1} parent=1 // pred_region
      %443 = dma.done [#allocation24], 16
    $region201: #{transformer_forward.1} parent=1 // pred_fallthru
      _
    // Predicated region
    $region202: #{transformer_forward.1} parent=1 // pred_check
      _
    $region203: #{transformer_forward.1} parent=1 // pred_check_branch
      %445 = sbr.rel (0) target = $region205
    $region204: #{transformer_forward.1} parent=1 // pred_region
      %447 = dma.done [#allocation24], 16
    $region205: #{transformer_forward.1} parent=1 // pred_fallthru
      _
    // Predicated region
    $region206: #{transformer_forward.1} parent=1 // pred_check
      _
    $region207: #{transformer_forward.1} parent=1 // pred_check_branch
      %449 = sbr.rel (0) target = $region209
    $region208: #{transformer_forward.1} parent=1 // pred_region
      %451 = dma.done [#allocation27], 16
    $region209: #{transformer_forward.1} parent=1 // pred_fallthru
      _
    // Predicated region
    $region210: #{transformer_forward.1} parent=1 // pred_check
      _
    $region211: #{transformer_forward.1} parent=1 // pred_check_branch
      %453 = sbr.rel (0) target = $region213
    $region212: #{transformer_forward.1} parent=1 // pred_region
      %455 = dma.done [#allocation27], 512
    $region213: #{transformer_forward.1} parent=1 // pred_fallthru
      _
    // Predicated region
    $region214: #{transformer_forward.1} parent=1 // pred_check
      _
    $region215: #{transformer_forward.1} parent=1 // pred_check_branch
      %457 = sbr.rel (0) target = $region217
    $region216: #{transformer_forward.1} parent=1 // pred_region
      %459 = dma.done [#allocation30], 16
    $region217: #{transformer_forward.1} parent=1 // pred_fallthru
      _
    // Predicated region
    $region218: #{transformer_forward.1} parent=1 // pred_check
      _
    $region219: #{transformer_forward.1} parent=1 // pred_check_branch
      %461 = sbr.rel (0) target = $region221
    $region220: #{transformer_forward.1} parent=1 // pred_region
      %463 = dma.done [#allocation30], 16
    $region221: #{transformer_forward.1} parent=1 // pred_fallthru
      _
    // Predicated region
    $region222: #{transformer_forward.1} parent=1 // pred_check
      _
    $region223: #{transformer_forward.1} parent=1 // pred_check_branch
      %465 = sbr.rel (0) target = $region225
    $region224: #{transformer_forward.1} parent=1 // pred_region
      %467 = dma.done [#allocation33], 16
    $region225: #{transformer_forward.1} parent=1 // pred_fallthru
      _
    // Predicated region
    $region226: #{transformer_forward.1} parent=1 // pred_check
      _
    $region227: #{transformer_forward.1} parent=1 // pred_check_branch
      %469 = sbr.rel (0) target = $region229
    $region228: #{transformer_forward.1} parent=1 // pred_region
      %471 = dma.done [#allocation33], 16
    $region229: #{transformer_forward.1} parent=1 // pred_fallthru
      _
    // Predicated region
    $region230: #{transformer_forward.1} parent=1 // pred_check
      _
    $region231: #{transformer_forward.1} parent=1 // pred_check_branch
      %473 = sbr.rel (0) target = $region233
    $region232: #{transformer_forward.1} parent=1 // pred_region
      %475 = dma.done [#allocation36], 512
    $region233: #{transformer_forward.1} parent=1 // pred_fallthru
      _
    // Predicated region
    $region234: #{transformer_forward.1} parent=1 // pred_check
      _
    $region235: #{transformer_forward.1} parent=1 // pred_check_branch
      %477 = sbr.rel (0) target = $region237
    $region236: #{transformer_forward.1} parent=1 // pred_region
      %479 = dma.done [#allocation36], 16
    $region237: #{transformer_forward.1} parent=1 // pred_fallthru
      _
    // Predicated region
    $region238: #{transformer_forward.1} parent=1 // pred_check
      _
    $region239: #{transformer_forward.1} parent=1 // pred_check_branch
      %481 = sbr.rel (0) target = $region241
    $region240: #{transformer_forward.1} parent=1 // pred_region
      %483 = dma.done [#allocation39], 16
    $region241: #{transformer_forward.1} parent=1 // pred_fallthru
      _
    %v484 = vld [vmem:[%s1] sm:$0xff]
    %v485 = vld [vmem:[%s1 + $0x8] sm:$0xff]
    %v486 = vld [vmem:[#allocation2] sm:$0xf]
    %v487 = vld [vmem:[%s5] sm:$0x1]
    %v488 = vld [vmem:[#allocation5] sm:$0xff]
    %v489 = vld [vmem:[%s9] sm:$0xff]
    %v490 = vld [vmem:[%s9 + $0x8] sm:$0xff]
    %v491 = vld [vmem:[%s9 + $0x10] sm:$0xff]
    %v492 = vld [vmem:[%s9 + $0x18] sm:$0xff]
    %v493 = vld [vmem:[%s11] sm:$0x1]
    %v494 = vld [vmem:[%s13] sm:$0x1]
    %v495 = vld [vmem:[%s15] sm:$0x1]
    %v496 = vld [vmem:[%s17] sm:$0xff]
    %v497 = vld [vmem:[%s17 + $0x8] sm:$0xff]
    %v498 = vld [vmem:[%s17 + $0x10] sm:$0xff]
    %v499 = vld [vmem:[%s17 + $0x18] sm:$0xff]
    %v500 = vld [vmem:[#allocation7] sm:$0x1]
    %v501 = vld [vmem:[%s21] sm:$0xff]
    %v502 = vld [vmem:[%s21 + $0x8] sm:$0xff]
    %v503 = vld [vmem:[%s21 + $0x10] sm:$0xff]
    %v504 = vld [vmem:[%s21 + $0x18] sm:$0xff]
    %v505 = vld [vmem:[#allocation8] sm:$0x1]
    %v506 = vld [vmem:[#allocation10] sm:$0x1]
    %v507 = vld [vmem:[#allocation11] sm:$0x1]
    %v508 = vld [vmem:[#allocation13] sm:$0xff]
    %v509 = vld [vmem:[#allocation13 + $0x8] sm:$0xff]
    %v510 = vld [vmem:[#allocation13 + $0x10] sm:$0xff]
    %v511 = vld [vmem:[#allocation13 + $0x18] sm:$0xff]
    %v512 = vld [vmem:[#allocation14] sm:$0x1]
    %v513 = vld [vmem:[%s33] sm:$0xff]
    %v514 = vld [vmem:[%s33 + $0x8] sm:$0xff]
    %v515 = vld [vmem:[%s33 + $0x10] sm:$0xff]
    %v516 = vld [vmem:[%s33 + $0x18] sm:$0xff]
    %v517 = vld [vmem:[%s33 + $0x20] sm:$0xff]
    %v518 = vld [vmem:[%s33 + $0x28] sm:$0xff]
    %v519 = vld [vmem:[%s33 + $0x30] sm:$0xff]
    %v520 = vld [vmem:[%s33 + $0x38] sm:$0xff]
    %v521 = vld [vmem:[#allocation16] sm:$0x1]
    %v522 = vld [vmem:[#allocation17] sm:$0x1]
    %v523 = vld [vmem:[#allocation19] sm:$0x1]
    %v524 = vld [vmem:[%s41] sm:$0xff]
    %v525 = vld [vmem:[%s41 + $0x8] sm:$0xff]
    %v526 = vld [vmem:[%s41 + $0x10] sm:$0xff]
    %v527 = vld [vmem:[%s41 + $0x18] sm:$0xff]
    %v528 = vld [vmem:[#allocation20] sm:$0x1]
    %v529 = vld [vmem:[#allocation22] sm:$0xff]
    %v530 = vld [vmem:[#allocation22 + $0x8] sm:$0xff]
    %v531 = vld [vmem:[#allocation22 + $0x10] sm:$0xff]
    %v532 = vld [vmem:[#allocation22 + $0x18] sm:$0xff]
    %v533 = vld [vmem:[#allocation23] sm:$0x1]
    %v534 = vld [vmem:[#allocation25] sm:$0x1]
    %v535 = vld [vmem:[#allocation26] sm:$0x1]
    %v536 = vld [vmem:[#allocation28] sm:$0xff]
    %v537 = vld [vmem:[#allocation28 + $0x8] sm:$0xff]
    %v538 = vld [vmem:[#allocation28 + $0x10] sm:$0xff]
    %v539 = vld [vmem:[#allocation28 + $0x18] sm:$0xff]
    %v540 = vld [vmem:[#allocation29] sm:$0x1]
    %v541 = vld [vmem:[%s57] sm:$0xff]
    %v542 = vld [vmem:[%s57 + $0x8] sm:$0xff]
    %v543 = vld [vmem:[%s57 + $0x10] sm:$0xff]
    %v544 = vld [vmem:[%s57 + $0x18] sm:$0xff]
    %v545 = vld [vmem:[%s57 + $0x20] sm:$0xff]
    %v546 = vld [vmem:[%s57 + $0x28] sm:$0xff]
    %v547 = vld [vmem:[%s57 + $0x30] sm:$0xff]
    %v548 = vld [vmem:[%s57 + $0x38] sm:$0xff]
    %v549 = vld [vmem:[#allocation31] sm:$0x1]
    %v550 = vld [vmem:[#allocation32] sm:$0x1]
    %v551 = vld [vmem:[#allocation34] sm:$0x1]
    %v552 = vld [vmem:[#allocation35] sm:$0xff]
    %v553 = vld [vmem:[#allocation35 + $0x8] sm:$0xff]
    %v554 = vld [vmem:[#allocation35 + $0x10] sm:$0xff]
    %v555 = vld [vmem:[#allocation35 + $0x18] sm:$0xff]
    %v556 = vld [vmem:[#allocation37] sm:$0x1]
    %v557 = vld [vmem:[%s69] sm:$0xff]
    %v558 = vld [vmem:[%s69 + $0x8] sm:$0xff]
    %v559 = vld [vmem:[%s69 + $0x10] sm:$0xff]
    %v560 = vld [vmem:[%s69 + $0x18] sm:$0xff]
    %v561 = vld [vmem:[%s69 + $0x20] sm:$0xff]
    %v562 = vld [vmem:[%s69 + $0x28] sm:$0xff]
    %v563 = vld [vmem:[%s69 + $0x30] sm:$0xff]
    %v564 = vld [vmem:[%s69 + $0x38] sm:$0xff]
    %v565 = vld [vmem:[#allocation38] sm:$0x1]
    %v567 = vperm.slane %v487, 0
    %vm569 = vcmask 31744
    %v571 = vsel %vm569, %v484, 0
    %v574 = vsel %vm569, %v485, 0
    %vm576 = vcmask 1043456
    %v578 = vsel %vm576, %v486, 0
    %580 = vmatpush.msra.mxu0 0.0
    %581 = vmatpush.msra.mxu0 0.0
    %582 = vmatpush.msra.mxu0 0.0
    %583 = vmatpush.msra.mxu0 0.0
    %584 = vmatpush.msra.mxu0 0.0
    %585 = vmatpush.msra.mxu0 0.0
    %586 = vmatpush.msra.mxu0 0.0
    %587 = vmatpush.msra.mxu0 0.0
    %588 = vmatpush.msra.mxu0 0.0
    %589 = vmatpush.msra.mxu0 0.0
    %590 = vmatpush.msra.mxu0 0.0
    %591 = vmatpush.msra.mxu0 0.0
    %592 = vmatpush.msra.mxu0 0.0
    %593 = vmatpush.msra.mxu0 0.0
    %594 = vmatpush.msra.mxu0 0.0
    %595 = vmatpush.msra.mxu0 %v578
    %596 = vmatmul.f32.gmra.mxu0 %v571
    %v597 = vpop.f32.mrf.mxu0
    %v598 = vadd.f32 %v567, %v597
    %599 = vmatmul.f32.gmra.mxu0 %v574
    %v600 = vpop.f32.mrf.mxu0
    %v601 = vadd.f32 %v567, %v600
    %602 = vdwg.mxu0
    %v603 = vadd.f32 %v598, %v488
    %v604 = vadd.f32 %v601, %v488
    %v606 = vperm.slane %v493, 0
    %vm608 = vcmask 261120
    %v610 = vsel %vm608, %v603, 0
    %v613 = vsel %vm608, %v604, 0
    %615 = vmatpush.msra.mxu0 0.0
    %616 = vmatpush.msra.mxu0 0.0
    %617 = vmatpush.msra.mxu0 0.0
    %618 = vmatpush.msra.mxu0 0.0
    %619 = vmatpush.msra.mxu0 0.0
    %620 = vmatpush.msra.mxu0 0.0
    %621 = vmatpush.msra.mxu0 0.0
    %622 = vmatpush.msra.mxu0 0.0
    %623 = vmatpush.msra.mxu0 0.0
    %624 = vmatpush.msra.mxu0 0.0
    %625 = vmatpush.msra.mxu0 0.0
    %626 = vmatpush.msra.mxu0 0.0
    %627 = vmatpush.msra.mxu0 %v492
    %628 = vmatpush.msra.mxu0 %v491
    %629 = vmatpush.msra.mxu0 %v490
    %630 = vmatpush.msra.mxu0 %v489
    %631 = vmatmul.f32.gmra.mxu0 %v610
    %v632 = vpop.f32.mrf.mxu0
    %v633 = vadd.f32 %v606, %v632
    %634 = vmatmul.f32.gmra.mxu0 %v613
    %v635 = vpop.f32.mrf.mxu0
    %v636 = vadd.f32 %v606, %v635
    %637 = vdwg.mxu0
    %v638 = vsel %vm608, %v633, 0.0
    %639 = vadd.xlane.f32.xlu0 %v638
    %v640 = vpop.xlane.xlu0 %639
    %v641 = vsel %vm608, %v636, 0.0
    %642 = vadd.xlane.f32.xlu0 %v641
    %v643 = vpop.xlane.xlu0 %642
    %v644 = vrcp.pop 32.0
    %v645 = vmul.f32 32.0, %v644
    %v646 = vsub.f32 1.0, %v645
    %v647 = vmul.f32 %v644, %v646
    %v648 = vadd.f32 %v644, %v647
    %vm649 = vweird.f32 %v644
    %v650 = vsel %vm649, %v644, %v648
    %v651 = vmul.f32 %v640, %v650
    %v652 = vmul.f32 %v643, %v650
    %v653 = vsub.f32 %v633, %v651
    %v654 = vsub.f32 %v636, %v652
    %v655 = vmul.f32 %v653, %v653
    %v656 = vmul.f32 %v654, %v654
    %v657 = vsel %vm608, %v655, 0.0
    %658 = vadd.xlane.f32.xlu0 %v657
    %v659 = vpop.xlane.xlu0 %658
    %v660 = vsel %vm608, %v656, 0.0
    %661 = vadd.xlane.f32.xlu0 %v660
    %v662 = vpop.xlane.xlu0 %661
    %v663 = vmul.f32 %v659, %v650
    %v664 = vmul.f32 %v662, %v650
    %v665 = vadd.f32 %v663, 1e-05
    %v666 = vadd.f32 %v664, 1e-05
    %v667 = vrsqrt.pop %v665
    %v668 = vmul.f32 %v667, %v665
    %v669 = vmul.f32 %v668, %v667
    %v670 = vmul.f32 0.5, %v669
    %v671 = vsub.f32 1.5, %v670
    %v672 = vmul.f32 %v667, %v671
    %vm673 = vweird.f32 %v665
    %vm674 = vweird.f32 %v667
    %vm675 = vmor %vm673, %vm674
    %v676 = vsel %vm675, %v667, %v672
    %v677 = vrsqrt.pop %v666
    %v678 = vmul.f32 %v677, %v666
    %v679 = vmul.f32 %v678, %v677
    %v680 = vmul.f32 0.5, %v679
    %v681 = vsub.f32 1.5, %v680
    %v682 = vmul.f32 %v677, %v681
    %vm683 = vweird.f32 %v666
    %vm684 = vweird.f32 %v677
    %vm685 = vmor %vm683, %vm684
    %v686 = vsel %vm685, %v677, %v682
    %v687 = vmul.f32 %v653, %v676
    %v688 = vmul.f32 %v654, %v686
    %v690 = vperm.slane %v494, 0
    %v692 = vmul.f32 %v687, %v690
    %v693 = vmul.f32 %v688, %v690
    %v695 = vperm.slane %v495, 0
    %v697 = vadd.f32 %v692, %v695
    %v698 = vadd.f32 %v693, %v695
    %v699 = vmul.f32 %v697, 0.70710677
    %v700 = vmul.f32 %v698, 0.70710677
    %v701 = vand.u32 2147483647, %v699
    %v702 = vand.u32 2147483647, %v700
    %v703 = vmul.f32 %v701, 0.3275911
    %v704 = vmul.f32 %v702, 0.3275911
    %v705 = vadd.f32 %v703, 1.0
    %v706 = vadd.f32 %v704, 1.0
    %v707 = vrcp.pop %v705
    %v708 = vmul.f32 %v705, %v707
    %v709 = vsub.f32 1.0, %v708
    %v710 = vmul.f32 %v707, %v709
    %v711 = vadd.f32 %v707, %v710
    %vm712 = vweird.f32 %v705
    %vm713 = vweird.f32 %v707
    %vm714 = vmor %vm712, %vm713
    %v715 = vsel %vm714, %v707, %v711
    %v716 = vand.u32 2147483647, %v705
    %vm717 = vcmp.eq.f32.partialorder %v716, 8.507059e+37
    %v718 = vand.u32 %v705, 2147483648
    %v719 = vor.u32 1.1754944e-38, %v718
    %v720 = vsel %vm717, %v719, %v715
    %v721 = vmul.f32 1.0, %v720
    %v722 = vrcp.pop %v706
    %v723 = vmul.f32 %v706, %v722
    %v724 = vsub.f32 1.0, %v723
    %v725 = vmul.f32 %v722, %v724
    %v726 = vadd.f32 %v722, %v725
    %vm727 = vweird.f32 %v706
    %vm728 = vweird.f32 %v722
    %vm729 = vmor %vm727, %vm728
    %v730 = vsel %vm729, %v722, %v726
    %v731 = vand.u32 2147483647, %v706
    %vm732 = vcmp.eq.f32.partialorder %v731, 8.507059e+37
    %v733 = vand.u32 %v706, 2147483648
    %v734 = vor.u32 1.1754944e-38, %v733
    %v735 = vsel %vm732, %v734, %v730
    %v736 = vmul.f32 1.0, %v735
    %v737 = vmul.f32 %v721, 1.0614054
    %v738 = vmul.f32 %v736, 1.0614054
    %v739 = vadd.f32 %v737, -1.4531521
    %v740 = vadd.f32 %v738, -1.4531521
    %v741 = vmul.f32 %v721, %v739
    %v742 = vmul.f32 %v736, %v740
    %v743 = vadd.f32 %v741, 1.4214138
    %v744 = vadd.f32 %v742, 1.4214138
    %v745 = vmul.f32 %v721, %v743
    %v746 = vmul.f32 %v736, %v744
    %v747 = vadd.f32 %v745, -0.28449672
    %v748 = vadd.f32 %v746, -0.28449672
    %v749 = vmul.f32 %v721, %v747
    %v750 = vmul.f32 %v736, %v748
    %v751 = vadd.f32 %v749, 0.2548296
    %v752 = vadd.f32 %v750, 0.2548296
    %v753 = vmul.f32 %v721, %v751
    %v754 = vmul.f32 %v736, %v752
    %v755 = vsub.f32 0.0, %v701
    %v756 = vsub.f32 0.0, %v702
    %v757 = vmul.f32 %v755, %v701
    %v758 = vmul.f32 %v756, %v702
    %v759 = vmul.f32 %v757, 1.442695
    %v760 = vpow.pop %v759
    %v761 = vmul.f32 %v758, 1.442695
    %v762 = vpow.pop %v761
    %v763 = vmul.f32 %v753, %v760
    %v764 = vmul.f32 %v754, %v762
    %v765 = vsub.f32 1.0, %v763
    %v766 = vsub.f32 1.0, %v764
    %vm767 = vcmp.lt.f32.partialorder %v699, 0.0
    %vm768 = vcmp.lt.f32.partialorder %v700, 0.0
    %v769 = vsub.f32 0.0, %v765
    %v770 = vsub.f32 0.0, %v766
    %v771 = vsel %vm767, %v769, %v765
    %v772 = vsel %vm768, %v770, %v766
    %v773 = vmul.f32 %v697, 0.5
    %v774 = vmul.f32 %v698, 0.5
    %v775 = vadd.f32 %v771, 1.0
    %v776 = vadd.f32 %v772, 1.0
    %v777 = vmul.f32 %v773, %v775
    %v778 = vmul.f32 %v774, %v776
    %v780 = vperm.slane %v500, 0
    %v783 = vsel %vm608, %v777, 0
    %v786 = vsel %vm608, %v778, 0
    %788 = vmatpush.msra.mxu0 0.0
    %789 = vmatpush.msra.mxu0 0.0
    %790 = vmatpush.msra.mxu0 0.0
    %791 = vmatpush.msra.mxu0 0.0
    %792 = vmatpush.msra.mxu0 0.0
    %793 = vmatpush.msra.mxu0 0.0
    %794 = vmatpush.msra.mxu0 0.0
    %795 = vmatpush.msra.mxu0 0.0
    %796 = vmatpush.msra.mxu0 0.0
    %797 = vmatpush.msra.mxu0 0.0
    %798 = vmatpush.msra.mxu0 0.0
    %799 = vmatpush.msra.mxu0 0.0
    %800 = vmatpush.msra.mxu0 %v499
    %801 = vmatpush.msra.mxu0 %v498
    %802 = vmatpush.msra.mxu0 %v497
    %803 = vmatpush.msra.mxu0 %v496
    %804 = vmatmul.f32.gmra.mxu0 %v783
    %v805 = vpop.f32.mrf.mxu0
    %v806 = vadd.f32 %v780, %v805
    %807 = vmatmul.f32.gmra.mxu0 %v786
    %v808 = vpop.f32.mrf.mxu0
    %v809 = vadd.f32 %v780, %v808
    %810 = vdwg.mxu0
    %812 = vrot.lane.b32.xlu0 %v806, 96
    %v813 = vpop.permute.xlu0 %812
    %vm814 = vcmask 64512
    %v815 = vsel %vm814, %v806, 0
    %v817 = vsel %vm814, %v813, 0
    %819 = vmatpush.xpose.msra.mxu0 0.0
    %820 = vmatpush.xpose.msra.mxu0 0.0
    %821 = vmatpush.xpose.msra.mxu0 0.0
    %822 = vmatpush.xpose.msra.mxu0 0.0
    %823 = vmatpush.xpose.msra.mxu0 0.0
    %824 = vmatpush.xpose.msra.mxu0 0.0
    %825 = vmatpush.xpose.msra.mxu0 0.0
    %826 = vmatpush.xpose.msra.mxu0 0.0
    %827 = vmatpush.xpose.msra.mxu0 0.0
    %828 = vmatpush.xpose.msra.mxu0 0.0
    %829 = vmatpush.xpose.msra.mxu0 0.0
    %830 = vmatpush.xpose.msra.mxu0 0.0
    %831 = vmatpush.xpose.msra.mxu0 0.0
    %832 = vmatpush.xpose.msra.mxu0 0.0
    %833 = vmatpush.xpose.msra.mxu0 0.0
    %834 = vmatpush.xpose.msra.mxu0 %v817
    %835 = vmatmul.f32.gmra.mxu0 %v815
    %v836 = vpop.f32.mrf.mxu0
    %v837 = vadd.f32 0.0, %v836
    %838 = vdwg.mxu0
    %v839 = vmul.f32 %v837, 0.35355338
    %v840 = vsel %vm814, %v839, -inf
    %841 = vmax.xlane.f32.xlu0 %v840
    %v842 = vpop.xlane.xlu0 %841
    %v843 = vsub.f32 %v839, %v842
    %v844 = vmul.f32 %v843, 1.442695
    %v845 = vpow.pop %v844
    %v846 = vsel %vm814, %v845, 0.0
    %847 = vadd.xlane.f32.xlu0 %v846
    %v848 = vpop.xlane.xlu0 %847
    %v849 = vrcp.pop %v848
    %v850 = vmul.f32 %v848, %v849
    %v851 = vsub.f32 1.0, %v850
    %v852 = vmul.f32 %v849, %v851
    %v853 = vadd.f32 %v849, %v852
    %vm854 = vweird.f32 %v848
    %vm855 = vweird.f32 %v849
    %vm856 = vmor %vm854, %vm855
    %v857 = vsel %vm856, %v849, %v853
    %v858 = vand.u32 2147483647, %v848
    %vm859 = vcmp.eq.f32.partialorder %v858, 8.507059e+37
    %v860 = vand.u32 %v848, 2147483648
    %v861 = vor.u32 1.1754944e-38, %v860
    %v862 = vsel %vm859, %v861, %v857
    %v863 = vmul.f32 %v845, %v862
    %864 = vrot.lane.b32.xlu0 %v806, 64
    %v865 = vpop.permute.xlu0 %864
    %v868 = vsel %vm814, %v863, 0
    %870 = vmatpush.msra.mxu0 0.0
    %871 = vmatpush.msra.mxu0 0.0
    %872 = vmatpush.msra.mxu0 0.0
    %873 = vmatpush.msra.mxu0 0.0
    %874 = vmatpush.msra.mxu0 0.0
    %875 = vmatpush.msra.mxu0 0.0
    %876 = vmatpush.msra.mxu0 0.0
    %877 = vmatpush.msra.mxu0 0.0
    %878 = vmatpush.msra.mxu0 0.0
    %879 = vmatpush.msra.mxu0 0.0
    %880 = vmatpush.msra.mxu0 0.0
    %881 = vmatpush.msra.mxu0 0.0
    %882 = vmatpush.msra.mxu0 0.0
    %883 = vmatpush.msra.mxu0 0.0
    %884 = vmatpush.msra.mxu0 0.0
    %885 = vmatpush.msra.mxu0 %v865
    %886 = vmatmul.f32.gmra.mxu0 %v868
    %v887 = vpop.f32.mrf.mxu0
    %v888 = vadd.f32 0.0, %v887
    %889 = vdwg.mxu0
    %890 = vrot.lane.b32.xlu0 %v806, 120
    %v891 = vpop.permute.xlu0 %890
    %892 = vrot.lane.b32.xlu0 %v806, 88
    %v893 = vpop.permute.xlu0 %892
    %v894 = vsel %vm814, %v891, 0
    %v896 = vsel %vm814, %v893, 0
    %898 = vmatpush.xpose.msra.mxu0 0.0
    %899 = vmatpush.xpose.msra.mxu0 0.0
    %900 = vmatpush.xpose.msra.mxu0 0.0
    %901 = vmatpush.xpose.msra.mxu0 0.0
    %902 = vmatpush.xpose.msra.mxu0 0.0
    %903 = vmatpush.xpose.msra.mxu0 0.0
    %904 = vmatpush.xpose.msra.mxu0 0.0
    %905 = vmatpush.xpose.msra.mxu0 0.0
    %906 = vmatpush.xpose.msra.mxu0 0.0
    %907 = vmatpush.xpose.msra.mxu0 0.0
    %908 = vmatpush.xpose.msra.mxu0 0.0
    %909 = vmatpush.xpose.msra.mxu0 0.0
    %910 = vmatpush.xpose.msra.mxu0 0.0
    %911 = vmatpush.xpose.msra.mxu0 0.0
    %912 = vmatpush.xpose.msra.mxu0 0.0
    %913 = vmatpush.xpose.msra.mxu0 %v896
    %914 = vmatmul.f32.gmra.mxu0 %v894
    %v915 = vpop.f32.mrf.mxu0
    %v916 = vadd.f32 0.0, %v915
    %917 = vdwg.mxu0
    %v918 = vmul.f32 %v916, 0.35355338
    %v919 = vsel %vm814, %v918, -inf
    %920 = vmax.xlane.f32.xlu0 %v919
    %v921 = vpop.xlane.xlu0 %920
    %v922 = vsub.f32 %v918, %v921
    %v923 = vmul.f32 %v922, 1.442695
    %v924 = vpow.pop %v923
    %v925 = vsel %vm814, %v924, 0.0
    %926 = vadd.xlane.f32.xlu0 %v925
    %v927 = vpop.xlane.xlu0 %926
    %v928 = vrcp.pop %v927
    %v929 = vmul.f32 %v927, %v928
    %v930 = vsub.f32 1.0, %v929
    %v931 = vmul.f32 %v928, %v930
    %v932 = vadd.f32 %v928, %v931
    %vm933 = vweird.f32 %v927
    %vm934 = vweird.f32 %v928
    %vm935 = vmor %vm933, %vm934
    %v936 = vsel %vm935, %v928, %v932
    %v937 = vand.u32 2147483647, %v927
    %vm938 = vcmp.eq.f32.partialorder %v937, 8.507059e+37
    %v939 = vand.u32 %v927, 2147483648
    %v940 = vor.u32 1.1754944e-38, %v939
    %v941 = vsel %vm938, %v940, %v936
    %v942 = vmul.f32 %v924, %v941
    %943 = vrot.lane.b32.xlu0 %v806, 56
    %v944 = vpop.permute.xlu0 %943
    %v947 = vsel %vm814, %v942, 0
    %949 = vmatpush.msra.mxu0 0.0
    %950 = vmatpush.msra.mxu0 0.0
    %951 = vmatpush.msra.mxu0 0.0
    %952 = vmatpush.msra.mxu0 0.0
    %953 = vmatpush.msra.mxu0 0.0
    %954 = vmatpush.msra.mxu0 0.0
    %955 = vmatpush.msra.mxu0 0.0
    %956 = vmatpush.msra.mxu0 0.0
    %957 = vmatpush.msra.mxu0 0.0
    %958 = vmatpush.msra.mxu0 0.0
    %959 = vmatpush.msra.mxu0 0.0
    %960 = vmatpush.msra.mxu0 0.0
    %961 = vmatpush.msra.mxu0 0.0
    %962 = vmatpush.msra.mxu0 0.0
    %963 = vmatpush.msra.mxu0 0.0
    %964 = vmatpush.msra.mxu0 %v944
    %965 = vmatmul.f32.gmra.mxu0 %v947
    %v966 = vpop.f32.mrf.mxu0
    %v967 = vadd.f32 0.0, %v966
    %968 = vdwg.mxu0
    %969 = vrot.lane.b32.xlu0 %v806, 112
    %v970 = vpop.permute.xlu0 %969
    %971 = vrot.lane.b32.xlu0 %v806, 80
    %v972 = vpop.permute.xlu0 %971
    %v973 = vsel %vm814, %v970, 0
    %v975 = vsel %vm814, %v972, 0
    %977 = vmatpush.xpose.msra.mxu0 0.0
    %978 = vmatpush.xpose.msra.mxu0 0.0
    %979 = vmatpush.xpose.msra.mxu0 0.0
    %980 = vmatpush.xpose.msra.mxu0 0.0
    %981 = vmatpush.xpose.msra.mxu0 0.0
    %982 = vmatpush.xpose.msra.mxu0 0.0
    %983 = vmatpush.xpose.msra.mxu0 0.0
    %984 = vmatpush.xpose.msra.mxu0 0.0
    %985 = vmatpush.xpose.msra.mxu0 0.0
    %986 = vmatpush.xpose.msra.mxu0 0.0
    %987 = vmatpush.xpose.msra.mxu0 0.0
    %988 = vmatpush.xpose.msra.mxu0 0.0
    %989 = vmatpush.xpose.msra.mxu0 0.0
    %990 = vmatpush.xpose.msra.mxu0 0.0
    %991 = vmatpush.xpose.msra.mxu0 0.0
    %992 = vmatpush.xpose.msra.mxu0 %v975
    %993 = vmatmul.f32.gmra.mxu0 %v973
    %v994 = vpop.f32.mrf.mxu0
    %v995 = vadd.f32 0.0, %v994
    %996 = vdwg.mxu0
    %v997 = vmul.f32 %v995, 0.35355338
    %v998 = vsel %vm814, %v997, -inf
    %999 = vmax.xlane.f32.xlu0 %v998
    %v1000 = vpop.xlane.xlu0 %999
    %v1001 = vsub.f32 %v997, %v1000
    %v1002 = vmul.f32 %v1001, 1.442695
    %v1003 = vpow.pop %v1002
    %v1004 = vsel %vm814, %v1003, 0.0
    %1005 = vadd.xlane.f32.xlu0 %v1004
    %v1006 = vpop.xlane.xlu0 %1005
    %v1007 = vrcp.pop %v1006
    %v1008 = vmul.f32 %v1006, %v1007
    %v1009 = vsub.f32 1.0, %v1008
    %v1010 = vmul.f32 %v1007, %v1009
    %v1011 = vadd.f32 %v1007, %v1010
    %vm1012 = vweird.f32 %v1006
    %vm1013 = vweird.f32 %v1007
    %vm1014 = vmor %vm1012, %vm1013
    %v1015 = vsel %vm1014, %v1007, %v1011
    %v1016 = vand.u32 2147483647, %v1006
    %vm1017 = vcmp.eq.f32.partialorder %v1016, 8.507059e+37
    %v1018 = vand.u32 %v1006, 2147483648
    %v1019 = vor.u32 1.1754944e-38, %v1018
    %v1020 = vsel %vm1017, %v1019, %v1015
    %v1021 = vmul.f32 %v1003, %v1020
    %1022 = vrot.lane.b32.xlu0 %v806, 48
    %v1023 = vpop.permute.xlu0 %1022
    %v1026 = vsel %vm814, %v1021, 0
    %1028 = vmatpush.msra.mxu0 0.0
    %1029 = vmatpush.msra.mxu0 0.0
    %1030 = vmatpush.msra.mxu0 0.0
    %1031 = vmatpush.msra.mxu0 0.0
    %1032 = vmatpush.msra.mxu0 0.0
    %1033 = vmatpush.msra.mxu0 0.0
    %1034 = vmatpush.msra.mxu0 0.0
    %1035 = vmatpush.msra.mxu0 0.0
    %1036 = vmatpush.msra.mxu0 0.0
    %1037 = vmatpush.msra.mxu0 0.0
    %1038 = vmatpush.msra.mxu0 0.0
    %1039 = vmatpush.msra.mxu0 0.0
    %1040 = vmatpush.msra.mxu0 0.0
    %1041 = vmatpush.msra.mxu0 0.0
    %1042 = vmatpush.msra.mxu0 0.0
    %1043 = vmatpush.msra.mxu0 %v1023
    %1044 = vmatmul.f32.gmra.mxu0 %v1026
    %v1045 = vpop.f32.mrf.mxu0
    %v1046 = vadd.f32 0.0, %v1045
    %1047 = vdwg.mxu0
    %1048 = vrot.lane.b32.xlu0 %v806, 104
    %v1049 = vpop.permute.xlu0 %1048
    %1050 = vrot.lane.b32.xlu0 %v806, 72
    %v1051 = vpop.permute.xlu0 %1050
    %v1052 = vsel %vm814, %v1049, 0
    %v1054 = vsel %vm814, %v1051, 0
    %1056 = vmatpush.xpose.msra.mxu0 0.0
    %1057 = vmatpush.xpose.msra.mxu0 0.0
    %1058 = vmatpush.xpose.msra.mxu0 0.0
    %1059 = vmatpush.xpose.msra.mxu0 0.0
    %1060 = vmatpush.xpose.msra.mxu0 0.0
    %1061 = vmatpush.xpose.msra.mxu0 0.0
    %1062 = vmatpush.xpose.msra.mxu0 0.0
    %1063 = vmatpush.xpose.msra.mxu0 0.0
    %1064 = vmatpush.xpose.msra.mxu0 0.0
    %1065 = vmatpush.xpose.msra.mxu0 0.0
    %1066 = vmatpush.xpose.msra.mxu0 0.0
    %1067 = vmatpush.xpose.msra.mxu0 0.0
    %1068 = vmatpush.xpose.msra.mxu0 0.0
    %1069 = vmatpush.xpose.msra.mxu0 0.0
    %1070 = vmatpush.xpose.msra.mxu0 0.0
    %1071 = vmatpush.xpose.msra.mxu0 %v1054
    %1072 = vmatmul.f32.gmra.mxu0 %v1052
    %v1073 = vpop.f32.mrf.mxu0
    %v1074 = vadd.f32 0.0, %v1073
    %1075 = vdwg.mxu0
    %v1076 = vmul.f32 %v1074, 0.35355338
    %v1077 = vsel %vm814, %v1076, -inf
    %1078 = vmax.xlane.f32.xlu0 %v1077
    %v1079 = vpop.xlane.xlu0 %1078
    %v1080 = vsub.f32 %v1076, %v1079
    %v1081 = vmul.f32 %v1080, 1.442695
    %v1082 = vpow.pop %v1081
    %v1083 = vsel %vm814, %v1082, 0.0
    %1084 = vadd.xlane.f32.xlu0 %v1083
    %v1085 = vpop.xlane.xlu0 %1084
    %v1086 = vrcp.pop %v1085
    %v1087 = vmul.f32 %v1085, %v1086
    %v1088 = vsub.f32 1.0, %v1087
    %v1089 = vmul.f32 %v1086, %v1088
    %v1090 = vadd.f32 %v1086, %v1089
    %vm1091 = vweird.f32 %v1085
    %vm1092 = vweird.f32 %v1086
    %vm1093 = vmor %vm1091, %vm1092
    %v1094 = vsel %vm1093, %v1086, %v1090
    %v1095 = vand.u32 2147483647, %v1085
    %vm1096 = vcmp.eq.f32.partialorder %v1095, 8.507059e+37
    %v1097 = vand.u32 %v1085, 2147483648
    %v1098 = vor.u32 1.1754944e-38, %v1097
    %v1099 = vsel %vm1096, %v1098, %v1094
    %v1100 = vmul.f32 %v1082, %v1099
    %1101 = vrot.lane.b32.xlu0 %v806, 40
    %v1102 = vpop.permute.xlu0 %1101
    %v1105 = vsel %vm814, %v1100, 0
    %1107 = vmatpush.msra.mxu0 0.0
    %1108 = vmatpush.msra.mxu0 0.0
    %1109 = vmatpush.msra.mxu0 0.0
    %1110 = vmatpush.msra.mxu0 0.0
    %1111 = vmatpush.msra.mxu0 0.0
    %1112 = vmatpush.msra.mxu0 0.0
    %1113 = vmatpush.msra.mxu0 0.0
    %1114 = vmatpush.msra.mxu0 0.0
    %1115 = vmatpush.msra.mxu0 0.0
    %1116 = vmatpush.msra.mxu0 0.0
    %1117 = vmatpush.msra.mxu0 0.0
    %1118 = vmatpush.msra.mxu0 0.0
    %1119 = vmatpush.msra.mxu0 0.0
    %1120 = vmatpush.msra.mxu0 0.0
    %1121 = vmatpush.msra.mxu0 0.0
    %1122 = vmatpush.msra.mxu0 %v1102
    %1123 = vmatmul.f32.gmra.mxu0 %v1105
    %v1124 = vpop.f32.mrf.mxu0
    %v1125 = vadd.f32 0.0, %v1124
    %1126 = vdwg.mxu0
    %1128 = vrot.lane.b32.xlu0 %v967, 8
    %v1129 = vpop.permute.xlu0 %1128
    %1132 = vrot.lane.b32.xlu0 %v1046, 16
    %v1133 = vpop.permute.xlu0 %1132
    %1136 = vrot.lane.b32.xlu0 %v1125, 24
    %v1137 = vpop.permute.xlu0 %1136
    %v1139 = vsel %vm814, %v888, %v1129
    %vm1140 = vcmask 130048
    %v1141 = vsel %vm1140, %v1139, %v1133
    %vm1142 = vcmask 195584
    %v1143 = vsel %vm1142, %v1141, %v1137
    %1145 = vrot.lane.b32.xlu0 %v809, 96
    %v1146 = vpop.permute.xlu0 %1145
    %v1147 = vsel %vm814, %v809, 0
    %v1149 = vsel %vm814, %v1146, 0
    %1151 = vmatpush.xpose.msra.mxu0 0.0
    %1152 = vmatpush.xpose.msra.mxu0 0.0
    %1153 = vmatpush.xpose.msra.mxu0 0.0
    %1154 = vmatpush.xpose.msra.mxu0 0.0
    %1155 = vmatpush.xpose.msra.mxu0 0.0
    %1156 = vmatpush.xpose.msra.mxu0 0.0
    %1157 = vmatpush.xpose.msra.mxu0 0.0
    %1158 = vmatpush.xpose.msra.mxu0 0.0
    %1159 = vmatpush.xpose.msra.mxu0 0.0
    %1160 = vmatpush.xpose.msra.mxu0 0.0
    %1161 = vmatpush.xpose.msra.mxu0 0.0
    %1162 = vmatpush.xpose.msra.mxu0 0.0
    %1163 = vmatpush.xpose.msra.mxu0 0.0
    %1164 = vmatpush.xpose.msra.mxu0 0.0
    %1165 = vmatpush.xpose.msra.mxu0 0.0
    %1166 = vmatpush.xpose.msra.mxu0 %v1149
    %1167 = vmatmul.f32.gmra.mxu0 %v1147
    %v1168 = vpop.f32.mrf.mxu0
    %v1169 = vadd.f32 0.0, %v1168
    %1170 = vdwg.mxu0
    %v1171 = vmul.f32 %v1169, 0.35355338
    %v1172 = vsel %vm814, %v1171, -inf
    %1173 = vmax.xlane.f32.xlu0 %v1172
    %v1174 = vpop.xlane.xlu0 %1173
    %v1175 = vsub.f32 %v1171, %v1174
    %v1176 = vmul.f32 %v1175, 1.442695
    %v1177 = vpow.pop %v1176
    %v1178 = vsel %vm814, %v1177, 0.0
    %1179 = vadd.xlane.f32.xlu0 %v1178
    %v1180 = vpop.xlane.xlu0 %1179
    %v1181 = vrcp.pop %v1180
    %v1182 = vmul.f32 %v1180, %v1181
    %v1183 = vsub.f32 1.0, %v1182
    %v1184 = vmul.f32 %v1181, %v1183
    %v1185 = vadd.f32 %v1181, %v1184
    %vm1186 = vweird.f32 %v1180
    %vm1187 = vweird.f32 %v1181
    %vm1188 = vmor %vm1186, %vm1187
    %v1189 = vsel %vm1188, %v1181, %v1185
    %v1190 = vand.u32 2147483647, %v1180
    %vm1191 = vcmp.eq.f32.partialorder %v1190, 8.507059e+37
    %v1192 = vand.u32 %v1180, 2147483648
    %v1193 = vor.u32 1.1754944e-38, %v1192
    %v1194 = vsel %vm1191, %v1193, %v1189
    %v1195 = vmul.f32 %v1177, %v1194
    %1196 = vrot.lane.b32.xlu0 %v809, 64
    %v1197 = vpop.permute.xlu0 %1196
    %v1200 = vsel %vm814, %v1195, 0
    %1202 = vmatpush.msra.mxu0 0.0
    %1203 = vmatpush.msra.mxu0 0.0
    %1204 = vmatpush.msra.mxu0 0.0
    %1205 = vmatpush.msra.mxu0 0.0
    %1206 = vmatpush.msra.mxu0 0.0
    %1207 = vmatpush.msra.mxu0 0.0
    %1208 = vmatpush.msra.mxu0 0.0
    %1209 = vmatpush.msra.mxu0 0.0
    %1210 = vmatpush.msra.mxu0 0.0
    %1211 = vmatpush.msra.mxu0 0.0
    %1212 = vmatpush.msra.mxu0 0.0
    %1213 = vmatpush.msra.mxu0 0.0
    %1214 = vmatpush.msra.mxu0 0.0
    %1215 = vmatpush.msra.mxu0 0.0
    %1216 = vmatpush.msra.mxu0 0.0
    %1217 = vmatpush.msra.mxu0 %v1197
    %1218 = vmatmul.f32.gmra.mxu0 %v1200
    %v1219 = vpop.f32.mrf.mxu0
    %v1220 = vadd.f32 0.0, %v1219
    %1221 = vdwg.mxu0
    %1222 = vrot.lane.b32.xlu0 %v809, 120
    %v1223 = vpop.permute.xlu0 %1222
    %1224 = vrot.lane.b32.xlu0 %v809, 88
    %v1225 = vpop.permute.xlu0 %1224
    %v1226 = vsel %vm814, %v1223, 0
    %v1228 = vsel %vm814, %v1225, 0
    %1230 = vmatpush.xpose.msra.mxu0 0.0
    %1231 = vmatpush.xpose.msra.mxu0 0.0
    %1232 = vmatpush.xpose.msra.mxu0 0.0
    %1233 = vmatpush.xpose.msra.mxu0 0.0
    %1234 = vmatpush.xpose.msra.mxu0 0.0
    %1235 = vmatpush.xpose.msra.mxu0 0.0
    %1236 = vmatpush.xpose.msra.mxu0 0.0
    %1237 = vmatpush.xpose.msra.mxu0 0.0
    %1238 = vmatpush.xpose.msra.mxu0 0.0
    %1239 = vmatpush.xpose.msra.mxu0 0.0
    %1240 = vmatpush.xpose.msra.mxu0 0.0
    %1241 = vmatpush.xpose.msra.mxu0 0.0
    %1242 = vmatpush.xpose.msra.mxu0 0.0
    %1243 = vmatpush.xpose.msra.mxu0 0.0
    %1244 = vmatpush.xpose.msra.mxu0 0.0
    %1245 = vmatpush.xpose.msra.mxu0 %v1228
    %1246 = vmatmul.f32.gmra.mxu0 %v1226
    %v1247 = vpop.f32.mrf.mxu0
    %v1248 = vadd.f32 0.0, %v1247
    %1249 = vdwg.mxu0
    %v1250 = vmul.f32 %v1248, 0.35355338
    %v1251 = vsel %vm814, %v1250, -inf
    %1252 = vmax.xlane.f32.xlu0 %v1251
    %v1253 = vpop.xlane.xlu0 %1252
    %v1254 = vsub.f32 %v1250, %v1253
    %v1255 = vmul.f32 %v1254, 1.442695
    %v1256 = vpow.pop %v1255
    %v1257 = vsel %vm814, %v1256, 0.0
    %1258 = vadd.xlane.f32.xlu0 %v1257
    %v1259 = vpop.xlane.xlu0 %1258
    %v1260 = vrcp.pop %v1259
    %v1261 = vmul.f32 %v1259, %v1260
    %v1262 = vsub.f32 1.0, %v1261
    %v1263 = vmul.f32 %v1260, %v1262
    %v1264 = vadd.f32 %v1260, %v1263
    %vm1265 = vweird.f32 %v1259
    %vm1266 = vweird.f32 %v1260
    %vm1267 = vmor %vm1265, %vm1266
    %v1268 = vsel %vm1267, %v1260, %v1264
    %v1269 = vand.u32 2147483647, %v1259
    %vm1270 = vcmp.eq.f32.partialorder %v1269, 8.507059e+37
    %v1271 = vand.u32 %v1259, 2147483648
    %v1272 = vor.u32 1.1754944e-38, %v1271
    %v1273 = vsel %vm1270, %v1272, %v1268
    %v1274 = vmul.f32 %v1256, %v1273
    %1275 = vrot.lane.b32.xlu0 %v809, 56
    %v1276 = vpop.permute.xlu0 %1275
    %v1279 = vsel %vm814, %v1274, 0
    %1281 = vmatpush.msra.mxu0 0.0
    %1282 = vmatpush.msra.mxu0 0.0
    %1283 = vmatpush.msra.mxu0 0.0
    %1284 = vmatpush.msra.mxu0 0.0
    %1285 = vmatpush.msra.mxu0 0.0
    %1286 = vmatpush.msra.mxu0 0.0
    %1287 = vmatpush.msra.mxu0 0.0
    %1288 = vmatpush.msra.mxu0 0.0
    %1289 = vmatpush.msra.mxu0 0.0
    %1290 = vmatpush.msra.mxu0 0.0
    %1291 = vmatpush.msra.mxu0 0.0
    %1292 = vmatpush.msra.mxu0 0.0
    %1293 = vmatpush.msra.mxu0 0.0
    %1294 = vmatpush.msra.mxu0 0.0
    %1295 = vmatpush.msra.mxu0 0.0
    %1296 = vmatpush.msra.mxu0 %v1276
    %1297 = vmatmul.f32.gmra.mxu0 %v1279
    %v1298 = vpop.f32.mrf.mxu0
    %v1299 = vadd.f32 0.0, %v1298
    %1300 = vdwg.mxu0
    %1301 = vrot.lane.b32.xlu0 %v809, 112
    %v1302 = vpop.permute.xlu0 %1301
    %1303 = vrot.lane.b32.xlu0 %v809, 80
    %v1304 = vpop.permute.xlu0 %1303
    %v1305 = vsel %vm814, %v1302, 0
    %v1307 = vsel %vm814, %v1304, 0
    %1309 = vmatpush.xpose.msra.mxu0 0.0
    %1310 = vmatpush.xpose.msra.mxu0 0.0
    %1311 = vmatpush.xpose.msra.mxu0 0.0
    %1312 = vmatpush.xpose.msra.mxu0 0.0
    %1313 = vmatpush.xpose.msra.mxu0 0.0
    %1314 = vmatpush.xpose.msra.mxu0 0.0
    %1315 = vmatpush.xpose.msra.mxu0 0.0
    %1316 = vmatpush.xpose.msra.mxu0 0.0
    %1317 = vmatpush.xpose.msra.mxu0 0.0
    %1318 = vmatpush.xpose.msra.mxu0 0.0
    %1319 = vmatpush.xpose.msra.mxu0 0.0
    %1320 = vmatpush.xpose.msra.mxu0 0.0
    %1321 = vmatpush.xpose.msra.mxu0 0.0
    %1322 = vmatpush.xpose.msra.mxu0 0.0
    %1323 = vmatpush.xpose.msra.mxu0 0.0
    %1324 = vmatpush.xpose.msra.mxu0 %v1307
    %1325 = vmatmul.f32.gmra.mxu0 %v1305
    %v1326 = vpop.f32.mrf.mxu0
    %v1327 = vadd.f32 0.0, %v1326
    %1328 = vdwg.mxu0
    %v1329 = vmul.f32 %v1327, 0.35355338
    %v1330 = vsel %vm814, %v1329, -inf
    %1331 = vmax.xlane.f32.xlu0 %v1330
    %v1332 = vpop.xlane.xlu0 %1331
    %v1333 = vsub.f32 %v1329, %v1332
    %v1334 = vmul.f32 %v1333, 1.442695
    %v1335 = vpow.pop %v1334
    %v1336 = vsel %vm814, %v1335, 0.0
    %1337 = vadd.xlane.f32.xlu0 %v1336
    %v1338 = vpop.xlane.xlu0 %1337
    %v1339 = vrcp.pop %v1338
    %v1340 = vmul.f32 %v1338, %v1339
    %v1341 = vsub.f32 1.0, %v1340
    %v1342 = vmul.f32 %v1339, %v1341
    %v1343 = vadd.f32 %v1339, %v1342
    %vm1344 = vweird.f32 %v1338
    %vm1345 = vweird.f32 %v1339
    %vm1346 = vmor %vm1344, %vm1345
    %v1347 = vsel %vm1346, %v1339, %v1343
    %v1348 = vand.u32 2147483647, %v1338
    %vm1349 = vcmp.eq.f32.partialorder %v1348, 8.507059e+37
    %v1350 = vand.u32 %v1338, 2147483648
    %v1351 = vor.u32 1.1754944e-38, %v1350
    %v1352 = vsel %vm1349, %v1351, %v1347
    %v1353 = vmul.f32 %v1335, %v1352
    %1354 = vrot.lane.b32.xlu0 %v809, 48
    %v1355 = vpop.permute.xlu0 %1354
    %v1358 = vsel %vm814, %v1353, 0
    %1360 = vmatpush.msra.mxu0 0.0
    %1361 = vmatpush.msra.mxu0 0.0
    %1362 = vmatpush.msra.mxu0 0.0
    %1363 = vmatpush.msra.mxu0 0.0
    %1364 = vmatpush.msra.mxu0 0.0
    %1365 = vmatpush.msra.mxu0 0.0
    %1366 = vmatpush.msra.mxu0 0.0
    %1367 = vmatpush.msra.mxu0 0.0
    %1368 = vmatpush.msra.mxu0 0.0
    %1369 = vmatpush.msra.mxu0 0.0
    %1370 = vmatpush.msra.mxu0 0.0
    %1371 = vmatpush.msra.mxu0 0.0
    %1372 = vmatpush.msra.mxu0 0.0
    %1373 = vmatpush.msra.mxu0 0.0
    %1374 = vmatpush.msra.mxu0 0.0
    %1375 = vmatpush.msra.mxu0 %v1355
    %1376 = vmatmul.f32.gmra.mxu0 %v1358
    %v1377 = vpop.f32.mrf.mxu0
    %v1378 = vadd.f32 0.0, %v1377
    %1379 = vdwg.mxu0
    %1380 = vrot.lane.b32.xlu0 %v809, 104
    %v1381 = vpop.permute.xlu0 %1380
    %1382 = vrot.lane.b32.xlu0 %v809, 72
    %v1383 = vpop.permute.xlu0 %1382
    %v1384 = vsel %vm814, %v1381, 0
    %v1386 = vsel %vm814, %v1383, 0
    %1388 = vmatpush.xpose.msra.mxu0 0.0
    %1389 = vmatpush.xpose.msra.mxu0 0.0
    %1390 = vmatpush.xpose.msra.mxu0 0.0
    %1391 = vmatpush.xpose.msra.mxu0 0.0
    %1392 = vmatpush.xpose.msra.mxu0 0.0
    %1393 = vmatpush.xpose.msra.mxu0 0.0
    %1394 = vmatpush.xpose.msra.mxu0 0.0
    %1395 = vmatpush.xpose.msra.mxu0 0.0
    %1396 = vmatpush.xpose.msra.mxu0 0.0
    %1397 = vmatpush.xpose.msra.mxu0 0.0
    %1398 = vmatpush.xpose.msra.mxu0 0.0
    %1399 = vmatpush.xpose.msra.mxu0 0.0
    %1400 = vmatpush.xpose.msra.mxu0 0.0
    %1401 = vmatpush.xpose.msra.mxu0 0.0
    %1402 = vmatpush.xpose.msra.mxu0 0.0
    %1403 = vmatpush.xpose.msra.mxu0 %v1386
    %1404 = vmatmul.f32.gmra.mxu0 %v1384
    %v1405 = vpop.f32.mrf.mxu0
    %v1406 = vadd.f32 0.0, %v1405
    %1407 = vdwg.mxu0
    %v1408 = vmul.f32 %v1406, 0.35355338
    %v1409 = vsel %vm814, %v1408, -inf
    %1410 = vmax.xlane.f32.xlu0 %v1409
    %v1411 = vpop.xlane.xlu0 %1410
    %v1412 = vsub.f32 %v1408, %v1411
    %v1413 = vmul.f32 %v1412, 1.442695
    %v1414 = vpow.pop %v1413
    %v1415 = vsel %vm814, %v1414, 0.0
    %1416 = vadd.xlane.f32.xlu0 %v1415
    %v1417 = vpop.xlane.xlu0 %1416
    %v1418 = vrcp.pop %v1417
    %v1419 = vmul.f32 %v1417, %v1418
    %v1420 = vsub.f32 1.0, %v1419
    %v1421 = vmul.f32 %v1418, %v1420
    %v1422 = vadd.f32 %v1418, %v1421
    %vm1423 = vweird.f32 %v1417
    %vm1424 = vweird.f32 %v1418
    %vm1425 = vmor %vm1423, %vm1424
    %v1426 = vsel %vm1425, %v1418, %v1422
    %v1427 = vand.u32 2147483647, %v1417
    %vm1428 = vcmp.eq.f32.partialorder %v1427, 8.507059e+37
    %v1429 = vand.u32 %v1417, 2147483648
    %v1430 = vor.u32 1.1754944e-38, %v1429
    %v1431 = vsel %vm1428, %v1430, %v1426
    %v1432 = vmul.f32 %v1414, %v1431
    %1433 = vrot.lane.b32.xlu0 %v809, 40
    %v1434 = vpop.permute.xlu0 %1433
    %v1437 = vsel %vm814, %v1432, 0
    %1439 = vmatpush.msra.mxu0 0.0
    %1440 = vmatpush.msra.mxu0 0.0
    %1441 = vmatpush.msra.mxu0 0.0
    %1442 = vmatpush.msra.mxu0 0.0
    %1443 = vmatpush.msra.mxu0 0.0
    %1444 = vmatpush.msra.mxu0 0.0
    %1445 = vmatpush.msra.mxu0 0.0
    %1446 = vmatpush.msra.mxu0 0.0
    %1447 = vmatpush.msra.mxu0 0.0
    %1448 = vmatpush.msra.mxu0 0.0
    %1449 = vmatpush.msra.mxu0 0.0
    %1450 = vmatpush.msra.mxu0 0.0
    %1451 = vmatpush.msra.mxu0 0.0
    %1452 = vmatpush.msra.mxu0 0.0
    %1453 = vmatpush.msra.mxu0 0.0
    %1454 = vmatpush.msra.mxu0 %v1434
    %1455 = vmatmul.f32.gmra.mxu0 %v1437
    %v1456 = vpop.f32.mrf.mxu0
    %v1457 = vadd.f32 0.0, %v1456
    %1458 = vdwg.mxu0
    %1460 = vrot.lane.b32.xlu0 %v1299, 8
    %v1461 = vpop.permute.xlu0 %1460
    %1464 = vrot.lane.b32.xlu0 %v1378, 16
    %v1465 = vpop.permute.xlu0 %1464
    %1468 = vrot.lane.b32.xlu0 %v1457, 24
    %v1469 = vpop.permute.xlu0 %1468
    %v1471 = vsel %vm814, %v1220, %v1461
    %v1472 = vsel %vm1140, %v1471, %v1465
    %v1473 = vsel %vm1142, %v1472, %v1469
    %v1475 = vperm.slane %v505, 0
    %v1478 = vsel %vm608, %v1143, 0
    %v1481 = vsel %vm608, %v1473, 0
    %1483 = vmatpush.msra.mxu0 0.0
    %1484 = vmatpush.msra.mxu0 0.0
    %1485 = vmatpush.msra.mxu0 0.0
    %1486 = vmatpush.msra.mxu0 0.0
    %1487 = vmatpush.msra.mxu0 0.0
    %1488 = vmatpush.msra.mxu0 0.0
    %1489 = vmatpush.msra.mxu0 0.0
    %1490 = vmatpush.msra.mxu0 0.0
    %1491 = vmatpush.msra.mxu0 0.0
    %1492 = vmatpush.msra.mxu0 0.0
    %1493 = vmatpush.msra.mxu0 0.0
    %1494 = vmatpush.msra.mxu0 0.0
    %1495 = vmatpush.msra.mxu0 %v504
    %1496 = vmatpush.msra.mxu0 %v503
    %1497 = vmatpush.msra.mxu0 %v502
    %1498 = vmatpush.msra.mxu0 %v501
    %1499 = vmatmul.f32.gmra.mxu0 %v1478
    %v1500 = vpop.f32.mrf.mxu0
    %v1501 = vadd.f32 %v1475, %v1500
    %1502 = vmatmul.f32.gmra.mxu0 %v1481
    %v1503 = vpop.f32.mrf.mxu0
    %v1504 = vadd.f32 %v1475, %v1503
    %1505 = vdwg.mxu0
    %v1506 = vadd.f32 %v777, %v1501
    %v1507 = vadd.f32 %v778, %v1504
    %v1508 = vsel %vm608, %v1506, 0.0
    %1509 = vadd.xlane.f32.xlu0 %v1508
    %v1510 = vpop.xlane.xlu0 %1509
    %v1511 = vsel %vm608, %v1507, 0.0
    %1512 = vadd.xlane.f32.xlu0 %v1511
    %v1513 = vpop.xlane.xlu0 %1512
    %v1514 = vmul.f32 %v1510, %v650
    %v1515 = vmul.f32 %v1513, %v650
    %v1516 = vsub.f32 %v1506, %v1514
    %v1517 = vsub.f32 %v1507, %v1515
    %v1518 = vmul.f32 %v1516, %v1516
    %v1519 = vmul.f32 %v1517, %v1517
    %v1520 = vsel %vm608, %v1518, 0.0
    %1521 = vadd.xlane.f32.xlu0 %v1520
    %v1522 = vpop.xlane.xlu0 %1521
    %v1523 = vsel %vm608, %v1519, 0.0
    %1524 = vadd.xlane.f32.xlu0 %v1523
    %v1525 = vpop.xlane.xlu0 %1524
    %v1526 = vmul.f32 %v1522, %v650
    %v1527 = vmul.f32 %v1525, %v650
    %v1528 = vadd.f32 %v1526, 1e-05
    %v1529 = vadd.f32 %v1527, 1e-05
    %v1530 = vrsqrt.pop %v1528
    %v1531 = vmul.f32 %v1530, %v1528
    %v1532 = vmul.f32 %v1531, %v1530
    %v1533 = vmul.f32 0.5, %v1532
    %v1534 = vsub.f32 1.5, %v1533
    %v1535 = vmul.f32 %v1530, %v1534
    %vm1536 = vweird.f32 %v1528
    %vm1537 = vweird.f32 %v1530
    %vm1538 = vmor %vm1536, %vm1537
    %v1539 = vsel %vm1538, %v1530, %v1535
    %v1540 = vrsqrt.pop %v1529
    %v1541 = vmul.f32 %v1540, %v1529
    %v1542 = vmul.f32 %v1541, %v1540
    %v1543 = vmul.f32 0.5, %v1542
    %v1544 = vsub.f32 1.5, %v1543
    %v1545 = vmul.f32 %v1540, %v1544
    %vm1546 = vweird.f32 %v1529
    %vm1547 = vweird.f32 %v1540
    %vm1548 = vmor %vm1546, %vm1547
    %v1549 = vsel %vm1548, %v1540, %v1545
    %v1550 = vmul.f32 %v1516, %v1539
    %v1551 = vmul.f32 %v1517, %v1549
    %v1553 = vperm.slane %v506, 0
    %v1555 = vmul.f32 %v1550, %v1553
    %v1556 = vmul.f32 %v1551, %v1553
    %v1558 = vperm.slane %v507, 0
    %v1560 = vadd.f32 %v1555, %v1558
    %v1561 = vadd.f32 %v1556, %v1558
    %v1563 = vperm.slane %v512, 0
    %v1566 = vsel %vm608, %v1560, 0
    %v1569 = vsel %vm608, %v1561, 0
    %1571 = vmatpush.msra.mxu0 0.0
    %1572 = vmatpush.msra.mxu0 0.0
    %1573 = vmatpush.msra.mxu0 0.0
    %1574 = vmatpush.msra.mxu0 0.0
    %1575 = vmatpush.msra.mxu0 0.0
    %1576 = vmatpush.msra.mxu0 0.0
    %1577 = vmatpush.msra.mxu0 0.0
    %1578 = vmatpush.msra.mxu0 0.0
    %1579 = vmatpush.msra.mxu0 0.0
    %1580 = vmatpush.msra.mxu0 0.0
    %1581 = vmatpush.msra.mxu0 0.0
    %1582 = vmatpush.msra.mxu0 0.0
    %1583 = vmatpush.msra.mxu0 %v511
    %1584 = vmatpush.msra.mxu0 %v510
    %1585 = vmatpush.msra.mxu0 %v509
    %1586 = vmatpush.msra.mxu0 %v508
    %1587 = vmatmul.f32.gmra.mxu0 %v1566
    %v1588 = vpop.f32.mrf.mxu0
    %v1589 = vadd.f32 %v1563, %v1588
    %1590 = vmatmul.f32.gmra.mxu0 %v1569
    %v1591 = vpop.f32.mrf.mxu0
    %v1592 = vadd.f32 %v1563, %v1591
    %1593 = vdwg.mxu0
    %v1594 = vmax.f32 %v1589, 0.0
    %v1595 = vmax.f32 %v1592, 0.0
    %v1597 = vperm.slane %v521, 0
    %vm1599 = vcmask 523264
    %v1601 = vsel %vm1599, %v1594, 0
    %v1604 = vsel %vm1599, %v1595, 0
    %1606 = vmatpush.msra.mxu0 0.0
    %1607 = vmatpush.msra.mxu0 0.0
    %1608 = vmatpush.msra.mxu0 0.0
    %1609 = vmatpush.msra.mxu0 0.0
    %1610 = vmatpush.msra.mxu0 0.0
    %1611 = vmatpush.msra.mxu0 0.0
    %1612 = vmatpush.msra.mxu0 0.0
    %1613 = vmatpush.msra.mxu0 0.0
    %1614 = vmatpush.msra.mxu0 %v520
    %1615 = vmatpush.msra.mxu0 %v519
    %1616 = vmatpush.msra.mxu0 %v518
    %1617 = vmatpush.msra.mxu0 %v517
    %1618 = vmatpush.msra.mxu0 %v516
    %1619 = vmatpush.msra.mxu0 %v515
    %1620 = vmatpush.msra.mxu0 %v514
    %1621 = vmatpush.msra.mxu0 %v513
    %1622 = vmatmul.f32.gmra.mxu0 %v1601
    %v1623 = vpop.f32.mrf.mxu0
    %v1624 = vadd.f32 %v1597, %v1623
    %1625 = vmatmul.f32.gmra.mxu0 %v1604
    %v1626 = vpop.f32.mrf.mxu0
    %v1627 = vadd.f32 %v1597, %v1626
    %1628 = vdwg.mxu0
    %v1629 = vadd.f32 %v1560, %v1624
    %v1630 = vadd.f32 %v1561, %v1627
    %v1631 = vsel %vm608, %v1629, 0.0
    %1632 = vadd.xlane.f32.xlu0 %v1631
    %v1633 = vpop.xlane.xlu0 %1632
    %v1634 = vsel %vm608, %v1630, 0.0
    %1635 = vadd.xlane.f32.xlu0 %v1634
    %v1636 = vpop.xlane.xlu0 %1635
    %v1637 = vmul.f32 %v1633, %v650
    %v1638 = vmul.f32 %v1636, %v650
    %v1639 = vsub.f32 %v1629, %v1637
    %v1640 = vsub.f32 %v1630, %v1638
    %v1641 = vmul.f32 %v1639, %v1639
    %v1642 = vmul.f32 %v1640, %v1640
    %v1643 = vsel %vm608, %v1641, 0.0
    %1644 = vadd.xlane.f32.xlu0 %v1643
    %v1645 = vpop.xlane.xlu0 %1644
    %v1646 = vsel %vm608, %v1642, 0.0
    %1647 = vadd.xlane.f32.xlu0 %v1646
    %v1648 = vpop.xlane.xlu0 %1647
    %v1649 = vmul.f32 %v1645, %v650
    %v1650 = vmul.f32 %v1648, %v650
    %v1651 = vadd.f32 %v1649, 1e-05
    %v1652 = vadd.f32 %v1650, 1e-05
    %v1653 = vrsqrt.pop %v1651
    %v1654 = vmul.f32 %v1653, %v1651
    %v1655 = vmul.f32 %v1654, %v1653
    %v1656 = vmul.f32 0.5, %v1655
    %v1657 = vsub.f32 1.5, %v1656
    %v1658 = vmul.f32 %v1653, %v1657
    %vm1659 = vweird.f32 %v1651
    %vm1660 = vweird.f32 %v1653
    %vm1661 = vmor %vm1659, %vm1660
    %v1662 = vsel %vm1661, %v1653, %v1658
    %v1663 = vrsqrt.pop %v1652
    %v1664 = vmul.f32 %v1663, %v1652
    %v1665 = vmul.f32 %v1664, %v1663
    %v1666 = vmul.f32 0.5, %v1665
    %v1667 = vsub.f32 1.5, %v1666
    %v1668 = vmul.f32 %v1663, %v1667
    %vm1669 = vweird.f32 %v1652
    %vm1670 = vweird.f32 %v1663
    %vm1671 = vmor %vm1669, %vm1670
    %v1672 = vsel %vm1671, %v1663, %v1668
    %v1673 = vmul.f32 %v1639, %v1662
    %v1674 = vmul.f32 %v1640, %v1672
    %v1676 = vperm.slane %v522, 0
    %v1678 = vmul.f32 %v1673, %v1676
    %v1679 = vmul.f32 %v1674, %v1676
    %v1681 = vperm.slane %v523, 0
    %v1683 = vadd.f32 %v1678, %v1681
    %v1684 = vadd.f32 %v1679, %v1681
    %v1686 = vperm.slane %v528, 0
    %v1689 = vsel %vm608, %v1683, 0
    %v1692 = vsel %vm608, %v1684, 0
    %1694 = vmatpush.msra.mxu0 0.0
    %1695 = vmatpush.msra.mxu0 0.0
    %1696 = vmatpush.msra.mxu0 0.0
    %1697 = vmatpush.msra.mxu0 0.0
    %1698 = vmatpush.msra.mxu0 0.0
    %1699 = vmatpush.msra.mxu0 0.0
    %1700 = vmatpush.msra.mxu0 0.0
    %1701 = vmatpush.msra.mxu0 0.0
    %1702 = vmatpush.msra.mxu0 0.0
    %1703 = vmatpush.msra.mxu0 0.0
    %1704 = vmatpush.msra.mxu0 0.0
    %1705 = vmatpush.msra.mxu0 0.0
    %1706 = vmatpush.msra.mxu0 %v527
    %1707 = vmatpush.msra.mxu0 %v526
    %1708 = vmatpush.msra.mxu0 %v525
    %1709 = vmatpush.msra.mxu0 %v524
    %1710 = vmatmul.f32.gmra.mxu0 %v1689
    %v1711 = vpop.f32.mrf.mxu0
    %v1712 = vadd.f32 %v1686, %v1711
    %1713 = vmatmul.f32.gmra.mxu0 %v1692
    %v1714 = vpop.f32.mrf.mxu0
    %v1715 = vadd.f32 %v1686, %v1714
    %1716 = vdwg.mxu0
    %1718 = vrot.lane.b32.xlu0 %v1712, 96
    %v1719 = vpop.permute.xlu0 %1718
    %v1720 = vsel %vm814, %v1712, 0
    %v1722 = vsel %vm814, %v1719, 0
    %1724 = vmatpush.xpose.msra.mxu0 0.0
    %1725 = vmatpush.xpose.msra.mxu0 0.0
    %1726 = vmatpush.xpose.msra.mxu0 0.0
    %1727 = vmatpush.xpose.msra.mxu0 0.0
    %1728 = vmatpush.xpose.msra.mxu0 0.0
    %1729 = vmatpush.xpose.msra.mxu0 0.0
    %1730 = vmatpush.xpose.msra.mxu0 0.0
    %1731 = vmatpush.xpose.msra.mxu0 0.0
    %1732 = vmatpush.xpose.msra.mxu0 0.0
    %1733 = vmatpush.xpose.msra.mxu0 0.0
    %1734 = vmatpush.xpose.msra.mxu0 0.0
    %1735 = vmatpush.xpose.msra.mxu0 0.0
    %1736 = vmatpush.xpose.msra.mxu0 0.0
    %1737 = vmatpush.xpose.msra.mxu0 0.0
    %1738 = vmatpush.xpose.msra.mxu0 0.0
    %1739 = vmatpush.xpose.msra.mxu0 %v1722
    %1740 = vmatmul.f32.gmra.mxu0 %v1720
    %v1741 = vpop.f32.mrf.mxu0
    %v1742 = vadd.f32 0.0, %v1741
    %1743 = vdwg.mxu0
    %v1744 = vmul.f32 %v1742, 0.35355338
    %v1745 = vsel %vm814, %v1744, -inf
    %1746 = vmax.xlane.f32.xlu0 %v1745
    %v1747 = vpop.xlane.xlu0 %1746
    %v1748 = vsub.f32 %v1744, %v1747
    %v1749 = vmul.f32 %v1748, 1.442695
    %v1750 = vpow.pop %v1749
    %v1751 = vsel %vm814, %v1750, 0.0
    %1752 = vadd.xlane.f32.xlu0 %v1751
    %v1753 = vpop.xlane.xlu0 %1752
    %v1754 = vrcp.pop %v1753
    %v1755 = vmul.f32 %v1753, %v1754
    %v1756 = vsub.f32 1.0, %v1755
    %v1757 = vmul.f32 %v1754, %v1756
    %v1758 = vadd.f32 %v1754, %v1757
    %vm1759 = vweird.f32 %v1753
    %vm1760 = vweird.f32 %v1754
    %vm1761 = vmor %vm1759, %vm1760
    %v1762 = vsel %vm1761, %v1754, %v1758
    %v1763 = vand.u32 2147483647, %v1753
    %vm1764 = vcmp.eq.f32.partialorder %v1763, 8.507059e+37
    %v1765 = vand.u32 %v1753, 2147483648
    %v1766 = vor.u32 1.1754944e-38, %v1765
    %v1767 = vsel %vm1764, %v1766, %v1762
    %v1768 = vmul.f32 %v1750, %v1767
    %1769 = vrot.lane.b32.xlu0 %v1712, 64
    %v1770 = vpop.permute.xlu0 %1769
    %v1773 = vsel %vm814, %v1768, 0
    %1775 = vmatpush.msra.mxu0 0.0
    %1776 = vmatpush.msra.mxu0 0.0
    %1777 = vmatpush.msra.mxu0 0.0
    %1778 = vmatpush.msra.mxu0 0.0
    %1779 = vmatpush.msra.mxu0 0.0
    %1780 = vmatpush.msra.mxu0 0.0
    %1781 = vmatpush.msra.mxu0 0.0
    %1782 = vmatpush.msra.mxu0 0.0
    %1783 = vmatpush.msra.mxu0 0.0
    %1784 = vmatpush.msra.mxu0 0.0
    %1785 = vmatpush.msra.mxu0 0.0
    %1786 = vmatpush.msra.mxu0 0.0
    %1787 = vmatpush.msra.mxu0 0.0
    %1788 = vmatpush.msra.mxu0 0.0
    %1789 = vmatpush.msra.mxu0 0.0
    %1790 = vmatpush.msra.mxu0 %v1770
    %1791 = vmatmul.f32.gmra.mxu0 %v1773
    %v1792 = vpop.f32.mrf.mxu0
    %v1793 = vadd.f32 0.0, %v1792
    %1794 = vdwg.mxu0
    %1795 = vrot.lane.b32.xlu0 %v1712, 120
    %v1796 = vpop.permute.xlu0 %1795
    %1797 = vrot.lane.b32.xlu0 %v1712, 88
    %v1798 = vpop.permute.xlu0 %1797
    %v1799 = vsel %vm814, %v1796, 0
    %v1801 = vsel %vm814, %v1798, 0
    %1803 = vmatpush.xpose.msra.mxu0 0.0
    %1804 = vmatpush.xpose.msra.mxu0 0.0
    %1805 = vmatpush.xpose.msra.mxu0 0.0
    %1806 = vmatpush.xpose.msra.mxu0 0.0
    %1807 = vmatpush.xpose.msra.mxu0 0.0
    %1808 = vmatpush.xpose.msra.mxu0 0.0
    %1809 = vmatpush.xpose.msra.mxu0 0.0
    %1810 = vmatpush.xpose.msra.mxu0 0.0
    %1811 = vmatpush.xpose.msra.mxu0 0.0
    %1812 = vmatpush.xpose.msra.mxu0 0.0
    %1813 = vmatpush.xpose.msra.mxu0 0.0
    %1814 = vmatpush.xpose.msra.mxu0 0.0
    %1815 = vmatpush.xpose.msra.mxu0 0.0
    %1816 = vmatpush.xpose.msra.mxu0 0.0
    %1817 = vmatpush.xpose.msra.mxu0 0.0
    %1818 = vmatpush.xpose.msra.mxu0 %v1801
    %1819 = vmatmul.f32.gmra.mxu0 %v1799
    %v1820 = vpop.f32.mrf.mxu0
    %v1821 = vadd.f32 0.0, %v1820
    %1822 = vdwg.mxu0
    %v1823 = vmul.f32 %v1821, 0.35355338
    %v1824 = vsel %vm814, %v1823, -inf
    %1825 = vmax.xlane.f32.xlu0 %v1824
    %v1826 = vpop.xlane.xlu0 %1825
    %v1827 = vsub.f32 %v1823, %v1826
    %v1828 = vmul.f32 %v1827, 1.442695
    %v1829 = vpow.pop %v1828
    %v1830 = vsel %vm814, %v1829, 0.0
    %1831 = vadd.xlane.f32.xlu0 %v1830
    %v1832 = vpop.xlane.xlu0 %1831
    %v1833 = vrcp.pop %v1832
    %v1834 = vmul.f32 %v1832, %v1833
    %v1835 = vsub.f32 1.0, %v1834
    %v1836 = vmul.f32 %v1833, %v1835
    %v1837 = vadd.f32 %v1833, %v1836
    %vm1838 = vweird.f32 %v1832
    %vm1839 = vweird.f32 %v1833
    %vm1840 = vmor %vm1838, %vm1839
    %v1841 = vsel %vm1840, %v1833, %v1837
    %v1842 = vand.u32 2147483647, %v1832
    %vm1843 = vcmp.eq.f32.partialorder %v1842, 8.507059e+37
    %v1844 = vand.u32 %v1832, 2147483648
    %v1845 = vor.u32 1.1754944e-38, %v1844
    %v1846 = vsel %vm1843, %v1845, %v1841
    %v1847 = vmul.f32 %v1829, %v1846
    %1848 = vrot.lane.b32.xlu0 %v1712, 56
    %v1849 = vpop.permute.xlu0 %1848
    %v1852 = vsel %vm814, %v1847, 0
    %1854 = vmatpush.msra.mxu0 0.0
    %1855 = vmatpush.msra.mxu0 0.0
    %1856 = vmatpush.msra.mxu0 0.0
    %1857 = vmatpush.msra.mxu0 0.0
    %1858 = vmatpush.msra.mxu0 0.0
    %1859 = vmatpush.msra.mxu0 0.0
    %1860 = vmatpush.msra.mxu0 0.0
    %1861 = vmatpush.msra.mxu0 0.0
    %1862 = vmatpush.msra.mxu0 0.0
    %1863 = vmatpush.msra.mxu0 0.0
    %1864 = vmatpush.msra.mxu0 0.0
    %1865 = vmatpush.msra.mxu0 0.0
    %1866 = vmatpush.msra.mxu0 0.0
    %1867 = vmatpush.msra.mxu0 0.0
    %1868 = vmatpush.msra.mxu0 0.0
    %1869 = vmatpush.msra.mxu0 %v1849
    %1870 = vmatmul.f32.gmra.mxu0 %v1852
    %v1871 = vpop.f32.mrf.mxu0
    %v1872 = vadd.f32 0.0, %v1871
    %1873 = vdwg.mxu0
    %1874 = vrot.lane.b32.xlu0 %v1712, 112
    %v1875 = vpop.permute.xlu0 %1874
    %1876 = vrot.lane.b32.xlu0 %v1712, 80
    %v1877 = vpop.permute.xlu0 %1876
    %v1878 = vsel %vm814, %v1875, 0
    %v1880 = vsel %vm814, %v1877, 0
    %1882 = vmatpush.xpose.msra.mxu0 0.0
    %1883 = vmatpush.xpose.msra.mxu0 0.0
    %1884 = vmatpush.xpose.msra.mxu0 0.0
    %1885 = vmatpush.xpose.msra.mxu0 0.0
    %1886 = vmatpush.xpose.msra.mxu0 0.0
    %1887 = vmatpush.xpose.msra.mxu0 0.0
    %1888 = vmatpush.xpose.msra.mxu0 0.0
    %1889 = vmatpush.xpose.msra.mxu0 0.0
    %1890 = vmatpush.xpose.msra.mxu0 0.0
    %1891 = vmatpush.xpose.msra.mxu0 0.0
    %1892 = vmatpush.xpose.msra.mxu0 0.0
    %1893 = vmatpush.xpose.msra.mxu0 0.0
    %1894 = vmatpush.xpose.msra.mxu0 0.0
    %1895 = vmatpush.xpose.msra.mxu0 0.0
    %1896 = vmatpush.xpose.msra.mxu0 0.0
    %1897 = vmatpush.xpose.msra.mxu0 %v1880
    %1898 = vmatmul.f32.gmra.mxu0 %v1878
    %v1899 = vpop.f32.mrf.mxu0
    %v1900 = vadd.f32 0.0, %v1899
    %1901 = vdwg.mxu0
    %v1902 = vmul.f32 %v1900, 0.35355338
    %v1903 = vsel %vm814, %v1902, -inf
    %1904 = vmax.xlane.f32.xlu0 %v1903
    %v1905 = vpop.xlane.xlu0 %1904
    %v1906 = vsub.f32 %v1902, %v1905
    %v1907 = vmul.f32 %v1906, 1.442695
    %v1908 = vpow.pop %v1907
    %v1909 = vsel %vm814, %v1908, 0.0
    %1910 = vadd.xlane.f32.xlu0 %v1909
    %v1911 = vpop.xlane.xlu0 %1910
    %v1912 = vrcp.pop %v1911
    %v1913 = vmul.f32 %v1911, %v1912
    %v1914 = vsub.f32 1.0, %v1913
    %v1915 = vmul.f32 %v1912, %v1914
    %v1916 = vadd.f32 %v1912, %v1915
    %vm1917 = vweird.f32 %v1911
    %vm1918 = vweird.f32 %v1912
    %vm1919 = vmor %vm1917, %vm1918
    %v1920 = vsel %vm1919, %v1912, %v1916
    %v1921 = vand.u32 2147483647, %v1911
    %vm1922 = vcmp.eq.f32.partialorder %v1921, 8.507059e+37
    %v1923 = vand.u32 %v1911, 2147483648
    %v1924 = vor.u32 1.1754944e-38, %v1923
    %v1925 = vsel %vm1922, %v1924, %v1920
    %v1926 = vmul.f32 %v1908, %v1925
    %1927 = vrot.lane.b32.xlu0 %v1712, 48
    %v1928 = vpop.permute.xlu0 %1927
    %v1931 = vsel %vm814, %v1926, 0
    %1933 = vmatpush.msra.mxu0 0.0
    %1934 = vmatpush.msra.mxu0 0.0
    %1935 = vmatpush.msra.mxu0 0.0
    %1936 = vmatpush.msra.mxu0 0.0
    %1937 = vmatpush.msra.mxu0 0.0
    %1938 = vmatpush.msra.mxu0 0.0
    %1939 = vmatpush.msra.mxu0 0.0
    %1940 = vmatpush.msra.mxu0 0.0
    %1941 = vmatpush.msra.mxu0 0.0
    %1942 = vmatpush.msra.mxu0 0.0
    %1943 = vmatpush.msra.mxu0 0.0
    %1944 = vmatpush.msra.mxu0 0.0
    %1945 = vmatpush.msra.mxu0 0.0
    %1946 = vmatpush.msra.mxu0 0.0
    %1947 = vmatpush.msra.mxu0 0.0
    %1948 = vmatpush.msra.mxu0 %v1928
    %1949 = vmatmul.f32.gmra.mxu0 %v1931
    %v1950 = vpop.f32.mrf.mxu0
    %v1951 = vadd.f32 0.0, %v1950
    %1952 = vdwg.mxu0
    %1953 = vrot.lane.b32.xlu0 %v1712, 104
    %v1954 = vpop.permute.xlu0 %1953
    %1955 = vrot.lane.b32.xlu0 %v1712, 72
    %v1956 = vpop.permute.xlu0 %1955
    %v1957 = vsel %vm814, %v1954, 0
    %v1959 = vsel %vm814, %v1956, 0
    %1961 = vmatpush.xpose.msra.mxu0 0.0
    %1962 = vmatpush.xpose.msra.mxu0 0.0
    %1963 = vmatpush.xpose.msra.mxu0 0.0
    %1964 = vmatpush.xpose.msra.mxu0 0.0
    %1965 = vmatpush.xpose.msra.mxu0 0.0
    %1966 = vmatpush.xpose.msra.mxu0 0.0
    %1967 = vmatpush.xpose.msra.mxu0 0.0
    %1968 = vmatpush.xpose.msra.mxu0 0.0
    %1969 = vmatpush.xpose.msra.mxu0 0.0
    %1970 = vmatpush.xpose.msra.mxu0 0.0
    %1971 = vmatpush.xpose.msra.mxu0 0.0
    %1972 = vmatpush.xpose.msra.mxu0 0.0
    %1973 = vmatpush.xpose.msra.mxu0 0.0
    %1974 = vmatpush.xpose.msra.mxu0 0.0
    %1975 = vmatpush.xpose.msra.mxu0 0.0
    %1976 = vmatpush.xpose.msra.mxu0 %v1959
    %1977 = vmatmul.f32.gmra.mxu0 %v1957
    %v1978 = vpop.f32.mrf.mxu0
    %v1979 = vadd.f32 0.0, %v1978
    %1980 = vdwg.mxu0
    %v1981 = vmul.f32 %v1979, 0.35355338
    %v1982 = vsel %vm814, %v1981, -inf
    %1983 = vmax.xlane.f32.xlu0 %v1982
    %v1984 = vpop.xlane.xlu0 %1983
    %v1985 = vsub.f32 %v1981, %v1984
    %v1986 = vmul.f32 %v1985, 1.442695
    %v1987 = vpow.pop %v1986
    %v1988 = vsel %vm814, %v1987, 0.0
    %1989 = vadd.xlane.f32.xlu0 %v1988
    %v1990 = vpop.xlane.xlu0 %1989
    %v1991 = vrcp.pop %v1990
    %v1992 = vmul.f32 %v1990, %v1991
    %v1993 = vsub.f32 1.0, %v1992
    %v1994 = vmul.f32 %v1991, %v1993
    %v1995 = vadd.f32 %v1991, %v1994
    %vm1996 = vweird.f32 %v1990
    %vm1997 = vweird.f32 %v1991
    %vm1998 = vmor %vm1996, %vm1997
    %v1999 = vsel %vm1998, %v1991, %v1995
    %v2000 = vand.u32 2147483647, %v1990
    %vm2001 = vcmp.eq.f32.partialorder %v2000, 8.507059e+37
    %v2002 = vand.u32 %v1990, 2147483648
    %v2003 = vor.u32 1.1754944e-38, %v2002
    %v2004 = vsel %vm2001, %v2003, %v1999
    %v2005 = vmul.f32 %v1987, %v2004
    %2006 = vrot.lane.b32.xlu0 %v1712, 40
    %v2007 = vpop.permute.xlu0 %2006
    %v2010 = vsel %vm814, %v2005, 0
    %2012 = vmatpush.msra.mxu0 0.0
    %2013 = vmatpush.msra.mxu0 0.0
    %2014 = vmatpush.msra.mxu0 0.0
    %2015 = vmatpush.msra.mxu0 0.0
    %2016 = vmatpush.msra.mxu0 0.0
    %2017 = vmatpush.msra.mxu0 0.0
    %2018 = vmatpush.msra.mxu0 0.0
    %2019 = vmatpush.msra.mxu0 0.0
    %2020 = vmatpush.msra.mxu0 0.0
    %2021 = vmatpush.msra.mxu0 0.0
    %2022 = vmatpush.msra.mxu0 0.0
    %2023 = vmatpush.msra.mxu0 0.0
    %2024 = vmatpush.msra.mxu0 0.0
    %2025 = vmatpush.msra.mxu0 0.0
    %2026 = vmatpush.msra.mxu0 0.0
    %2027 = vmatpush.msra.mxu0 %v2007
    %2028 = vmatmul.f32.gmra.mxu0 %v2010
    %v2029 = vpop.f32.mrf.mxu0
    %v2030 = vadd.f32 0.0, %v2029
    %2031 = vdwg.mxu0
    %2033 = vrot.lane.b32.xlu0 %v1872, 8
    %v2034 = vpop.permute.xlu0 %2033
    %2037 = vrot.lane.b32.xlu0 %v1951, 16
    %v2038 = vpop.permute.xlu0 %2037
    %2041 = vrot.lane.b32.xlu0 %v2030, 24
    %v2042 = vpop.permute.xlu0 %2041
    %v2044 = vsel %vm814, %v1793, %v2034
    %v2045 = vsel %vm1140, %v2044, %v2038
    %v2046 = vsel %vm1142, %v2045, %v2042
    %2048 = vrot.lane.b32.xlu0 %v1715, 96
    %v2049 = vpop.permute.xlu0 %2048
    %v2050 = vsel %vm814, %v1715, 0
    %v2052 = vsel %vm814, %v2049, 0
    %2054 = vmatpush.xpose.msra.mxu0 0.0
    %2055 = vmatpush.xpose.msra.mxu0 0.0
    %2056 = vmatpush.xpose.msra.mxu0 0.0
    %2057 = vmatpush.xpose.msra.mxu0 0.0
    %2058 = vmatpush.xpose.msra.mxu0 0.0
    %2059 = vmatpush.xpose.msra.mxu0 0.0
    %2060 = vmatpush.xpose.msra.mxu0 0.0
    %2061 = vmatpush.xpose.msra.mxu0 0.0
    %2062 = vmatpush.xpose.msra.mxu0 0.0
    %2063 = vmatpush.xpose.msra.mxu0 0.0
    %2064 = vmatpush.xpose.msra.mxu0 0.0
    %2065 = vmatpush.xpose.msra.mxu0 0.0
    %2066 = vmatpush.xpose.msra.mxu0 0.0
    %2067 = vmatpush.xpose.msra.mxu0 0.0
    %2068 = vmatpush.xpose.msra.mxu0 0.0
    %2069 = vmatpush.xpose.msra.mxu0 %v2052
    %2070 = vmatmul.f32.gmra.mxu0 %v2050
    %v2071 = vpop.f32.mrf.mxu0
    %v2072 = vadd.f32 0.0, %v2071
    %2073 = vdwg.mxu0
    %v2074 = vmul.f32 %v2072, 0.35355338
    %v2075 = vsel %vm814, %v2074, -inf
    %2076 = vmax.xlane.f32.xlu0 %v2075
    %v2077 = vpop.xlane.xlu0 %2076
    %v2078 = vsub.f32 %v2074, %v2077
    %v2079 = vmul.f32 %v2078, 1.442695
    %v2080 = vpow.pop %v2079
    %v2081 = vsel %vm814, %v2080, 0.0
    %2082 = vadd.xlane.f32.xlu0 %v2081
    %v2083 = vpop.xlane.xlu0 %2082
    %v2084 = vrcp.pop %v2083
    %v2085 = vmul.f32 %v2083, %v2084
    %v2086 = vsub.f32 1.0, %v2085
    %v2087 = vmul.f32 %v2084, %v2086
    %v2088 = vadd.f32 %v2084, %v2087
    %vm2089 = vweird.f32 %v2083
    %vm2090 = vweird.f32 %v2084
    %vm2091 = vmor %vm2089, %vm2090
    %v2092 = vsel %vm2091, %v2084, %v2088
    %v2093 = vand.u32 2147483647, %v2083
    %vm2094 = vcmp.eq.f32.partialorder %v2093, 8.507059e+37
    %v2095 = vand.u32 %v2083, 2147483648
    %v2096 = vor.u32 1.1754944e-38, %v2095
    %v2097 = vsel %vm2094, %v2096, %v2092
    %v2098 = vmul.f32 %v2080, %v2097
    %2099 = vrot.lane.b32.xlu0 %v1715, 64
    %v2100 = vpop.permute.xlu0 %2099
    %v2103 = vsel %vm814, %v2098, 0
    %2105 = vmatpush.msra.mxu0 0.0
    %2106 = vmatpush.msra.mxu0 0.0
    %2107 = vmatpush.msra.mxu0 0.0
    %2108 = vmatpush.msra.mxu0 0.0
    %2109 = vmatpush.msra.mxu0 0.0
    %2110 = vmatpush.msra.mxu0 0.0
    %2111 = vmatpush.msra.mxu0 0.0
    %2112 = vmatpush.msra.mxu0 0.0
    %2113 = vmatpush.msra.mxu0 0.0
    %2114 = vmatpush.msra.mxu0 0.0
    %2115 = vmatpush.msra.mxu0 0.0
    %2116 = vmatpush.msra.mxu0 0.0
    %2117 = vmatpush.msra.mxu0 0.0
    %2118 = vmatpush.msra.mxu0 0.0
    %2119 = vmatpush.msra.mxu0 0.0
    %2120 = vmatpush.msra.mxu0 %v2100
    %2121 = vmatmul.f32.gmra.mxu0 %v2103
    %v2122 = vpop.f32.mrf.mxu0
    %v2123 = vadd.f32 0.0, %v2122
    %2124 = vdwg.mxu0
    %2125 = vrot.lane.b32.xlu0 %v1715, 120
    %v2126 = vpop.permute.xlu0 %2125
    %2127 = vrot.lane.b32.xlu0 %v1715, 88
    %v2128 = vpop.permute.xlu0 %2127
    %v2129 = vsel %vm814, %v2126, 0
    %v2131 = vsel %vm814, %v2128, 0
    %2133 = vmatpush.xpose.msra.mxu0 0.0
    %2134 = vmatpush.xpose.msra.mxu0 0.0
    %2135 = vmatpush.xpose.msra.mxu0 0.0
    %2136 = vmatpush.xpose.msra.mxu0 0.0
    %2137 = vmatpush.xpose.msra.mxu0 0.0
    %2138 = vmatpush.xpose.msra.mxu0 0.0
    %2139 = vmatpush.xpose.msra.mxu0 0.0
    %2140 = vmatpush.xpose.msra.mxu0 0.0
    %2141 = vmatpush.xpose.msra.mxu0 0.0
    %2142 = vmatpush.xpose.msra.mxu0 0.0
    %2143 = vmatpush.xpose.msra.mxu0 0.0
    %2144 = vmatpush.xpose.msra.mxu0 0.0
    %2145 = vmatpush.xpose.msra.mxu0 0.0
    %2146 = vmatpush.xpose.msra.mxu0 0.0
    %2147 = vmatpush.xpose.msra.mxu0 0.0
    %2148 = vmatpush.xpose.msra.mxu0 %v2131
    %2149 = vmatmul.f32.gmra.mxu0 %v2129
    %v2150 = vpop.f32.mrf.mxu0
    %v2151 = vadd.f32 0.0, %v2150
    %2152 = vdwg.mxu0
    %v2153 = vmul.f32 %v2151, 0.35355338
    %v2154 = vsel %vm814, %v2153, -inf
    %2155 = vmax.xlane.f32.xlu0 %v2154
    %v2156 = vpop.xlane.xlu0 %2155
    %v2157 = vsub.f32 %v2153, %v2156
    %v2158 = vmul.f32 %v2157, 1.442695
    %v2159 = vpow.pop %v2158
    %v2160 = vsel %vm814, %v2159, 0.0
    %2161 = vadd.xlane.f32.xlu0 %v2160
    %v2162 = vpop.xlane.xlu0 %2161
    %v2163 = vrcp.pop %v2162
    %v2164 = vmul.f32 %v2162, %v2163
    %v2165 = vsub.f32 1.0, %v2164
    %v2166 = vmul.f32 %v2163, %v2165
    %v2167 = vadd.f32 %v2163, %v2166
    %vm2168 = vweird.f32 %v2162
    %vm2169 = vweird.f32 %v2163
    %vm2170 = vmor %vm2168, %vm2169
    %v2171 = vsel %vm2170, %v2163, %v2167
    %v2172 = vand.u32 2147483647, %v2162
    %vm2173 = vcmp.eq.f32.partialorder %v2172, 8.507059e+37
    %v2174 = vand.u32 %v2162, 2147483648
    %v2175 = vor.u32 1.1754944e-38, %v2174
    %v2176 = vsel %vm2173, %v2175, %v2171
    %v2177 = vmul.f32 %v2159, %v2176
    %2178 = vrot.lane.b32.xlu0 %v1715, 56
    %v2179 = vpop.permute.xlu0 %2178
    %v2182 = vsel %vm814, %v2177, 0
    %2184 = vmatpush.msra.mxu0 0.0
    %2185 = vmatpush.msra.mxu0 0.0
    %2186 = vmatpush.msra.mxu0 0.0
    %2187 = vmatpush.msra.mxu0 0.0
    %2188 = vmatpush.msra.mxu0 0.0
    %2189 = vmatpush.msra.mxu0 0.0
    %2190 = vmatpush.msra.mxu0 0.0
    %2191 = vmatpush.msra.mxu0 0.0
    %2192 = vmatpush.msra.mxu0 0.0
    %2193 = vmatpush.msra.mxu0 0.0
    %2194 = vmatpush.msra.mxu0 0.0
    %2195 = vmatpush.msra.mxu0 0.0
    %2196 = vmatpush.msra.mxu0 0.0
    %2197 = vmatpush.msra.mxu0 0.0
    %2198 = vmatpush.msra.mxu0 0.0
    %2199 = vmatpush.msra.mxu0 %v2179
    %2200 = vmatmul.f32.gmra.mxu0 %v2182
    %v2201 = vpop.f32.mrf.mxu0
    %v2202 = vadd.f32 0.0, %v2201
    %2203 = vdwg.mxu0
    %2204 = vrot.lane.b32.xlu0 %v1715, 112
    %v2205 = vpop.permute.xlu0 %2204
    %2206 = vrot.lane.b32.xlu0 %v1715, 80
    %v2207 = vpop.permute.xlu0 %2206
    %v2208 = vsel %vm814, %v2205, 0
    %v2210 = vsel %vm814, %v2207, 0
    %2212 = vmatpush.xpose.msra.mxu0 0.0
    %2213 = vmatpush.xpose.msra.mxu0 0.0
    %2214 = vmatpush.xpose.msra.mxu0 0.0
    %2215 = vmatpush.xpose.msra.mxu0 0.0
    %2216 = vmatpush.xpose.msra.mxu0 0.0
    %2217 = vmatpush.xpose.msra.mxu0 0.0
    %2218 = vmatpush.xpose.msra.mxu0 0.0
    %2219 = vmatpush.xpose.msra.mxu0 0.0
    %2220 = vmatpush.xpose.msra.mxu0 0.0
    %2221 = vmatpush.xpose.msra.mxu0 0.0
    %2222 = vmatpush.xpose.msra.mxu0 0.0
    %2223 = vmatpush.xpose.msra.mxu0 0.0
    %2224 = vmatpush.xpose.msra.mxu0 0.0
    %2225 = vmatpush.xpose.msra.mxu0 0.0
    %2226 = vmatpush.xpose.msra.mxu0 0.0
    %2227 = vmatpush.xpose.msra.mxu0 %v2210
    %2228 = vmatmul.f32.gmra.mxu0 %v2208
    %v2229 = vpop.f32.mrf.mxu0
    %v2230 = vadd.f32 0.0, %v2229
    %2231 = vdwg.mxu0
    %v2232 = vmul.f32 %v2230, 0.35355338
    %v2233 = vsel %vm814, %v2232, -inf
    %2234 = vmax.xlane.f32.xlu0 %v2233
    %v2235 = vpop.xlane.xlu0 %2234
    %v2236 = vsub.f32 %v2232, %v2235
    %v2237 = vmul.f32 %v2236, 1.442695
    %v2238 = vpow.pop %v2237
    %v2239 = vsel %vm814, %v2238, 0.0
    %2240 = vadd.xlane.f32.xlu0 %v2239
    %v2241 = vpop.xlane.xlu0 %2240
    %v2242 = vrcp.pop %v2241
    %v2243 = vmul.f32 %v2241, %v2242
    %v2244 = vsub.f32 1.0, %v2243
    %v2245 = vmul.f32 %v2242, %v2244
    %v2246 = vadd.f32 %v2242, %v2245
    %vm2247 = vweird.f32 %v2241
    %vm2248 = vweird.f32 %v2242
    %vm2249 = vmor %vm2247, %vm2248
    %v2250 = vsel %vm2249, %v2242, %v2246
    %v2251 = vand.u32 2147483647, %v2241
    %vm2252 = vcmp.eq.f32.partialorder %v2251, 8.507059e+37
    %v2253 = vand.u32 %v2241, 2147483648
    %v2254 = vor.u32 1.1754944e-38, %v2253
    %v2255 = vsel %vm2252, %v2254, %v2250
    %v2256 = vmul.f32 %v2238, %v2255
    %2257 = vrot.lane.b32.xlu0 %v1715, 48
    %v2258 = vpop.permute.xlu0 %2257
    %v2261 = vsel %vm814, %v2256, 0
    %2263 = vmatpush.msra.mxu0 0.0
    %2264 = vmatpush.msra.mxu0 0.0
    %2265 = vmatpush.msra.mxu0 0.0
    %2266 = vmatpush.msra.mxu0 0.0
    %2267 = vmatpush.msra.mxu0 0.0
    %2268 = vmatpush.msra.mxu0 0.0
    %2269 = vmatpush.msra.mxu0 0.0
    %2270 = vmatpush.msra.mxu0 0.0
    %2271 = vmatpush.msra.mxu0 0.0
    %2272 = vmatpush.msra.mxu0 0.0
    %2273 = vmatpush.msra.mxu0 0.0
    %2274 = vmatpush.msra.mxu0 0.0
    %2275 = vmatpush.msra.mxu0 0.0
    %2276 = vmatpush.msra.mxu0 0.0
    %2277 = vmatpush.msra.mxu0 0.0
    %2278 = vmatpush.msra.mxu0 %v2258
    %2279 = vmatmul.f32.gmra.mxu0 %v2261
    %v2280 = vpop.f32.mrf.mxu0
    %v2281 = vadd.f32 0.0, %v2280
    %2282 = vdwg.mxu0
    %2283 = vrot.lane.b32.xlu0 %v1715, 104
    %v2284 = vpop.permute.xlu0 %2283
    %2285 = vrot.lane.b32.xlu0 %v1715, 72
    %v2286 = vpop.permute.xlu0 %2285
    %v2287 = vsel %vm814, %v2284, 0
    %v2289 = vsel %vm814, %v2286, 0
    %2291 = vmatpush.xpose.msra.mxu0 0.0
    %2292 = vmatpush.xpose.msra.mxu0 0.0
    %2293 = vmatpush.xpose.msra.mxu0 0.0
    %2294 = vmatpush.xpose.msra.mxu0 0.0
    %2295 = vmatpush.xpose.msra.mxu0 0.0
    %2296 = vmatpush.xpose.msra.mxu0 0.0
    %2297 = vmatpush.xpose.msra.mxu0 0.0
    %2298 = vmatpush.xpose.msra.mxu0 0.0
    %2299 = vmatpush.xpose.msra.mxu0 0.0
    %2300 = vmatpush.xpose.msra.mxu0 0.0
    %2301 = vmatpush.xpose.msra.mxu0 0.0
    %2302 = vmatpush.xpose.msra.mxu0 0.0
    %2303 = vmatpush.xpose.msra.mxu0 0.0
    %2304 = vmatpush.xpose.msra.mxu0 0.0
    %2305 = vmatpush.xpose.msra.mxu0 0.0
    %2306 = vmatpush.xpose.msra.mxu0 %v2289
    %2307 = vmatmul.f32.gmra.mxu0 %v2287
    %v2308 = vpop.f32.mrf.mxu0
    %v2309 = vadd.f32 0.0, %v2308
    %2310 = vdwg.mxu0
    %v2311 = vmul.f32 %v2309, 0.35355338
    %v2312 = vsel %vm814, %v2311, -inf
    %2313 = vmax.xlane.f32.xlu0 %v2312
    %v2314 = vpop.xlane.xlu0 %2313
    %v2315 = vsub.f32 %v2311, %v2314
    %v2316 = vmul.f32 %v2315, 1.442695
    %v2317 = vpow.pop %v2316
    %v2318 = vsel %vm814, %v2317, 0.0
    %2319 = vadd.xlane.f32.xlu0 %v2318
    %v2320 = vpop.xlane.xlu0 %2319
    %v2321 = vrcp.pop %v2320
    %v2322 = vmul.f32 %v2320, %v2321
    %v2323 = vsub.f32 1.0, %v2322
    %v2324 = vmul.f32 %v2321, %v2323
    %v2325 = vadd.f32 %v2321, %v2324
    %vm2326 = vweird.f32 %v2320
    %vm2327 = vweird.f32 %v2321
    %vm2328 = vmor %vm2326, %vm2327
    %v2329 = vsel %vm2328, %v2321, %v2325
    %v2330 = vand.u32 2147483647, %v2320
    %vm2331 = vcmp.eq.f32.partialorder %v2330, 8.507059e+37
    %v2332 = vand.u32 %v2320, 2147483648
    %v2333 = vor.u32 1.1754944e-38, %v2332
    %v2334 = vsel %vm2331, %v2333, %v2329
    %v2335 = vmul.f32 %v2317, %v2334
    %2336 = vrot.lane.b32.xlu0 %v1715, 40
    %v2337 = vpop.permute.xlu0 %2336
    %v2340 = vsel %vm814, %v2335, 0
    %2342 = vmatpush.msra.mxu0 0.0
    %2343 = vmatpush.msra.mxu0 0.0
    %2344 = vmatpush.msra.mxu0 0.0
    %2345 = vmatpush.msra.mxu0 0.0
    %2346 = vmatpush.msra.mxu0 0.0
    %2347 = vmatpush.msra.mxu0 0.0
    %2348 = vmatpush.msra.mxu0 0.0
    %2349 = vmatpush.msra.mxu0 0.0
    %2350 = vmatpush.msra.mxu0 0.0
    %2351 = vmatpush.msra.mxu0 0.0
    %2352 = vmatpush.msra.mxu0 0.0
    %2353 = vmatpush.msra.mxu0 0.0
    %2354 = vmatpush.msra.mxu0 0.0
    %2355 = vmatpush.msra.mxu0 0.0
    %2356 = vmatpush.msra.mxu0 0.0
    %2357 = vmatpush.msra.mxu0 %v2337
    %2358 = vmatmul.f32.gmra.mxu0 %v2340
    %v2359 = vpop.f32.mrf.mxu0
    %v2360 = vadd.f32 0.0, %v2359
    %2361 = vdwg.mxu0
    %2363 = vrot.lane.b32.xlu0 %v2202, 8
    %v2364 = vpop.permute.xlu0 %2363
    %2367 = vrot.lane.b32.xlu0 %v2281, 16
    %v2368 = vpop.permute.xlu0 %2367
    %2371 = vrot.lane.b32.xlu0 %v2360, 24
    %v2372 = vpop.permute.xlu0 %2371
    %v2374 = vsel %vm814, %v2123, %v2364
    %v2375 = vsel %vm1140, %v2374, %v2368
    %v2376 = vsel %vm1142, %v2375, %v2372
    %v2378 = vperm.slane %v533, 0
    %v2381 = vsel %vm608, %v2046, 0
    %v2384 = vsel %vm608, %v2376, 0
    %2386 = vmatpush.msra.mxu0 0.0
    %2387 = vmatpush.msra.mxu0 0.0
    %2388 = vmatpush.msra.mxu0 0.0
    %2389 = vmatpush.msra.mxu0 0.0
    %2390 = vmatpush.msra.mxu0 0.0
    %2391 = vmatpush.msra.mxu0 0.0
    %2392 = vmatpush.msra.mxu0 0.0
    %2393 = vmatpush.msra.mxu0 0.0
    %2394 = vmatpush.msra.mxu0 0.0
    %2395 = vmatpush.msra.mxu0 0.0
    %2396 = vmatpush.msra.mxu0 0.0
    %2397 = vmatpush.msra.mxu0 0.0
    %2398 = vmatpush.msra.mxu0 %v532
    %2399 = vmatpush.msra.mxu0 %v531
    %2400 = vmatpush.msra.mxu0 %v530
    %2401 = vmatpush.msra.mxu0 %v529
    %2402 = vmatmul.f32.gmra.mxu0 %v2381
    %v2403 = vpop.f32.mrf.mxu0
    %v2404 = vadd.f32 %v2378, %v2403
    %2405 = vmatmul.f32.gmra.mxu0 %v2384
    %v2406 = vpop.f32.mrf.mxu0
    %v2407 = vadd.f32 %v2378, %v2406
    %2408 = vdwg.mxu0
    %v2409 = vadd.f32 %v1683, %v2404
    %v2410 = vadd.f32 %v1684, %v2407
    %v2411 = vsel %vm608, %v2409, 0.0
    %2412 = vadd.xlane.f32.xlu0 %v2411
    %v2413 = vpop.xlane.xlu0 %2412
    %v2414 = vsel %vm608, %v2410, 0.0
    %2415 = vadd.xlane.f32.xlu0 %v2414
    %v2416 = vpop.xlane.xlu0 %2415
    %v2417 = vmul.f32 %v2413, %v650
    %v2418 = vmul.f32 %v2416, %v650
    %v2419 = vsub.f32 %v2409, %v2417
    %v2420 = vsub.f32 %v2410, %v2418
    %v2421 = vmul.f32 %v2419, %v2419
    %v2422 = vmul.f32 %v2420, %v2420
    %v2423 = vsel %vm608, %v2421, 0.0
    %2424 = vadd.xlane.f32.xlu0 %v2423
    %v2425 = vpop.xlane.xlu0 %2424
    %v2426 = vsel %vm608, %v2422, 0.0
    %2427 = vadd.xlane.f32.xlu0 %v2426
    %v2428 = vpop.xlane.xlu0 %2427
    %v2429 = vmul.f32 %v2425, %v650
    %v2430 = vmul.f32 %v2428, %v650
    %v2431 = vadd.f32 %v2429, 1e-05
    %v2432 = vadd.f32 %v2430, 1e-05
    %v2433 = vrsqrt.pop %v2431
    %v2434 = vmul.f32 %v2433, %v2431
    %v2435 = vmul.f32 %v2434, %v2433
    %v2436 = vmul.f32 0.5, %v2435
    %v2437 = vsub.f32 1.5, %v2436
    %v2438 = vmul.f32 %v2433, %v2437
    %vm2439 = vweird.f32 %v2431
    %vm2440 = vweird.f32 %v2433
    %vm2441 = vmor %vm2439, %vm2440
    %v2442 = vsel %vm2441, %v2433, %v2438
    %v2443 = vrsqrt.pop %v2432
    %v2444 = vmul.f32 %v2443, %v2432
    %v2445 = vmul.f32 %v2444, %v2443
    %v2446 = vmul.f32 0.5, %v2445
    %v2447 = vsub.f32 1.5, %v2446
    %v2448 = vmul.f32 %v2443, %v2447
    %vm2449 = vweird.f32 %v2432
    %vm2450 = vweird.f32 %v2443
    %vm2451 = vmor %vm2449, %vm2450
    %v2452 = vsel %vm2451, %v2443, %v2448
    %v2453 = vmul.f32 %v2419, %v2442
    %v2454 = vmul.f32 %v2420, %v2452
    %v2456 = vperm.slane %v534, 0
    %v2458 = vmul.f32 %v2453, %v2456
    %v2459 = vmul.f32 %v2454, %v2456
    %v2461 = vperm.slane %v535, 0
    %v2463 = vadd.f32 %v2458, %v2461
    %v2464 = vadd.f32 %v2459, %v2461
    %v2466 = vperm.slane %v540, 0
    %v2469 = vsel %vm608, %v2463, 0
    %v2472 = vsel %vm608, %v2464, 0
    %2474 = vmatpush.msra.mxu0 0.0
    %2475 = vmatpush.msra.mxu0 0.0
    %2476 = vmatpush.msra.mxu0 0.0
    %2477 = vmatpush.msra.mxu0 0.0
    %2478 = vmatpush.msra.mxu0 0.0
    %2479 = vmatpush.msra.mxu0 0.0
    %2480 = vmatpush.msra.mxu0 0.0
    %2481 = vmatpush.msra.mxu0 0.0
    %2482 = vmatpush.msra.mxu0 0.0
    %2483 = vmatpush.msra.mxu0 0.0
    %2484 = vmatpush.msra.mxu0 0.0
    %2485 = vmatpush.msra.mxu0 0.0
    %2486 = vmatpush.msra.mxu0 %v539
    %2487 = vmatpush.msra.mxu0 %v538
    %2488 = vmatpush.msra.mxu0 %v537
    %2489 = vmatpush.msra.mxu0 %v536
    %2490 = vmatmul.f32.gmra.mxu0 %v2469
    %v2491 = vpop.f32.mrf.mxu0
    %v2492 = vadd.f32 %v2466, %v2491
    %2493 = vmatmul.f32.gmra.mxu0 %v2472
    %v2494 = vpop.f32.mrf.mxu0
    %v2495 = vadd.f32 %v2466, %v2494
    %2496 = vdwg.mxu0
    %v2497 = vmax.f32 %v2492, 0.0
    %v2498 = vmax.f32 %v2495, 0.0
    %v2500 = vperm.slane %v549, 0
    %v2503 = vsel %vm1599, %v2497, 0
    %v2506 = vsel %vm1599, %v2498, 0
    %2508 = vmatpush.msra.mxu0 0.0
    %2509 = vmatpush.msra.mxu0 0.0
    %2510 = vmatpush.msra.mxu0 0.0
    %2511 = vmatpush.msra.mxu0 0.0
    %2512 = vmatpush.msra.mxu0 0.0
    %2513 = vmatpush.msra.mxu0 0.0
    %2514 = vmatpush.msra.mxu0 0.0
    %2515 = vmatpush.msra.mxu0 0.0
    %2516 = vmatpush.msra.mxu0 %v548
    %2517 = vmatpush.msra.mxu0 %v547
    %2518 = vmatpush.msra.mxu0 %v546
    %2519 = vmatpush.msra.mxu0 %v545
    %2520 = vmatpush.msra.mxu0 %v544
    %2521 = vmatpush.msra.mxu0 %v543
    %2522 = vmatpush.msra.mxu0 %v542
    %2523 = vmatpush.msra.mxu0 %v541
    %2524 = vmatmul.f32.gmra.mxu0 %v2503
    %v2525 = vpop.f32.mrf.mxu0
    %v2526 = vadd.f32 %v2500, %v2525
    %2527 = vmatmul.f32.gmra.mxu0 %v2506
    %v2528 = vpop.f32.mrf.mxu0
    %v2529 = vadd.f32 %v2500, %v2528
    %2530 = vdwg.mxu0
    %v2531 = vadd.f32 %v2463, %v2526
    %v2532 = vadd.f32 %v2464, %v2529
    %v2533 = vsel %vm608, %v2531, 0.0
    %2534 = vadd.xlane.f32.xlu0 %v2533
    %v2535 = vpop.xlane.xlu0 %2534
    %v2536 = vsel %vm608, %v2532, 0.0
    %2537 = vadd.xlane.f32.xlu0 %v2536
    %v2538 = vpop.xlane.xlu0 %2537
    %v2539 = vmul.f32 %v2535, %v650
    %v2540 = vmul.f32 %v2538, %v650
    %v2541 = vsub.f32 %v2531, %v2539
    %v2542 = vsub.f32 %v2532, %v2540
    %v2543 = vmul.f32 %v2541, %v2541
    %v2544 = vmul.f32 %v2542, %v2542
    %v2545 = vsel %vm608, %v2543, 0.0
    %2546 = vadd.xlane.f32.xlu0 %v2545
    %v2547 = vpop.xlane.xlu0 %2546
    %v2548 = vsel %vm608, %v2544, 0.0
    %2549 = vadd.xlane.f32.xlu0 %v2548
    %v2550 = vpop.xlane.xlu0 %2549
    %v2551 = vmul.f32 %v2547, %v650
    %v2552 = vmul.f32 %v2550, %v650
    %v2553 = vadd.f32 %v2551, 1e-05
    %v2554 = vadd.f32 %v2552, 1e-05
    %v2555 = vrsqrt.pop %v2553
    %v2556 = vmul.f32 %v2555, %v2553
    %v2557 = vmul.f32 %v2556, %v2555
    %v2558 = vmul.f32 0.5, %v2557
    %v2559 = vsub.f32 1.5, %v2558
    %v2560 = vmul.f32 %v2555, %v2559
    %vm2561 = vweird.f32 %v2553
    %vm2562 = vweird.f32 %v2555
    %vm2563 = vmor %vm2561, %vm2562
    %v2564 = vsel %vm2563, %v2555, %v2560
    %v2565 = vrsqrt.pop %v2554
    %v2566 = vmul.f32 %v2565, %v2554
    %v2567 = vmul.f32 %v2566, %v2565
    %v2568 = vmul.f32 0.5, %v2567
    %v2569 = vsub.f32 1.5, %v2568
    %v2570 = vmul.f32 %v2565, %v2569
    %vm2571 = vweird.f32 %v2554
    %vm2572 = vweird.f32 %v2565
    %vm2573 = vmor %vm2571, %vm2572
    %v2574 = vsel %vm2573, %v2565, %v2570
    %v2575 = vmul.f32 %v2541, %v2564
    %v2576 = vmul.f32 %v2542, %v2574
    %v2578 = vperm.slane %v550, 0
    %v2580 = vmul.f32 %v2575, %v2578
    %v2581 = vmul.f32 %v2576, %v2578
    %v2583 = vperm.slane %v551, 0
    %v2585 = vadd.f32 %v2580, %v2583
    %v2586 = vadd.f32 %v2581, %v2583
    %v2587 = vsel %vm608, %v2585, 0.0
    %v2588 = vrot.slane %v2587, 4
    %v2589 = vadd.f32 %v2587, %v2588
    %v2590 = vrot.slane %v2589, 2
    %v2591 = vadd.f32 %v2589, %v2590
    %v2592 = vrot.slane %v2591, 1
    %v2593 = vadd.f32 %v2591, %v2592
    %v2594 = vrcp.pop 8.0
    %v2595 = vmul.f32 8.0, %v2594
    %v2596 = vsub.f32 1.0, %v2595
    %v2597 = vmul.f32 %v2594, %v2596
    %v2598 = vadd.f32 %v2594, %v2597
    %vm2599 = vweird.f32 %v2594
    %v2600 = vsel %vm2599, %v2594, %v2598
    %v2601 = vmul.f32 %v2593, %v2600
    %v2602 = vsel %vm608, %v2586, 0.0
    %v2603 = vrot.slane %v2602, 4
    %v2604 = vadd.f32 %v2602, %v2603
    %v2605 = vrot.slane %v2604, 2
    %v2606 = vadd.f32 %v2604, %v2605
    %v2607 = vrot.slane %v2606, 1
    %v2608 = vadd.f32 %v2606, %v2607
    %v2609 = vmul.f32 %v2608, %v2600
    %vm2610 = vcmask 1040384
    %v2611 = vsel %vm2610, %v2601, %v2609
    %v2613 = vperm.slane %v556, 0
    %v2616 = vsel %vm608, %v2611, 0
    %2618 = vmatpush.msra.mxu0 0.0
    %2619 = vmatpush.msra.mxu0 0.0
    %2620 = vmatpush.msra.mxu0 0.0
    %2621 = vmatpush.msra.mxu0 0.0
    %2622 = vmatpush.msra.mxu0 0.0
    %2623 = vmatpush.msra.mxu0 0.0
    %2624 = vmatpush.msra.mxu0 0.0
    %2625 = vmatpush.msra.mxu0 0.0
    %2626 = vmatpush.msra.mxu0 0.0
    %2627 = vmatpush.msra.mxu0 0.0
    %2628 = vmatpush.msra.mxu0 0.0
    %2629 = vmatpush.msra.mxu0 0.0
    %2630 = vmatpush.msra.mxu0 %v555
    %2631 = vmatpush.msra.mxu0 %v554
    %2632 = vmatpush.msra.mxu0 %v553
    %2633 = vmatpush.msra.mxu0 %v552
    %2634 = vmatmul.f32.gmra.mxu0 %v2616
    %v2635 = vpop.f32.mrf.mxu0
    %v2636 = vadd.f32 %v2613, %v2635
    %2637 = vdwg.mxu0
    %v2638 = vmul.f32 %v2636, 0.70710677
    %v2639 = vand.u32 2147483647, %v2638
    %v2640 = vmul.f32 %v2639, 0.3275911
    %v2641 = vadd.f32 %v2640, 1.0
    %v2642 = vrcp.pop %v2641
    %v2643 = vmul.f32 %v2641, %v2642
    %v2644 = vsub.f32 1.0, %v2643
    %v2645 = vmul.f32 %v2642, %v2644
    %v2646 = vadd.f32 %v2642, %v2645
    %vm2647 = vweird.f32 %v2641
    %vm2648 = vweird.f32 %v2642
    %vm2649 = vmor %vm2647, %vm2648
    %v2650 = vsel %vm2649, %v2642, %v2646
    %v2651 = vand.u32 2147483647, %v2641
    %vm2652 = vcmp.eq.f32.partialorder %v2651, 8.507059e+37
    %v2653 = vand.u32 %v2641, 2147483648
    %v2654 = vor.u32 1.1754944e-38, %v2653
    %v2655 = vsel %vm2652, %v2654, %v2650
    %v2656 = vmul.f32 1.0, %v2655
    %v2657 = vmul.f32 %v2656, 1.0614054
    %v2658 = vadd.f32 %v2657, -1.4531521
    %v2659 = vmul.f32 %v2656, %v2658
    %v2660 = vadd.f32 %v2659, 1.4214138
    %v2661 = vmul.f32 %v2656, %v2660
    %v2662 = vadd.f32 %v2661, -0.28449672
    %v2663 = vmul.f32 %v2656, %v2662
    %v2664 = vadd.f32 %v2663, 0.2548296
    %v2665 = vmul.f32 %v2656, %v2664
    %v2666 = vsub.f32 0.0, %v2639
    %v2667 = vmul.f32 %v2666, %v2639
    %v2668 = vmul.f32 %v2667, 1.442695
    %v2669 = vpow.pop %v2668
    %v2670 = vmul.f32 %v2665, %v2669
    %v2671 = vsub.f32 1.0, %v2670
    %vm2672 = vcmp.lt.f32.partialorder %v2638, 0.0
    %v2673 = vsub.f32 0.0, %v2671
    %v2674 = vsel %vm2672, %v2673, %v2671
    %v2675 = vmul.f32 %v2636, 0.5
    %v2676 = vadd.f32 %v2674, 1.0
    %v2677 = vmul.f32 %v2675, %v2676
    %v2679 = vperm.slane %v565, 0
    %v2682 = vsel %vm1599, %v2677, 0
    %2684 = vmatpush.msra.mxu0 0.0
    %2685 = vmatpush.msra.mxu0 0.0
    %2686 = vmatpush.msra.mxu0 0.0
    %2687 = vmatpush.msra.mxu0 0.0
    %2688 = vmatpush.msra.mxu0 0.0
    %2689 = vmatpush.msra.mxu0 0.0
    %2690 = vmatpush.msra.mxu0 0.0
    %2691 = vmatpush.msra.mxu0 0.0
    %2692 = vmatpush.msra.mxu0 %v564
    %2693 = vmatpush.msra.mxu0 %v563
    %2694 = vmatpush.msra.mxu0 %v562
    %2695 = vmatpush.msra.mxu0 %v561
    %2696 = vmatpush.msra.mxu0 %v560
    %2697 = vmatpush.msra.mxu0 %v559
    %2698 = vmatpush.msra.mxu0 %v558
    %2699 = vmatpush.msra.mxu0 %v557
    %2700 = vmatmul.f32.gmra.mxu0 %v2682
    %v2701 = vpop.f32.mrf.mxu0
    %v2702 = vadd.f32 %v2679, %v2701
    %2703 = vdwg.mxu0
    %2704 = vst [vmem:[#allocation40] sm:$0x3] %v2702
    // Predicated region
    $region242: #{transformer_forward.1} parent=1 // pred_check
      _
    $region243: #{transformer_forward.1} parent=1 // pred_check_branch
      %2706 = sbr.rel (0) target = $region245
    $region244: #{transformer_forward.1} parent=1 // pred_region
      %2708 = vsyncadd [#allocation4], 0
      %s2710 = sshll.u32 [#allocation40], 4
      %s2711 = int_to_ptr.vmem [resolvable:$true] %s2710
      %s2712 = sshll.u32 %s73, 4
      %s2713 = int_to_ptr.hbm [resolvable:$true] %s2712
      %2715 = dma.vmem_to_hbm [thread:$0]  %s2711, 32, %s2713, [#allocation4]
    $region245: #{transformer_forward.1} parent=1 // pred_fallthru
      _
    // Predicated region
    $region246: #{transformer_forward.1} parent=1 // pred_check
      _
    $region247: #{transformer_forward.1} parent=1 // pred_check_branch
      %2717 = sbr.rel (0) target = $region249
    $region248: #{transformer_forward.1} parent=1 // pred_region
      %2719 = dma.done [#allocation4], 32
    $region249: #{transformer_forward.1} parent=1 // pred_fallthru
      _
    %2720 = vsyncpa [#allocation3], 1
    %2721 = vsyncpa [#allocation6], 1
    %2722 = vsyncpa [#allocation9], 1
    %2723 = vsyncpa [#allocation12], 1
    %2724 = vsyncpa [#allocation15], 1
    %2725 = vsyncpa [#allocation18], 1
    %2726 = vsyncpa [#allocation21], 1
    %2727 = vsyncpa [#allocation24], 1
    %2728 = vsyncpa [#allocation27], 1
    %2729 = vsyncpa [#allocation30], 1
    %2730 = vsyncpa [#allocation33], 1
    %2731 = vsyncpa [#allocation36], 1
    %2732 = vsyncpa [#allocation39], 1
    %2733 = vsyncpa [#allocation4], 1

</llo_original>
